<compile_context>
chip_gen: v6e
topology: v6e:2x2x1
jax: 0.10.0
libtpu: 0.0.40
codegen_flags: <defaults>
</compile_context>

<pallas_src>
import functools

import numpy as np
import jax
import jax.numpy as jnp
from jax.experimental import pallas as pl
from jax.experimental.pallas import tpu as pltpu

LN_EPS = 1e-5  # PyTorch nn.LayerNorm default


# ----------------------------------------------------------------------------
# In-kernel helpers (all offsets / sizes are static Python ints)
# ----------------------------------------------------------------------------
def _shift_rows(y, off, D, d_idx):
    """result[i] = y[i + off] if the source row stays inside the same
    length-D sequence, else 0.   y: (M, C) f32, off: static int."""
    if off == 0:
        return y
    M = y.shape[0]
    rolled = pltpu.roll(y, shift=(-off) % M, axis=0)         # XLU sublane roll
    valid = jnp.logical_and(d_idx + off >= 0, d_idx + off < D)
    return jnp.where(valid, rolled, jnp.zeros_like(rolled))


def _dilated_conv(hb, taps, w_lookup, D, d_idx):
    """Channels-last dilated conv as a sum of per-tap matmuls.

    shift(h, off) @ W == shift(h @ W, off)  (row-wise matmul + zero-fill
    shift commute), so every tap matmul runs on the SAME unshifted bf16
    activations and the shift/mask is applied to the f32 result.
    """
    acc = None
    for k, off in taps:
        y = jnp.dot(hb, w_lookup(k), preferred_element_type=jnp.float32)
        y = _shift_rows(y, off, D, d_idx)
        acc = y if acc is None else acc + y
    return acc


# ----------------------------------------------------------------------------
# Fused kernel: Bblk batch elements per grid step, all layers inside.
# ----------------------------------------------------------------------------
def _fused_kernel(tok_ref, tc_ref, lin_w_ref, lin_b_ref, g_ref, beta_ref,
                  cb_ref, cw_ref, f_w1_ref, f_b1_ref, f_w2_ref, f_b2_ref,
                  o_ref, *, init_taps, layer_taps, Bblk, D, S, H, L):
    M = Bblk * D          # all folded rows stacked -> matmul M dimension
    SP = o_ref.shape[-1]

    # Position-within-sequence of each flattened row (for tap validity masks).
    d_idx = jax.lax.broadcasted_iota(jnp.int32, (Bblk, D, 1), 1).reshape(M, 1)

    # ---- one-hot encode tokens directly in bf16 (matmul input dtype) -------
    tok = tok_ref[...].reshape(M, 1)                          # (M, 1) int32
    sym = jax.lax.broadcasted_iota(jnp.int32, (M, S), 1)      # (M, S)
    x = (tok == sym).astype(jnp.bfloat16)                     # (M, S) bf16

    # ---- initial conv (k=9, dil=1) + ReLU -----------------------------------
    acc = _dilated_conv(x, init_taps, lambda k: lin_w_ref[k], D, d_idx)
    feat = jnp.maximum(acc + lin_b_ref[...], 0.0)             # (M, H) f32

    tc_all = tc_ref[...]                                      # (Bblk, L, H)

    # ---- residual dilated-conv blocks (statically unrolled over layers) -----
    for l in range(L):
        bias = jnp.broadcast_to(tc_all[:, l:l + 1, :],
                                (Bblk, D, H)).reshape(M, H)
        h = feat + bias
        # LayerNorm(H): single-pass stats, gamma folded into the rsqrt scale.
        mean = jnp.mean(h, axis=-1, keepdims=True)
        m2 = jnp.mean(h * h, axis=-1, keepdims=True)
        var = jnp.maximum(m2 - mean * mean, 0.0)
        scale = jax.lax.rsqrt(var + LN_EPS) * g_ref[l:l + 1, :]
        h = (h - mean) * scale + beta_ref[l:l + 1, :]
        hb = h.astype(jnp.bfloat16)                           # cast ONCE
        acc = _dilated_conv(hb, layer_taps[l],
                            lambda k, l=l: cw_ref[l, k], D, d_idx)
        feat = jnp.maximum(acc + cb_ref[l:l + 1, :], 0.0) + feat  # ReLU + res

    # ---- final 1x1 convs: Conv1d(H,H,1) -> ReLU -> Conv1d(H,S,1) ------------
    h1 = jnp.maximum(
        jnp.dot(feat.astype(jnp.bfloat16), f_w1_ref[...],
                preferred_element_type=jnp.float32) + f_b1_ref[...], 0.0)
    out = (jnp.dot(h1.astype(jnp.bfloat16), f_w2_ref[...],
                   preferred_element_type=jnp.float32) + f_b2_ref[...])
    o_ref[...] = out.reshape(Bblk, D, SP)                     # lane-dense store


# ----------------------------------------------------------------------------
# Parameter init (weights stored in the channels-last / tap-major layout)
# ----------------------------------------------------------------------------
def make_params(key, *, S, H, num_cnn_stacks):
    num_layers = 5 * num_cnn_stacks
    ks = iter(jax.random.split(key, 16 + 8 * num_layers))
    w = lambda shape, s=0.05: (s * jax.random.normal(next(ks), shape)
                               ).astype(jnp.float32)

    params = {
        # GaussianFourierProjection (fixed buffer, scale=30)
        "gfp_W": (30.0 * jax.random.normal(next(ks), (H // 2,))
                  ).astype(jnp.float32),
        # time_embedder Linear(H, H)   (stored as x @ W + b, i.e. torch W.T)
        "te_W": w((H, H)), "te_b": w((H,)),
        # uncond embedding
        "uncond_emb": w((H,), 1.0),
        # time_cond_embedder: Linear(2H,H) -> ReLU -> Linear(H,H)
        "tce_W1": w((2 * H, H)), "tce_b1": w((H,)),
        "tce_W2": w((H, H)), "tce_b2": w((H,)),
        # initial conv  Conv1d(S, H, k=9, pad=4): weights as (9, S, H)
        "lin_cw": w((9, S, H)), "lin_cb": w((1, H)),
        # final 1x1 convs
        "f_w1": w((H, H)), "f_b1": w((1, H)),
        "f_w2": w((H, S)), "f_b2": w((1, S)),
        # per-layer: Dense(H,H), LayerNorm(H), Conv1d(H,H,k=9,dil=d)
        "layers": [],
    }
    for _ in range(num_layers):
        params["layers"].append({
            "dw": w((H, H)), "db": w((1, H)),
            "gamma": jnp.ones((1, H), jnp.float32),
            "beta": jnp.zeros((1, H), jnp.float32),
            "cw": w((9, H, H)), "cb": w((1, H)),
        })
    return params


# ----------------------------------------------------------------------------
# Forward: tiny embedding MLPs in plain JAX, everything else in one kernel.
# ----------------------------------------------------------------------------
def denoising_cnn_forward(params, xt, t, *, S, num_cnn_stacks,
                          batch_block=None):
    """xt: (B, D) int32 tokens; t: (B,) float32.  Returns logits (B, D, S)."""
    B, D = xt.shape
    H = params["te_W"].shape[0]

    # Static dilation schedule: each base conv repeated num_cnn_stacks times
    # consecutively, exactly like the reference ModuleList construction.
    base = (1, 1, 4, 16, 64)
    dilations = tuple(d for d in base for _ in range(num_cnn_stacks))
    L = len(dilations)

    # --- tiny embedding MLPs: plain JAX glue (negligible compute) -----------
    cond_emb = jnp.broadcast_to(params["uncond_emb"][None, :], (B, H))
    x_proj = t[:, None] * params["gfp_W"][None, :] * (2.0 * np.pi)
    gfp = jnp.concatenate([jnp.sin(x_proj), jnp.cos(x_proj)], axis=-1)  # (B,H)
    time_emb = jax.nn.relu(gfp @ params["te_W"] + params["te_b"])
    tc_in = jnp.concatenate([time_emb, cond_emb], axis=-1)              # (B,2H)
    h1 = jax.nn.relu(tc_in @ params["tce_W1"] + params["tce_b1"])
    time_cond_emb = h1 @ params["tce_W2"] + params["tce_b2"]            # (B,H)

    # Hoist per-layer Dense(time_cond_emb) out of the kernel: (B, L, H)
    dw_stack = jnp.stack([lp["dw"] for lp in params["layers"]], axis=0)
    db_stack = jnp.concatenate([lp["db"] for lp in params["layers"]], axis=0)
    tc_all = (jnp.einsum("bh,lhk->blk", time_cond_emb, dw_stack)
              + db_stack[None]).astype(jnp.float32)

    ln_g = jnp.concatenate([lp["gamma"] for lp in params["layers"]], axis=0)
    ln_b = jnp.concatenate([lp["beta"] for lp in params["layers"]], axis=0)
    cb = jnp.concatenate([lp["cb"] for lp in params["layers"]], axis=0)

    # One stacked conv-weight tensor (L, 9, H, H); taps whose receptive field
    # falls entirely in the zero padding (|k-4|*dil >= D) are skipped
    # statically inside the kernel.
    cw_stack = jnp.stack([lp["cw"] for lp in params["layers"]],
                         axis=0).astype(jnp.bfloat16)
    layer_taps = tuple(
        tuple((k, (k - 4) * dil) for k in range(9) if abs(k - 4) * dil < D)
        for dil in dilations)
    init_taps = tuple((k, k - 4) for k in range(9) if abs(k - 4) < D)
    lin_w = params["lin_cw"].astype(jnp.bfloat16)                 # (9, S, H)

    # Lane-dense logits: pad the output projection to >= 128 lanes.
    SP = max(128, ((S + 127) // 128) * 128)
    f_w2p = jnp.zeros((H, SP), jnp.float32).at[:, :S].set(
        params["f_w2"]).astype(jnp.bfloat16)
    f_b2p = jnp.zeros((1, SP), jnp.float32).at[:, :S].set(params["f_b2"])
    f_w1 = params["f_w1"].astype(jnp.bfloat16)

    # --- batch folding: several batch elements per grid step ----------------
    if batch_block is None:
        batch_block = max(1, min(B, 256 // max(D, 1)))  # target M ~ 256 rows
    nblk = -(-B // batch_block)
    if nblk == 1 and B >= 2:          # keep >= 2 steps so v7x uses both cores
        batch_block = -(-B // 2)
        nblk = -(-B // batch_block)
    B_pad = nblk * batch_block

    tok3 = xt.astype(jnp.int32)[:, :, None]                       # (B, D, 1)
    if B_pad != B:
        tok3 = jnp.pad(tok3, ((0, B_pad - B), (0, 0), (0, 0)))
        tc_all = jnp.pad(tc_all, ((0, B_pad - B), (0, 0), (0, 0)))

    c2 = lambda b: (0, 0)
    c3 = lambda b: (0, 0, 0)
    c4 = lambda b: (0, 0, 0, 0)
    in_specs = [
        pl.BlockSpec((batch_block, D, 1), lambda b: (b, 0, 0)),   # tokens
        pl.BlockSpec((batch_block, L, H), lambda b: (b, 0, 0)),   # time bias
        pl.BlockSpec(lin_w.shape, c3),                            # init conv w
        pl.BlockSpec((1, H), c2),                                 # init conv b
        pl.BlockSpec((L, H), c2),                                 # LN gamma
        pl.BlockSpec((L, H), c2),                                 # LN beta
        pl.BlockSpec((L, H), c2),                                 # conv biases
        pl.BlockSpec(cw_stack.shape, c4),                         # conv weights
        pl.BlockSpec((H, H), c2),                                 # final w1
        pl.BlockSpec((1, H), c2),                                 # final b1
        pl.BlockSpec((H, SP), c2),                                # final w2
        pl.BlockSpec((1, SP), c2),                                # final b2
    ]

    kernel = functools.partial(
        _fused_kernel, init_taps=init_taps, layer_taps=layer_taps,
        Bblk=batch_block, D=D, S=S, H=H, L=L)

    out_padded = pl.pallas_call(
        kernel,
        out_shape=jax.ShapeDtypeStruct((B_pad, D, SP), jnp.float32),
        grid=(nblk,),
        in_specs=in_specs,
        out_specs=pl.BlockSpec((batch_block, D, SP), lambda b: (b, 0, 0)),
        compiler_params=pltpu.CompilerParams(
            dimension_semantics=("parallel",),
            vmem_limit_bytes=48 * 1024 * 1024),
    )(tok3, tc_all, lin_w, params["lin_cb"], ln_g, ln_b, cb,
      cw_stack, f_w1, params["f_b1"], f_w2p, f_b2p)

    return out_padded[:B, :, :S]


# ----------------------------------------------------------------------------
if __name__ == "__main__":
    B, D, S, H = 2, 32, 8, 32
    NUM_CNN_STACKS = 1   # -> 5 conv layers with dilations [1, 1, 4, 16, 64]

    key = jax.random.PRNGKey(0)
    k_param, k_x, k_t = jax.random.split(key, 3)

    params = make_params(k_param, S=S, H=H, num_cnn_stacks=NUM_CNN_STACKS)
    xt = jax.random.randint(k_x, (B, D), 0, S, dtype=jnp.int32)
    t = jax.random.uniform(k_t, (B,), dtype=jnp.float32)

    fwd = jax.jit(functools.partial(denoising_cnn_forward, S=S,
                                    num_cnn_stacks=NUM_CNN_STACKS))
    logits = fwd(params, xt, t)
    jax.block_until_ready(logits)

    assert logits.shape == (B, D, S), logits.shape
    assert logits.dtype == jnp.float32
    assert bool(jnp.all(jnp.isfinite(logits)))
    print("KERNEL_OK")
</pallas_src>

<mosaic_0001>
module attributes {stable_mosaic.version = 11 : i64} {
  func.func @_fused_kernel(%arg0: i32, %arg1: memref<1x32x1xi32, #tpu.memory_space<vmem>>, %arg2: memref<1x5x32xf32, #tpu.memory_space<vmem>>, %arg3: memref<9x8x32xbf16, #tpu.memory_space<vmem>>, %arg4: memref<1x32xf32, #tpu.memory_space<vmem>>, %arg5: memref<5x32xf32, #tpu.memory_space<vmem>>, %arg6: memref<5x32xf32, #tpu.memory_space<vmem>>, %arg7: memref<5x32xf32, #tpu.memory_space<vmem>>, %arg8: memref<5x9x32x32xbf16, #tpu.memory_space<vmem>>, %arg9: memref<32x32xbf16, #tpu.memory_space<vmem>>, %arg10: memref<1x32xf32, #tpu.memory_space<vmem>>, %arg11: memref<32x128xbf16, #tpu.memory_space<vmem>>, %arg12: memref<1x128xf32, #tpu.memory_space<vmem>>, %arg13: memref<1x32x128xf32, #tpu.memory_space<vmem>>) attributes {dimension_semantics = [#tpu.dimension_semantics<parallel>], iteration_bounds = array<i64: 2>, scalar_prefetch = 0 : i64, scratch_operands = 0 : i64, tpu.core_type = #tpu.core_type<tc>, window_params = [{transform_indices = @transform_0, window_bounds = array<i64: 1, 32, 1>}, {transform_indices = @transform_1, window_bounds = array<i64: 1, 5, 32>}, {pipeline_mode = #tpu.pipeline_mode<synchronous>, transform_indices = @transform_2, window_bounds = array<i64: 9, 8, 32>}, {pipeline_mode = #tpu.pipeline_mode<synchronous>, transform_indices = @transform_3, window_bounds = array<i64: 1, 32>}, {pipeline_mode = #tpu.pipeline_mode<synchronous>, transform_indices = @transform_4, window_bounds = array<i64: 5, 32>}, {pipeline_mode = #tpu.pipeline_mode<synchronous>, transform_indices = @transform_5, window_bounds = array<i64: 5, 32>}, {pipeline_mode = #tpu.pipeline_mode<synchronous>, transform_indices = @transform_6, window_bounds = array<i64: 5, 32>}, {pipeline_mode = #tpu.pipeline_mode<synchronous>, transform_indices = @transform_7, window_bounds = array<i64: 5, 9, 32, 32>}, {pipeline_mode = #tpu.pipeline_mode<synchronous>, transform_indices = @transform_8, window_bounds = array<i64: 32, 32>}, {pipeline_mode = #tpu.pipeline_mode<synchronous>, transform_indices = @transform_9, window_bounds = array<i64: 1, 32>}, {pipeline_mode = #tpu.pipeline_mode<synchronous>, transform_indices = @transform_10, window_bounds = array<i64: 32, 128>}, {pipeline_mode = #tpu.pipeline_mode<synchronous>, transform_indices = @transform_11, window_bounds = array<i64: 1, 128>}, {transform_indices = @transform_12, window_bounds = array<i64: 1, 32, 128>}]} {
    %0 = tpu.iota {dimensions = array<i32: 1>} : vector<1x32x1xi32>
    %1 = vector.shape_cast %0 : vector<1x32x1xi32> to vector<32x1xi32>
    %c0 = arith.constant 0 : index
    %c0_0 = arith.constant 0 : index
    %c0_1 = arith.constant 0 : index
    %2 = vector.load %arg1[%c0, %c0_0, %c0_1] : memref<1x32x1xi32, #tpu.memory_space<vmem>>, vector<1x32x1xi32>
    %3 = vector.shape_cast %2 : vector<1x32x1xi32> to vector<32x1xi32>
    %4 = tpu.iota {dimensions = array<i32: 1>} : vector<32x8xi32>
    %5 = vector.broadcast %3 : vector<32x1xi32> to vector<32x8xi32>
    %6 = arith.cmpi eq, %5, %4 : vector<32x8xi32>
    %7 = arith.extui %6 : vector<32x8xi1> to vector<32x8xi32>
    %8 = arith.sitofp %7 : vector<32x8xi32> to vector<32x8xf32>
    %9 = arith.truncf %8 : vector<32x8xf32> to vector<32x8xbf16>
    %c0_2 = arith.constant 0 : index
    %c0_3 = arith.constant 0 : index
    %c0_4 = arith.constant 0 : index
    %10 = vector.load %arg3[%c0_2, %c0_3, %c0_4] : memref<9x8x32xbf16, #tpu.memory_space<vmem>>, vector<1x8x32xbf16>
    %11 = vector.shape_cast %10 : vector<1x8x32xbf16> to vector<8x32xbf16>
    %cst = arith.constant dense<0.000000e+00> : vector<32x32xf32>
    %12 = tpu.matmul %9, %11, %cst {dimension_numbers = #tpu.dot_dimension_numbers<[1], [0], [0], [1], [0, 0, 1, 1], [], []>} : vector<32x8xbf16>, vector<8x32xbf16>, vector<32x32xf32> -> vector<32x32xf32>
    %c4_i32 = arith.constant 4 : i32
    %13 = tpu.dynamic_rotate %12 by %c4_i32 dim 0 : vector<32x32xf32>, i32 -> vector<32x32xf32>
    %c-4_i32 = arith.constant -4 : i32
    %14 = vector.broadcast %c-4_i32 : i32 to vector<32x1xi32>
    %15 = arith.addi %1, %14 : vector<32x1xi32>
    %c0_i32 = arith.constant 0 : i32
    %16 = vector.broadcast %c0_i32 : i32 to vector<32x1xi32>
    %17 = arith.cmpi sge, %15, %16 : vector<32x1xi32>
    %c-4_i32_5 = arith.constant -4 : i32
    %18 = vector.broadcast %c-4_i32_5 : i32 to vector<32x1xi32>
    %19 = arith.addi %1, %18 : vector<32x1xi32>
    %c32_i32 = arith.constant 32 : i32
    %20 = vector.broadcast %c32_i32 : i32 to vector<32x1xi32>
    %21 = arith.cmpi slt, %19, %20 : vector<32x1xi32>
    %22 = arith.andi %17, %21 : vector<32x1xi1>
    %cst_6 = arith.constant 0.000000e+00 : f32
    %23 = vector.broadcast %cst_6 : f32 to vector<32x32xf32>
    %24 = vector.shape_cast %22 : vector<32x1xi1> to vector<32x1xi1>
    %25 = vector.broadcast %24 : vector<32x1xi1> to vector<32x32xi1>
    %26 = arith.select %25, %13, %23 : vector<32x32xi1>, vector<32x32xf32>
    %c1 = arith.constant 1 : index
    %c0_7 = arith.constant 0 : index
    %c0_8 = arith.constant 0 : index
    %27 = vector.load %arg3[%c1, %c0_7, %c0_8] : memref<9x8x32xbf16, #tpu.memory_space<vmem>>, vector<1x8x32xbf16>
    %28 = vector.shape_cast %27 : vector<1x8x32xbf16> to vector<8x32xbf16>
    %cst_9 = arith.constant dense<0.000000e+00> : vector<32x32xf32>
    %29 = tpu.matmul %9, %28, %cst_9 {dimension_numbers = #tpu.dot_dimension_numbers<[1], [0], [0], [1], [0, 0, 1, 1], [], []>} : vector<32x8xbf16>, vector<8x32xbf16>, vector<32x32xf32> -> vector<32x32xf32>
    %c3_i32 = arith.constant 3 : i32
    %30 = tpu.dynamic_rotate %29 by %c3_i32 dim 0 : vector<32x32xf32>, i32 -> vector<32x32xf32>
    %c-3_i32 = arith.constant -3 : i32
    %31 = vector.broadcast %c-3_i32 : i32 to vector<32x1xi32>
    %32 = arith.addi %1, %31 : vector<32x1xi32>
    %c0_i32_10 = arith.constant 0 : i32
    %33 = vector.broadcast %c0_i32_10 : i32 to vector<32x1xi32>
    %34 = arith.cmpi sge, %32, %33 : vector<32x1xi32>
    %c-3_i32_11 = arith.constant -3 : i32
    %35 = vector.broadcast %c-3_i32_11 : i32 to vector<32x1xi32>
    %36 = arith.addi %1, %35 : vector<32x1xi32>
    %c32_i32_12 = arith.constant 32 : i32
    %37 = vector.broadcast %c32_i32_12 : i32 to vector<32x1xi32>
    %38 = arith.cmpi slt, %36, %37 : vector<32x1xi32>
    %39 = arith.andi %34, %38 : vector<32x1xi1>
    %cst_13 = arith.constant 0.000000e+00 : f32
    %40 = vector.broadcast %cst_13 : f32 to vector<32x32xf32>
    %41 = vector.shape_cast %39 : vector<32x1xi1> to vector<32x1xi1>
    %42 = vector.broadcast %41 : vector<32x1xi1> to vector<32x32xi1>
    %43 = arith.select %42, %30, %40 : vector<32x32xi1>, vector<32x32xf32>
    %44 = arith.addf %26, %43 : vector<32x32xf32>
    %c2 = arith.constant 2 : index
    %c0_14 = arith.constant 0 : index
    %c0_15 = arith.constant 0 : index
    %45 = vector.load %arg3[%c2, %c0_14, %c0_15] : memref<9x8x32xbf16, #tpu.memory_space<vmem>>, vector<1x8x32xbf16>
    %46 = vector.shape_cast %45 : vector<1x8x32xbf16> to vector<8x32xbf16>
    %cst_16 = arith.constant dense<0.000000e+00> : vector<32x32xf32>
    %47 = tpu.matmul %9, %46, %cst_16 {dimension_numbers = #tpu.dot_dimension_numbers<[1], [0], [0], [1], [0, 0, 1, 1], [], []>} : vector<32x8xbf16>, vector<8x32xbf16>, vector<32x32xf32> -> vector<32x32xf32>
    %c2_i32 = arith.constant 2 : i32
    %48 = tpu.dynamic_rotate %47 by %c2_i32 dim 0 : vector<32x32xf32>, i32 -> vector<32x32xf32>
    %c-2_i32 = arith.constant -2 : i32
    %49 = vector.broadcast %c-2_i32 : i32 to vector<32x1xi32>
    %50 = arith.addi %1, %49 : vector<32x1xi32>
    %c0_i32_17 = arith.constant 0 : i32
    %51 = vector.broadcast %c0_i32_17 : i32 to vector<32x1xi32>
    %52 = arith.cmpi sge, %50, %51 : vector<32x1xi32>
    %c-2_i32_18 = arith.constant -2 : i32
    %53 = vector.broadcast %c-2_i32_18 : i32 to vector<32x1xi32>
    %54 = arith.addi %1, %53 : vector<32x1xi32>
    %c32_i32_19 = arith.constant 32 : i32
    %55 = vector.broadcast %c32_i32_19 : i32 to vector<32x1xi32>
    %56 = arith.cmpi slt, %54, %55 : vector<32x1xi32>
    %57 = arith.andi %52, %56 : vector<32x1xi1>
    %cst_20 = arith.constant 0.000000e+00 : f32
    %58 = vector.broadcast %cst_20 : f32 to vector<32x32xf32>
    %59 = vector.shape_cast %57 : vector<32x1xi1> to vector<32x1xi1>
    %60 = vector.broadcast %59 : vector<32x1xi1> to vector<32x32xi1>
    %61 = arith.select %60, %48, %58 : vector<32x32xi1>, vector<32x32xf32>
    %62 = arith.addf %44, %61 : vector<32x32xf32>
    %c3 = arith.constant 3 : index
    %c0_21 = arith.constant 0 : index
    %c0_22 = arith.constant 0 : index
    %63 = vector.load %arg3[%c3, %c0_21, %c0_22] : memref<9x8x32xbf16, #tpu.memory_space<vmem>>, vector<1x8x32xbf16>
    %64 = vector.shape_cast %63 : vector<1x8x32xbf16> to vector<8x32xbf16>
    %cst_23 = arith.constant dense<0.000000e+00> : vector<32x32xf32>
    %65 = tpu.matmul %9, %64, %cst_23 {dimension_numbers = #tpu.dot_dimension_numbers<[1], [0], [0], [1], [0, 0, 1, 1], [], []>} : vector<32x8xbf16>, vector<8x32xbf16>, vector<32x32xf32> -> vector<32x32xf32>
    %c1_i32 = arith.constant 1 : i32
    %66 = tpu.dynamic_rotate %65 by %c1_i32 dim 0 : vector<32x32xf32>, i32 -> vector<32x32xf32>
    %c-1_i32 = arith.constant -1 : i32
    %67 = vector.broadcast %c-1_i32 : i32 to vector<32x1xi32>
    %68 = arith.addi %1, %67 : vector<32x1xi32>
    %c0_i32_24 = arith.constant 0 : i32
    %69 = vector.broadcast %c0_i32_24 : i32 to vector<32x1xi32>
    %70 = arith.cmpi sge, %68, %69 : vector<32x1xi32>
    %c-1_i32_25 = arith.constant -1 : i32
    %71 = vector.broadcast %c-1_i32_25 : i32 to vector<32x1xi32>
    %72 = arith.addi %1, %71 : vector<32x1xi32>
    %c32_i32_26 = arith.constant 32 : i32
    %73 = vector.broadcast %c32_i32_26 : i32 to vector<32x1xi32>
    %74 = arith.cmpi slt, %72, %73 : vector<32x1xi32>
    %75 = arith.andi %70, %74 : vector<32x1xi1>
    %cst_27 = arith.constant 0.000000e+00 : f32
    %76 = vector.broadcast %cst_27 : f32 to vector<32x32xf32>
    %77 = vector.shape_cast %75 : vector<32x1xi1> to vector<32x1xi1>
    %78 = vector.broadcast %77 : vector<32x1xi1> to vector<32x32xi1>
    %79 = arith.select %78, %66, %76 : vector<32x32xi1>, vector<32x32xf32>
    %80 = arith.addf %62, %79 : vector<32x32xf32>
    %c4 = arith.constant 4 : index
    %c0_28 = arith.constant 0 : index
    %c0_29 = arith.constant 0 : index
    %81 = vector.load %arg3[%c4, %c0_28, %c0_29] : memref<9x8x32xbf16, #tpu.memory_space<vmem>>, vector<1x8x32xbf16>
    %82 = vector.shape_cast %81 : vector<1x8x32xbf16> to vector<8x32xbf16>
    %cst_30 = arith.constant dense<0.000000e+00> : vector<32x32xf32>
    %83 = tpu.matmul %9, %82, %cst_30 {dimension_numbers = #tpu.dot_dimension_numbers<[1], [0], [0], [1], [0, 0, 1, 1], [], []>} : vector<32x8xbf16>, vector<8x32xbf16>, vector<32x32xf32> -> vector<32x32xf32>
    %84 = arith.addf %80, %83 : vector<32x32xf32>
    %c5 = arith.constant 5 : index
    %c0_31 = arith.constant 0 : index
    %c0_32 = arith.constant 0 : index
    %85 = vector.load %arg3[%c5, %c0_31, %c0_32] : memref<9x8x32xbf16, #tpu.memory_space<vmem>>, vector<1x8x32xbf16>
    %86 = vector.shape_cast %85 : vector<1x8x32xbf16> to vector<8x32xbf16>
    %cst_33 = arith.constant dense<0.000000e+00> : vector<32x32xf32>
    %87 = tpu.matmul %9, %86, %cst_33 {dimension_numbers = #tpu.dot_dimension_numbers<[1], [0], [0], [1], [0, 0, 1, 1], [], []>} : vector<32x8xbf16>, vector<8x32xbf16>, vector<32x32xf32> -> vector<32x32xf32>
    %c31_i32 = arith.constant 31 : i32
    %88 = tpu.dynamic_rotate %87 by %c31_i32 dim 0 : vector<32x32xf32>, i32 -> vector<32x32xf32>
    %c1_i32_34 = arith.constant 1 : i32
    %89 = vector.broadcast %c1_i32_34 : i32 to vector<32x1xi32>
    %90 = arith.addi %1, %89 : vector<32x1xi32>
    %c0_i32_35 = arith.constant 0 : i32
    %91 = vector.broadcast %c0_i32_35 : i32 to vector<32x1xi32>
    %92 = arith.cmpi sge, %90, %91 : vector<32x1xi32>
    %c1_i32_36 = arith.constant 1 : i32
    %93 = vector.broadcast %c1_i32_36 : i32 to vector<32x1xi32>
    %94 = arith.addi %1, %93 : vector<32x1xi32>
    %c32_i32_37 = arith.constant 32 : i32
    %95 = vector.broadcast %c32_i32_37 : i32 to vector<32x1xi32>
    %96 = arith.cmpi slt, %94, %95 : vector<32x1xi32>
    %97 = arith.andi %92, %96 : vector<32x1xi1>
    %cst_38 = arith.constant 0.000000e+00 : f32
    %98 = vector.broadcast %cst_38 : f32 to vector<32x32xf32>
    %99 = vector.shape_cast %97 : vector<32x1xi1> to vector<32x1xi1>
    %100 = vector.broadcast %99 : vector<32x1xi1> to vector<32x32xi1>
    %101 = arith.select %100, %88, %98 : vector<32x32xi1>, vector<32x32xf32>
    %102 = arith.addf %84, %101 : vector<32x32xf32>
    %c6 = arith.constant 6 : index
    %c0_39 = arith.constant 0 : index
    %c0_40 = arith.constant 0 : index
    %103 = vector.load %arg3[%c6, %c0_39, %c0_40] : memref<9x8x32xbf16, #tpu.memory_space<vmem>>, vector<1x8x32xbf16>
    %104 = vector.shape_cast %103 : vector<1x8x32xbf16> to vector<8x32xbf16>
    %cst_41 = arith.constant dense<0.000000e+00> : vector<32x32xf32>
    %105 = tpu.matmul %9, %104, %cst_41 {dimension_numbers = #tpu.dot_dimension_numbers<[1], [0], [0], [1], [0, 0, 1, 1], [], []>} : vector<32x8xbf16>, vector<8x32xbf16>, vector<32x32xf32> -> vector<32x32xf32>
    %c30_i32 = arith.constant 30 : i32
    %106 = tpu.dynamic_rotate %105 by %c30_i32 dim 0 : vector<32x32xf32>, i32 -> vector<32x32xf32>
    %c2_i32_42 = arith.constant 2 : i32
    %107 = vector.broadcast %c2_i32_42 : i32 to vector<32x1xi32>
    %108 = arith.addi %1, %107 : vector<32x1xi32>
    %c0_i32_43 = arith.constant 0 : i32
    %109 = vector.broadcast %c0_i32_43 : i32 to vector<32x1xi32>
    %110 = arith.cmpi sge, %108, %109 : vector<32x1xi32>
    %c2_i32_44 = arith.constant 2 : i32
    %111 = vector.broadcast %c2_i32_44 : i32 to vector<32x1xi32>
    %112 = arith.addi %1, %111 : vector<32x1xi32>
    %c32_i32_45 = arith.constant 32 : i32
    %113 = vector.broadcast %c32_i32_45 : i32 to vector<32x1xi32>
    %114 = arith.cmpi slt, %112, %113 : vector<32x1xi32>
    %115 = arith.andi %110, %114 : vector<32x1xi1>
    %cst_46 = arith.constant 0.000000e+00 : f32
    %116 = vector.broadcast %cst_46 : f32 to vector<32x32xf32>
    %117 = vector.shape_cast %115 : vector<32x1xi1> to vector<32x1xi1>
    %118 = vector.broadcast %117 : vector<32x1xi1> to vector<32x32xi1>
    %119 = arith.select %118, %106, %116 : vector<32x32xi1>, vector<32x32xf32>
    %120 = arith.addf %102, %119 : vector<32x32xf32>
    %c7 = arith.constant 7 : index
    %c0_47 = arith.constant 0 : index
    %c0_48 = arith.constant 0 : index
    %121 = vector.load %arg3[%c7, %c0_47, %c0_48] : memref<9x8x32xbf16, #tpu.memory_space<vmem>>, vector<1x8x32xbf16>
    %122 = vector.shape_cast %121 : vector<1x8x32xbf16> to vector<8x32xbf16>
    %cst_49 = arith.constant dense<0.000000e+00> : vector<32x32xf32>
    %123 = tpu.matmul %9, %122, %cst_49 {dimension_numbers = #tpu.dot_dimension_numbers<[1], [0], [0], [1], [0, 0, 1, 1], [], []>} : vector<32x8xbf16>, vector<8x32xbf16>, vector<32x32xf32> -> vector<32x32xf32>
    %c29_i32 = arith.constant 29 : i32
    %124 = tpu.dynamic_rotate %123 by %c29_i32 dim 0 : vector<32x32xf32>, i32 -> vector<32x32xf32>
    %c3_i32_50 = arith.constant 3 : i32
    %125 = vector.broadcast %c3_i32_50 : i32 to vector<32x1xi32>
    %126 = arith.addi %1, %125 : vector<32x1xi32>
    %c0_i32_51 = arith.constant 0 : i32
    %127 = vector.broadcast %c0_i32_51 : i32 to vector<32x1xi32>
    %128 = arith.cmpi sge, %126, %127 : vector<32x1xi32>
    %c3_i32_52 = arith.constant 3 : i32
    %129 = vector.broadcast %c3_i32_52 : i32 to vector<32x1xi32>
    %130 = arith.addi %1, %129 : vector<32x1xi32>
    %c32_i32_53 = arith.constant 32 : i32
    %131 = vector.broadcast %c32_i32_53 : i32 to vector<32x1xi32>
    %132 = arith.cmpi slt, %130, %131 : vector<32x1xi32>
    %133 = arith.andi %128, %132 : vector<32x1xi1>
    %cst_54 = arith.constant 0.000000e+00 : f32
    %134 = vector.broadcast %cst_54 : f32 to vector<32x32xf32>
    %135 = vector.shape_cast %133 : vector<32x1xi1> to vector<32x1xi1>
    %136 = vector.broadcast %135 : vector<32x1xi1> to vector<32x32xi1>
    %137 = arith.select %136, %124, %134 : vector<32x32xi1>, vector<32x32xf32>
    %138 = arith.addf %120, %137 : vector<32x32xf32>
    %c8 = arith.constant 8 : index
    %c0_55 = arith.constant 0 : index
    %c0_56 = arith.constant 0 : index
    %139 = vector.load %arg3[%c8, %c0_55, %c0_56] : memref<9x8x32xbf16, #tpu.memory_space<vmem>>, vector<1x8x32xbf16>
    %140 = vector.shape_cast %139 : vector<1x8x32xbf16> to vector<8x32xbf16>
    %cst_57 = arith.constant dense<0.000000e+00> : vector<32x32xf32>
    %141 = tpu.matmul %9, %140, %cst_57 {dimension_numbers = #tpu.dot_dimension_numbers<[1], [0], [0], [1], [0, 0, 1, 1], [], []>} : vector<32x8xbf16>, vector<8x32xbf16>, vector<32x32xf32> -> vector<32x32xf32>
    %c28_i32 = arith.constant 28 : i32
    %142 = tpu.dynamic_rotate %141 by %c28_i32 dim 0 : vector<32x32xf32>, i32 -> vector<32x32xf32>
    %c4_i32_58 = arith.constant 4 : i32
    %143 = vector.broadcast %c4_i32_58 : i32 to vector<32x1xi32>
    %144 = arith.addi %1, %143 : vector<32x1xi32>
    %c0_i32_59 = arith.constant 0 : i32
    %145 = vector.broadcast %c0_i32_59 : i32 to vector<32x1xi32>
    %146 = arith.cmpi sge, %144, %145 : vector<32x1xi32>
    %c4_i32_60 = arith.constant 4 : i32
    %147 = vector.broadcast %c4_i32_60 : i32 to vector<32x1xi32>
    %148 = arith.addi %1, %147 : vector<32x1xi32>
    %c32_i32_61 = arith.constant 32 : i32
    %149 = vector.broadcast %c32_i32_61 : i32 to vector<32x1xi32>
    %150 = arith.cmpi slt, %148, %149 : vector<32x1xi32>
    %151 = arith.andi %146, %150 : vector<32x1xi1>
    %cst_62 = arith.constant 0.000000e+00 : f32
    %152 = vector.broadcast %cst_62 : f32 to vector<32x32xf32>
    %153 = vector.shape_cast %151 : vector<32x1xi1> to vector<32x1xi1>
    %154 = vector.broadcast %153 : vector<32x1xi1> to vector<32x32xi1>
    %155 = arith.select %154, %142, %152 : vector<32x32xi1>, vector<32x32xf32>
    %156 = arith.addf %138, %155 : vector<32x32xf32>
    %c0_63 = arith.constant 0 : index
    %c0_64 = arith.constant 0 : index
    %157 = vector.load %arg4[%c0_63, %c0_64] : memref<1x32xf32, #tpu.memory_space<vmem>>, vector<1x32xf32>
    %158 = vector.broadcast %157 : vector<1x32xf32> to vector<32x32xf32>
    %159 = arith.addf %156, %158 : vector<32x32xf32>
    %cst_65 = arith.constant 0.000000e+00 : f32
    %160 = vector.broadcast %cst_65 : f32 to vector<32x32xf32>
    %161 = arith.maximumf %159, %160 : vector<32x32xf32>
    %c0_66 = arith.constant 0 : index
    %c0_67 = arith.constant 0 : index
    %c0_68 = arith.constant 0 : index
    %162 = vector.load %arg2[%c0_66, %c0_67, %c0_68] : memref<1x5x32xf32, #tpu.memory_space<vmem>>, vector<1x5x32xf32>
    %163 = vector.extract_strided_slice %162 {offsets = [0, 0, 0], sizes = [1, 1, 32], strides = [1, 1, 1]} : vector<1x5x32xf32> to vector<1x1x32xf32>
    %164 = vector.shape_cast %163 : vector<1x1x32xf32> to vector<1x1x32xf32>
    %165 = vector.broadcast %164 : vector<1x1x32xf32> to vector<1x32x32xf32>
    %166 = vector.shape_cast %165 : vector<1x32x32xf32> to vector<32x32xf32>
    %167 = arith.addf %161, %166 : vector<32x32xf32>
    %cst_69 = arith.constant dense<0.000000e+00> : vector<32xf32>
    %168 = vector.multi_reduction <add>, %167, %cst_69 [1] : vector<32x32xf32> to vector<32xf32>
    %169 = vector.shape_cast %168 : vector<32xf32> to vector<32x1xf32>
    %cst_70 = arith.constant 3.200000e+01 : f32
    %170 = vector.broadcast %cst_70 : f32 to vector<32x1xf32>
    %171 = arith.divf %169, %170 : vector<32x1xf32>
    %172 = arith.mulf %167, %167 : vector<32x32xf32>
    %cst_71 = arith.constant dense<0.000000e+00> : vector<32xf32>
    %173 = vector.multi_reduction <add>, %172, %cst_71 [1] : vector<32x32xf32> to vector<32xf32>
    %174 = vector.shape_cast %173 : vector<32xf32> to vector<32x1xf32>
    %cst_72 = arith.constant 3.200000e+01 : f32
    %175 = vector.broadcast %cst_72 : f32 to vector<32x1xf32>
    %176 = arith.divf %174, %175 : vector<32x1xf32>
    %177 = arith.mulf %171, %171 : vector<32x1xf32>
    %178 = arith.subf %176, %177 : vector<32x1xf32>
    %cst_73 = arith.constant 0.000000e+00 : f32
    %179 = vector.broadcast %cst_73 : f32 to vector<32x1xf32>
    %180 = arith.maximumf %178, %179 : vector<32x1xf32>
    %cst_74 = arith.constant 9.99999974E-6 : f32
    %181 = vector.broadcast %cst_74 : f32 to vector<32x1xf32>
    %182 = arith.addf %180, %181 : vector<32x1xf32>
    %183 = math.rsqrt %182 : vector<32x1xf32>
    %c0_75 = arith.constant 0 : index
    %c0_76 = arith.constant 0 : index
    %184 = vector.load %arg5[%c0_75, %c0_76] : memref<5x32xf32, #tpu.memory_space<vmem>>, vector<1x32xf32>
    %185 = vector.broadcast %183 : vector<32x1xf32> to vector<32x32xf32>
    %186 = vector.broadcast %184 : vector<1x32xf32> to vector<32x32xf32>
    %187 = arith.mulf %185, %186 : vector<32x32xf32>
    %188 = vector.broadcast %171 : vector<32x1xf32> to vector<32x32xf32>
    %189 = arith.subf %167, %188 : vector<32x32xf32>
    %190 = arith.mulf %189, %187 : vector<32x32xf32>
    %c0_77 = arith.constant 0 : index
    %c0_78 = arith.constant 0 : index
    %191 = vector.load %arg6[%c0_77, %c0_78] : memref<5x32xf32, #tpu.memory_space<vmem>>, vector<1x32xf32>
    %192 = vector.broadcast %191 : vector<1x32xf32> to vector<32x32xf32>
    %193 = arith.addf %190, %192 : vector<32x32xf32>
    %194 = arith.truncf %193 : vector<32x32xf32> to vector<32x32xbf16>
    %c0_79 = arith.constant 0 : index
    %c0_80 = arith.constant 0 : index
    %c0_81 = arith.constant 0 : index
    %c0_82 = arith.constant 0 : index
    %195 = vector.load %arg8[%c0_79, %c0_80, %c0_81, %c0_82] : memref<5x9x32x32xbf16, #tpu.memory_space<vmem>>, vector<1x1x32x32xbf16>
    %196 = vector.shape_cast %195 : vector<1x1x32x32xbf16> to vector<32x32xbf16>
    %cst_83 = arith.constant dense<0.000000e+00> : vector<32x32xf32>
    %197 = tpu.matmul %194, %196, %cst_83 {dimension_numbers = #tpu.dot_dimension_numbers<[1], [0], [0], [1], [0, 0, 1, 1], [], []>} : vector<32x32xbf16>, vector<32x32xbf16>, vector<32x32xf32> -> vector<32x32xf32>
    %c4_i32_84 = arith.constant 4 : i32
    %198 = tpu.dynamic_rotate %197 by %c4_i32_84 dim 0 : vector<32x32xf32>, i32 -> vector<32x32xf32>
    %c-4_i32_85 = arith.constant -4 : i32
    %199 = vector.broadcast %c-4_i32_85 : i32 to vector<32x1xi32>
    %200 = arith.addi %1, %199 : vector<32x1xi32>
    %c0_i32_86 = arith.constant 0 : i32
    %201 = vector.broadcast %c0_i32_86 : i32 to vector<32x1xi32>
    %202 = arith.cmpi sge, %200, %201 : vector<32x1xi32>
    %c-4_i32_87 = arith.constant -4 : i32
    %203 = vector.broadcast %c-4_i32_87 : i32 to vector<32x1xi32>
    %204 = arith.addi %1, %203 : vector<32x1xi32>
    %c32_i32_88 = arith.constant 32 : i32
    %205 = vector.broadcast %c32_i32_88 : i32 to vector<32x1xi32>
    %206 = arith.cmpi slt, %204, %205 : vector<32x1xi32>
    %207 = arith.andi %202, %206 : vector<32x1xi1>
    %cst_89 = arith.constant 0.000000e+00 : f32
    %208 = vector.broadcast %cst_89 : f32 to vector<32x32xf32>
    %209 = vector.shape_cast %207 : vector<32x1xi1> to vector<32x1xi1>
    %210 = vector.broadcast %209 : vector<32x1xi1> to vector<32x32xi1>
    %211 = arith.select %210, %198, %208 : vector<32x32xi1>, vector<32x32xf32>
    %c0_90 = arith.constant 0 : index
    %c1_91 = arith.constant 1 : index
    %c0_92 = arith.constant 0 : index
    %c0_93 = arith.constant 0 : index
    %212 = vector.load %arg8[%c0_90, %c1_91, %c0_92, %c0_93] : memref<5x9x32x32xbf16, #tpu.memory_space<vmem>>, vector<1x1x32x32xbf16>
    %213 = vector.shape_cast %212 : vector<1x1x32x32xbf16> to vector<32x32xbf16>
    %cst_94 = arith.constant dense<0.000000e+00> : vector<32x32xf32>
    %214 = tpu.matmul %194, %213, %cst_94 {dimension_numbers = #tpu.dot_dimension_numbers<[1], [0], [0], [1], [0, 0, 1, 1], [], []>} : vector<32x32xbf16>, vector<32x32xbf16>, vector<32x32xf32> -> vector<32x32xf32>
    %c3_i32_95 = arith.constant 3 : i32
    %215 = tpu.dynamic_rotate %214 by %c3_i32_95 dim 0 : vector<32x32xf32>, i32 -> vector<32x32xf32>
    %c-3_i32_96 = arith.constant -3 : i32
    %216 = vector.broadcast %c-3_i32_96 : i32 to vector<32x1xi32>
    %217 = arith.addi %1, %216 : vector<32x1xi32>
    %c0_i32_97 = arith.constant 0 : i32
    %218 = vector.broadcast %c0_i32_97 : i32 to vector<32x1xi32>
    %219 = arith.cmpi sge, %217, %218 : vector<32x1xi32>
    %c-3_i32_98 = arith.constant -3 : i32
    %220 = vector.broadcast %c-3_i32_98 : i32 to vector<32x1xi32>
    %221 = arith.addi %1, %220 : vector<32x1xi32>
    %c32_i32_99 = arith.constant 32 : i32
    %222 = vector.broadcast %c32_i32_99 : i32 to vector<32x1xi32>
    %223 = arith.cmpi slt, %221, %222 : vector<32x1xi32>
    %224 = arith.andi %219, %223 : vector<32x1xi1>
    %cst_100 = arith.constant 0.000000e+00 : f32
    %225 = vector.broadcast %cst_100 : f32 to vector<32x32xf32>
    %226 = vector.shape_cast %224 : vector<32x1xi1> to vector<32x1xi1>
    %227 = vector.broadcast %226 : vector<32x1xi1> to vector<32x32xi1>
    %228 = arith.select %227, %215, %225 : vector<32x32xi1>, vector<32x32xf32>
    %229 = arith.addf %211, %228 : vector<32x32xf32>
    %c0_101 = arith.constant 0 : index
    %c2_102 = arith.constant 2 : index
    %c0_103 = arith.constant 0 : index
    %c0_104 = arith.constant 0 : index
    %230 = vector.load %arg8[%c0_101, %c2_102, %c0_103, %c0_104] : memref<5x9x32x32xbf16, #tpu.memory_space<vmem>>, vector<1x1x32x32xbf16>
    %231 = vector.shape_cast %230 : vector<1x1x32x32xbf16> to vector<32x32xbf16>
    %cst_105 = arith.constant dense<0.000000e+00> : vector<32x32xf32>
    %232 = tpu.matmul %194, %231, %cst_105 {dimension_numbers = #tpu.dot_dimension_numbers<[1], [0], [0], [1], [0, 0, 1, 1], [], []>} : vector<32x32xbf16>, vector<32x32xbf16>, vector<32x32xf32> -> vector<32x32xf32>
    %c2_i32_106 = arith.constant 2 : i32
    %233 = tpu.dynamic_rotate %232 by %c2_i32_106 dim 0 : vector<32x32xf32>, i32 -> vector<32x32xf32>
    %c-2_i32_107 = arith.constant -2 : i32
    %234 = vector.broadcast %c-2_i32_107 : i32 to vector<32x1xi32>
    %235 = arith.addi %1, %234 : vector<32x1xi32>
    %c0_i32_108 = arith.constant 0 : i32
    %236 = vector.broadcast %c0_i32_108 : i32 to vector<32x1xi32>
    %237 = arith.cmpi sge, %235, %236 : vector<32x1xi32>
    %c-2_i32_109 = arith.constant -2 : i32
    %238 = vector.broadcast %c-2_i32_109 : i32 to vector<32x1xi32>
    %239 = arith.addi %1, %238 : vector<32x1xi32>
    %c32_i32_110 = arith.constant 32 : i32
    %240 = vector.broadcast %c32_i32_110 : i32 to vector<32x1xi32>
    %241 = arith.cmpi slt, %239, %240 : vector<32x1xi32>
    %242 = arith.andi %237, %241 : vector<32x1xi1>
    %cst_111 = arith.constant 0.000000e+00 : f32
    %243 = vector.broadcast %cst_111 : f32 to vector<32x32xf32>
    %244 = vector.shape_cast %242 : vector<32x1xi1> to vector<32x1xi1>
    %245 = vector.broadcast %244 : vector<32x1xi1> to vector<32x32xi1>
    %246 = arith.select %245, %233, %243 : vector<32x32xi1>, vector<32x32xf32>
    %247 = arith.addf %229, %246 : vector<32x32xf32>
    %c0_112 = arith.constant 0 : index
    %c3_113 = arith.constant 3 : index
    %c0_114 = arith.constant 0 : index
    %c0_115 = arith.constant 0 : index
    %248 = vector.load %arg8[%c0_112, %c3_113, %c0_114, %c0_115] : memref<5x9x32x32xbf16, #tpu.memory_space<vmem>>, vector<1x1x32x32xbf16>
    %249 = vector.shape_cast %248 : vector<1x1x32x32xbf16> to vector<32x32xbf16>
    %cst_116 = arith.constant dense<0.000000e+00> : vector<32x32xf32>
    %250 = tpu.matmul %194, %249, %cst_116 {dimension_numbers = #tpu.dot_dimension_numbers<[1], [0], [0], [1], [0, 0, 1, 1], [], []>} : vector<32x32xbf16>, vector<32x32xbf16>, vector<32x32xf32> -> vector<32x32xf32>
    %c1_i32_117 = arith.constant 1 : i32
    %251 = tpu.dynamic_rotate %250 by %c1_i32_117 dim 0 : vector<32x32xf32>, i32 -> vector<32x32xf32>
    %c-1_i32_118 = arith.constant -1 : i32
    %252 = vector.broadcast %c-1_i32_118 : i32 to vector<32x1xi32>
    %253 = arith.addi %1, %252 : vector<32x1xi32>
    %c0_i32_119 = arith.constant 0 : i32
    %254 = vector.broadcast %c0_i32_119 : i32 to vector<32x1xi32>
    %255 = arith.cmpi sge, %253, %254 : vector<32x1xi32>
    %c-1_i32_120 = arith.constant -1 : i32
    %256 = vector.broadcast %c-1_i32_120 : i32 to vector<32x1xi32>
    %257 = arith.addi %1, %256 : vector<32x1xi32>
    %c32_i32_121 = arith.constant 32 : i32
    %258 = vector.broadcast %c32_i32_121 : i32 to vector<32x1xi32>
    %259 = arith.cmpi slt, %257, %258 : vector<32x1xi32>
    %260 = arith.andi %255, %259 : vector<32x1xi1>
    %cst_122 = arith.constant 0.000000e+00 : f32
    %261 = vector.broadcast %cst_122 : f32 to vector<32x32xf32>
    %262 = vector.shape_cast %260 : vector<32x1xi1> to vector<32x1xi1>
    %263 = vector.broadcast %262 : vector<32x1xi1> to vector<32x32xi1>
    %264 = arith.select %263, %251, %261 : vector<32x32xi1>, vector<32x32xf32>
    %265 = arith.addf %247, %264 : vector<32x32xf32>
    %c0_123 = arith.constant 0 : index
    %c4_124 = arith.constant 4 : index
    %c0_125 = arith.constant 0 : index
    %c0_126 = arith.constant 0 : index
    %266 = vector.load %arg8[%c0_123, %c4_124, %c0_125, %c0_126] : memref<5x9x32x32xbf16, #tpu.memory_space<vmem>>, vector<1x1x32x32xbf16>
    %267 = vector.shape_cast %266 : vector<1x1x32x32xbf16> to vector<32x32xbf16>
    %cst_127 = arith.constant dense<0.000000e+00> : vector<32x32xf32>
    %268 = tpu.matmul %194, %267, %cst_127 {dimension_numbers = #tpu.dot_dimension_numbers<[1], [0], [0], [1], [0, 0, 1, 1], [], []>} : vector<32x32xbf16>, vector<32x32xbf16>, vector<32x32xf32> -> vector<32x32xf32>
    %269 = arith.addf %265, %268 : vector<32x32xf32>
    %c0_128 = arith.constant 0 : index
    %c5_129 = arith.constant 5 : index
    %c0_130 = arith.constant 0 : index
    %c0_131 = arith.constant 0 : index
    %270 = vector.load %arg8[%c0_128, %c5_129, %c0_130, %c0_131] : memref<5x9x32x32xbf16, #tpu.memory_space<vmem>>, vector<1x1x32x32xbf16>
    %271 = vector.shape_cast %270 : vector<1x1x32x32xbf16> to vector<32x32xbf16>
    %cst_132 = arith.constant dense<0.000000e+00> : vector<32x32xf32>
    %272 = tpu.matmul %194, %271, %cst_132 {dimension_numbers = #tpu.dot_dimension_numbers<[1], [0], [0], [1], [0, 0, 1, 1], [], []>} : vector<32x32xbf16>, vector<32x32xbf16>, vector<32x32xf32> -> vector<32x32xf32>
    %c31_i32_133 = arith.constant 31 : i32
    %273 = tpu.dynamic_rotate %272 by %c31_i32_133 dim 0 : vector<32x32xf32>, i32 -> vector<32x32xf32>
    %c1_i32_134 = arith.constant 1 : i32
    %274 = vector.broadcast %c1_i32_134 : i32 to vector<32x1xi32>
    %275 = arith.addi %1, %274 : vector<32x1xi32>
    %c0_i32_135 = arith.constant 0 : i32
    %276 = vector.broadcast %c0_i32_135 : i32 to vector<32x1xi32>
    %277 = arith.cmpi sge, %275, %276 : vector<32x1xi32>
    %c1_i32_136 = arith.constant 1 : i32
    %278 = vector.broadcast %c1_i32_136 : i32 to vector<32x1xi32>
    %279 = arith.addi %1, %278 : vector<32x1xi32>
    %c32_i32_137 = arith.constant 32 : i32
    %280 = vector.broadcast %c32_i32_137 : i32 to vector<32x1xi32>
    %281 = arith.cmpi slt, %279, %280 : vector<32x1xi32>
    %282 = arith.andi %277, %281 : vector<32x1xi1>
    %cst_138 = arith.constant 0.000000e+00 : f32
    %283 = vector.broadcast %cst_138 : f32 to vector<32x32xf32>
    %284 = vector.shape_cast %282 : vector<32x1xi1> to vector<32x1xi1>
    %285 = vector.broadcast %284 : vector<32x1xi1> to vector<32x32xi1>
    %286 = arith.select %285, %273, %283 : vector<32x32xi1>, vector<32x32xf32>
    %287 = arith.addf %269, %286 : vector<32x32xf32>
    %c0_139 = arith.constant 0 : index
    %c6_140 = arith.constant 6 : index
    %c0_141 = arith.constant 0 : index
    %c0_142 = arith.constant 0 : index
    %288 = vector.load %arg8[%c0_139, %c6_140, %c0_141, %c0_142] : memref<5x9x32x32xbf16, #tpu.memory_space<vmem>>, vector<1x1x32x32xbf16>
    %289 = vector.shape_cast %288 : vector<1x1x32x32xbf16> to vector<32x32xbf16>
    %cst_143 = arith.constant dense<0.000000e+00> : vector<32x32xf32>
    %290 = tpu.matmul %194, %289, %cst_143 {dimension_numbers = #tpu.dot_dimension_numbers<[1], [0], [0], [1], [0, 0, 1, 1], [], []>} : vector<32x32xbf16>, vector<32x32xbf16>, vector<32x32xf32> -> vector<32x32xf32>
    %c30_i32_144 = arith.constant 30 : i32
    %291 = tpu.dynamic_rotate %290 by %c30_i32_144 dim 0 : vector<32x32xf32>, i32 -> vector<32x32xf32>
    %c2_i32_145 = arith.constant 2 : i32
    %292 = vector.broadcast %c2_i32_145 : i32 to vector<32x1xi32>
    %293 = arith.addi %1, %292 : vector<32x1xi32>
    %c0_i32_146 = arith.constant 0 : i32
    %294 = vector.broadcast %c0_i32_146 : i32 to vector<32x1xi32>
    %295 = arith.cmpi sge, %293, %294 : vector<32x1xi32>
    %c2_i32_147 = arith.constant 2 : i32
    %296 = vector.broadcast %c2_i32_147 : i32 to vector<32x1xi32>
    %297 = arith.addi %1, %296 : vector<32x1xi32>
    %c32_i32_148 = arith.constant 32 : i32
    %298 = vector.broadcast %c32_i32_148 : i32 to vector<32x1xi32>
    %299 = arith.cmpi slt, %297, %298 : vector<32x1xi32>
    %300 = arith.andi %295, %299 : vector<32x1xi1>
    %cst_149 = arith.constant 0.000000e+00 : f32
    %301 = vector.broadcast %cst_149 : f32 to vector<32x32xf32>
    %302 = vector.shape_cast %300 : vector<32x1xi1> to vector<32x1xi1>
    %303 = vector.broadcast %302 : vector<32x1xi1> to vector<32x32xi1>
    %304 = arith.select %303, %291, %301 : vector<32x32xi1>, vector<32x32xf32>
    %305 = arith.addf %287, %304 : vector<32x32xf32>
    %c0_150 = arith.constant 0 : index
    %c7_151 = arith.constant 7 : index
    %c0_152 = arith.constant 0 : index
    %c0_153 = arith.constant 0 : index
    %306 = vector.load %arg8[%c0_150, %c7_151, %c0_152, %c0_153] : memref<5x9x32x32xbf16, #tpu.memory_space<vmem>>, vector<1x1x32x32xbf16>
    %307 = vector.shape_cast %306 : vector<1x1x32x32xbf16> to vector<32x32xbf16>
    %cst_154 = arith.constant dense<0.000000e+00> : vector<32x32xf32>
    %308 = tpu.matmul %194, %307, %cst_154 {dimension_numbers = #tpu.dot_dimension_numbers<[1], [0], [0], [1], [0, 0, 1, 1], [], []>} : vector<32x32xbf16>, vector<32x32xbf16>, vector<32x32xf32> -> vector<32x32xf32>
    %c29_i32_155 = arith.constant 29 : i32
    %309 = tpu.dynamic_rotate %308 by %c29_i32_155 dim 0 : vector<32x32xf32>, i32 -> vector<32x32xf32>
    %c3_i32_156 = arith.constant 3 : i32
    %310 = vector.broadcast %c3_i32_156 : i32 to vector<32x1xi32>
    %311 = arith.addi %1, %310 : vector<32x1xi32>
    %c0_i32_157 = arith.constant 0 : i32
    %312 = vector.broadcast %c0_i32_157 : i32 to vector<32x1xi32>
    %313 = arith.cmpi sge, %311, %312 : vector<32x1xi32>
    %c3_i32_158 = arith.constant 3 : i32
    %314 = vector.broadcast %c3_i32_158 : i32 to vector<32x1xi32>
    %315 = arith.addi %1, %314 : vector<32x1xi32>
    %c32_i32_159 = arith.constant 32 : i32
    %316 = vector.broadcast %c32_i32_159 : i32 to vector<32x1xi32>
    %317 = arith.cmpi slt, %315, %316 : vector<32x1xi32>
    %318 = arith.andi %313, %317 : vector<32x1xi1>
    %cst_160 = arith.constant 0.000000e+00 : f32
    %319 = vector.broadcast %cst_160 : f32 to vector<32x32xf32>
    %320 = vector.shape_cast %318 : vector<32x1xi1> to vector<32x1xi1>
    %321 = vector.broadcast %320 : vector<32x1xi1> to vector<32x32xi1>
    %322 = arith.select %321, %309, %319 : vector<32x32xi1>, vector<32x32xf32>
    %323 = arith.addf %305, %322 : vector<32x32xf32>
    %c0_161 = arith.constant 0 : index
    %c8_162 = arith.constant 8 : index
    %c0_163 = arith.constant 0 : index
    %c0_164 = arith.constant 0 : index
    %324 = vector.load %arg8[%c0_161, %c8_162, %c0_163, %c0_164] : memref<5x9x32x32xbf16, #tpu.memory_space<vmem>>, vector<1x1x32x32xbf16>
    %325 = vector.shape_cast %324 : vector<1x1x32x32xbf16> to vector<32x32xbf16>
    %cst_165 = arith.constant dense<0.000000e+00> : vector<32x32xf32>
    %326 = tpu.matmul %194, %325, %cst_165 {dimension_numbers = #tpu.dot_dimension_numbers<[1], [0], [0], [1], [0, 0, 1, 1], [], []>} : vector<32x32xbf16>, vector<32x32xbf16>, vector<32x32xf32> -> vector<32x32xf32>
    %c28_i32_166 = arith.constant 28 : i32
    %327 = tpu.dynamic_rotate %326 by %c28_i32_166 dim 0 : vector<32x32xf32>, i32 -> vector<32x32xf32>
    %c4_i32_167 = arith.constant 4 : i32
    %328 = vector.broadcast %c4_i32_167 : i32 to vector<32x1xi32>
    %329 = arith.addi %1, %328 : vector<32x1xi32>
    %c0_i32_168 = arith.constant 0 : i32
    %330 = vector.broadcast %c0_i32_168 : i32 to vector<32x1xi32>
    %331 = arith.cmpi sge, %329, %330 : vector<32x1xi32>
    %c4_i32_169 = arith.constant 4 : i32
    %332 = vector.broadcast %c4_i32_169 : i32 to vector<32x1xi32>
    %333 = arith.addi %1, %332 : vector<32x1xi32>
    %c32_i32_170 = arith.constant 32 : i32
    %334 = vector.broadcast %c32_i32_170 : i32 to vector<32x1xi32>
    %335 = arith.cmpi slt, %333, %334 : vector<32x1xi32>
    %336 = arith.andi %331, %335 : vector<32x1xi1>
    %cst_171 = arith.constant 0.000000e+00 : f32
    %337 = vector.broadcast %cst_171 : f32 to vector<32x32xf32>
    %338 = vector.shape_cast %336 : vector<32x1xi1> to vector<32x1xi1>
    %339 = vector.broadcast %338 : vector<32x1xi1> to vector<32x32xi1>
    %340 = arith.select %339, %327, %337 : vector<32x32xi1>, vector<32x32xf32>
    %341 = arith.addf %323, %340 : vector<32x32xf32>
    %c0_172 = arith.constant 0 : index
    %c0_173 = arith.constant 0 : index
    %342 = vector.load %arg7[%c0_172, %c0_173] : memref<5x32xf32, #tpu.memory_space<vmem>>, vector<1x32xf32>
    %343 = vector.broadcast %342 : vector<1x32xf32> to vector<32x32xf32>
    %344 = arith.addf %341, %343 : vector<32x32xf32>
    %cst_174 = arith.constant 0.000000e+00 : f32
    %345 = vector.broadcast %cst_174 : f32 to vector<32x32xf32>
    %346 = arith.maximumf %344, %345 : vector<32x32xf32>
    %347 = arith.addf %346, %161 : vector<32x32xf32>
    %348 = vector.extract_strided_slice %162 {offsets = [0, 1, 0], sizes = [1, 1, 32], strides = [1, 1, 1]} : vector<1x5x32xf32> to vector<1x1x32xf32>
    %349 = vector.shape_cast %348 : vector<1x1x32xf32> to vector<1x1x32xf32>
    %350 = vector.broadcast %349 : vector<1x1x32xf32> to vector<1x32x32xf32>
    %351 = vector.shape_cast %350 : vector<1x32x32xf32> to vector<32x32xf32>
    %352 = arith.addf %347, %351 : vector<32x32xf32>
    %cst_175 = arith.constant dense<0.000000e+00> : vector<32xf32>
    %353 = vector.multi_reduction <add>, %352, %cst_175 [1] : vector<32x32xf32> to vector<32xf32>
    %354 = vector.shape_cast %353 : vector<32xf32> to vector<32x1xf32>
    %cst_176 = arith.constant 3.200000e+01 : f32
    %355 = vector.broadcast %cst_176 : f32 to vector<32x1xf32>
    %356 = arith.divf %354, %355 : vector<32x1xf32>
    %357 = arith.mulf %352, %352 : vector<32x32xf32>
    %cst_177 = arith.constant dense<0.000000e+00> : vector<32xf32>
    %358 = vector.multi_reduction <add>, %357, %cst_177 [1] : vector<32x32xf32> to vector<32xf32>
    %359 = vector.shape_cast %358 : vector<32xf32> to vector<32x1xf32>
    %cst_178 = arith.constant 3.200000e+01 : f32
    %360 = vector.broadcast %cst_178 : f32 to vector<32x1xf32>
    %361 = arith.divf %359, %360 : vector<32x1xf32>
    %362 = arith.mulf %356, %356 : vector<32x1xf32>
    %363 = arith.subf %361, %362 : vector<32x1xf32>
    %cst_179 = arith.constant 0.000000e+00 : f32
    %364 = vector.broadcast %cst_179 : f32 to vector<32x1xf32>
    %365 = arith.maximumf %363, %364 : vector<32x1xf32>
    %cst_180 = arith.constant 9.99999974E-6 : f32
    %366 = vector.broadcast %cst_180 : f32 to vector<32x1xf32>
    %367 = arith.addf %365, %366 : vector<32x1xf32>
    %368 = math.rsqrt %367 : vector<32x1xf32>
    %c1_181 = arith.constant 1 : index
    %c0_182 = arith.constant 0 : index
    %369 = vector.load %arg5[%c1_181, %c0_182] : memref<5x32xf32, #tpu.memory_space<vmem>>, vector<1x32xf32>
    %370 = vector.broadcast %368 : vector<32x1xf32> to vector<32x32xf32>
    %371 = vector.broadcast %369 : vector<1x32xf32> to vector<32x32xf32>
    %372 = arith.mulf %370, %371 : vector<32x32xf32>
    %373 = vector.broadcast %356 : vector<32x1xf32> to vector<32x32xf32>
    %374 = arith.subf %352, %373 : vector<32x32xf32>
    %375 = arith.mulf %374, %372 : vector<32x32xf32>
    %c1_183 = arith.constant 1 : index
    %c0_184 = arith.constant 0 : index
    %376 = vector.load %arg6[%c1_183, %c0_184] : memref<5x32xf32, #tpu.memory_space<vmem>>, vector<1x32xf32>
    %377 = vector.broadcast %376 : vector<1x32xf32> to vector<32x32xf32>
    %378 = arith.addf %375, %377 : vector<32x32xf32>
    %379 = arith.truncf %378 : vector<32x32xf32> to vector<32x32xbf16>
    %c1_185 = arith.constant 1 : index
    %c0_186 = arith.constant 0 : index
    %c0_187 = arith.constant 0 : index
    %c0_188 = arith.constant 0 : index
    %380 = vector.load %arg8[%c1_185, %c0_186, %c0_187, %c0_188] : memref<5x9x32x32xbf16, #tpu.memory_space<vmem>>, vector<1x1x32x32xbf16>
    %381 = vector.shape_cast %380 : vector<1x1x32x32xbf16> to vector<32x32xbf16>
    %cst_189 = arith.constant dense<0.000000e+00> : vector<32x32xf32>
    %382 = tpu.matmul %379, %381, %cst_189 {dimension_numbers = #tpu.dot_dimension_numbers<[1], [0], [0], [1], [0, 0, 1, 1], [], []>} : vector<32x32xbf16>, vector<32x32xbf16>, vector<32x32xf32> -> vector<32x32xf32>
    %c4_i32_190 = arith.constant 4 : i32
    %383 = tpu.dynamic_rotate %382 by %c4_i32_190 dim 0 : vector<32x32xf32>, i32 -> vector<32x32xf32>
    %c-4_i32_191 = arith.constant -4 : i32
    %384 = vector.broadcast %c-4_i32_191 : i32 to vector<32x1xi32>
    %385 = arith.addi %1, %384 : vector<32x1xi32>
    %c0_i32_192 = arith.constant 0 : i32
    %386 = vector.broadcast %c0_i32_192 : i32 to vector<32x1xi32>
    %387 = arith.cmpi sge, %385, %386 : vector<32x1xi32>
    %c-4_i32_193 = arith.constant -4 : i32
    %388 = vector.broadcast %c-4_i32_193 : i32 to vector<32x1xi32>
    %389 = arith.addi %1, %388 : vector<32x1xi32>
    %c32_i32_194 = arith.constant 32 : i32
    %390 = vector.broadcast %c32_i32_194 : i32 to vector<32x1xi32>
    %391 = arith.cmpi slt, %389, %390 : vector<32x1xi32>
    %392 = arith.andi %387, %391 : vector<32x1xi1>
    %cst_195 = arith.constant 0.000000e+00 : f32
    %393 = vector.broadcast %cst_195 : f32 to vector<32x32xf32>
    %394 = vector.shape_cast %392 : vector<32x1xi1> to vector<32x1xi1>
    %395 = vector.broadcast %394 : vector<32x1xi1> to vector<32x32xi1>
    %396 = arith.select %395, %383, %393 : vector<32x32xi1>, vector<32x32xf32>
    %c1_196 = arith.constant 1 : index
    %c1_197 = arith.constant 1 : index
    %c0_198 = arith.constant 0 : index
    %c0_199 = arith.constant 0 : index
    %397 = vector.load %arg8[%c1_196, %c1_197, %c0_198, %c0_199] : memref<5x9x32x32xbf16, #tpu.memory_space<vmem>>, vector<1x1x32x32xbf16>
    %398 = vector.shape_cast %397 : vector<1x1x32x32xbf16> to vector<32x32xbf16>
    %cst_200 = arith.constant dense<0.000000e+00> : vector<32x32xf32>
    %399 = tpu.matmul %379, %398, %cst_200 {dimension_numbers = #tpu.dot_dimension_numbers<[1], [0], [0], [1], [0, 0, 1, 1], [], []>} : vector<32x32xbf16>, vector<32x32xbf16>, vector<32x32xf32> -> vector<32x32xf32>
    %c3_i32_201 = arith.constant 3 : i32
    %400 = tpu.dynamic_rotate %399 by %c3_i32_201 dim 0 : vector<32x32xf32>, i32 -> vector<32x32xf32>
    %c-3_i32_202 = arith.constant -3 : i32
    %401 = vector.broadcast %c-3_i32_202 : i32 to vector<32x1xi32>
    %402 = arith.addi %1, %401 : vector<32x1xi32>
    %c0_i32_203 = arith.constant 0 : i32
    %403 = vector.broadcast %c0_i32_203 : i32 to vector<32x1xi32>
    %404 = arith.cmpi sge, %402, %403 : vector<32x1xi32>
    %c-3_i32_204 = arith.constant -3 : i32
    %405 = vector.broadcast %c-3_i32_204 : i32 to vector<32x1xi32>
    %406 = arith.addi %1, %405 : vector<32x1xi32>
    %c32_i32_205 = arith.constant 32 : i32
    %407 = vector.broadcast %c32_i32_205 : i32 to vector<32x1xi32>
    %408 = arith.cmpi slt, %406, %407 : vector<32x1xi32>
    %409 = arith.andi %404, %408 : vector<32x1xi1>
    %cst_206 = arith.constant 0.000000e+00 : f32
    %410 = vector.broadcast %cst_206 : f32 to vector<32x32xf32>
    %411 = vector.shape_cast %409 : vector<32x1xi1> to vector<32x1xi1>
    %412 = vector.broadcast %411 : vector<32x1xi1> to vector<32x32xi1>
    %413 = arith.select %412, %400, %410 : vector<32x32xi1>, vector<32x32xf32>
    %414 = arith.addf %396, %413 : vector<32x32xf32>
    %c1_207 = arith.constant 1 : index
    %c2_208 = arith.constant 2 : index
    %c0_209 = arith.constant 0 : index
    %c0_210 = arith.constant 0 : index
    %415 = vector.load %arg8[%c1_207, %c2_208, %c0_209, %c0_210] : memref<5x9x32x32xbf16, #tpu.memory_space<vmem>>, vector<1x1x32x32xbf16>
    %416 = vector.shape_cast %415 : vector<1x1x32x32xbf16> to vector<32x32xbf16>
    %cst_211 = arith.constant dense<0.000000e+00> : vector<32x32xf32>
    %417 = tpu.matmul %379, %416, %cst_211 {dimension_numbers = #tpu.dot_dimension_numbers<[1], [0], [0], [1], [0, 0, 1, 1], [], []>} : vector<32x32xbf16>, vector<32x32xbf16>, vector<32x32xf32> -> vector<32x32xf32>
    %c2_i32_212 = arith.constant 2 : i32
    %418 = tpu.dynamic_rotate %417 by %c2_i32_212 dim 0 : vector<32x32xf32>, i32 -> vector<32x32xf32>
    %c-2_i32_213 = arith.constant -2 : i32
    %419 = vector.broadcast %c-2_i32_213 : i32 to vector<32x1xi32>
    %420 = arith.addi %1, %419 : vector<32x1xi32>
    %c0_i32_214 = arith.constant 0 : i32
    %421 = vector.broadcast %c0_i32_214 : i32 to vector<32x1xi32>
    %422 = arith.cmpi sge, %420, %421 : vector<32x1xi32>
    %c-2_i32_215 = arith.constant -2 : i32
    %423 = vector.broadcast %c-2_i32_215 : i32 to vector<32x1xi32>
    %424 = arith.addi %1, %423 : vector<32x1xi32>
    %c32_i32_216 = arith.constant 32 : i32
    %425 = vector.broadcast %c32_i32_216 : i32 to vector<32x1xi32>
    %426 = arith.cmpi slt, %424, %425 : vector<32x1xi32>
    %427 = arith.andi %422, %426 : vector<32x1xi1>
    %cst_217 = arith.constant 0.000000e+00 : f32
    %428 = vector.broadcast %cst_217 : f32 to vector<32x32xf32>
    %429 = vector.shape_cast %427 : vector<32x1xi1> to vector<32x1xi1>
    %430 = vector.broadcast %429 : vector<32x1xi1> to vector<32x32xi1>
    %431 = arith.select %430, %418, %428 : vector<32x32xi1>, vector<32x32xf32>
    %432 = arith.addf %414, %431 : vector<32x32xf32>
    %c1_218 = arith.constant 1 : index
    %c3_219 = arith.constant 3 : index
    %c0_220 = arith.constant 0 : index
    %c0_221 = arith.constant 0 : index
    %433 = vector.load %arg8[%c1_218, %c3_219, %c0_220, %c0_221] : memref<5x9x32x32xbf16, #tpu.memory_space<vmem>>, vector<1x1x32x32xbf16>
    %434 = vector.shape_cast %433 : vector<1x1x32x32xbf16> to vector<32x32xbf16>
    %cst_222 = arith.constant dense<0.000000e+00> : vector<32x32xf32>
    %435 = tpu.matmul %379, %434, %cst_222 {dimension_numbers = #tpu.dot_dimension_numbers<[1], [0], [0], [1], [0, 0, 1, 1], [], []>} : vector<32x32xbf16>, vector<32x32xbf16>, vector<32x32xf32> -> vector<32x32xf32>
    %c1_i32_223 = arith.constant 1 : i32
    %436 = tpu.dynamic_rotate %435 by %c1_i32_223 dim 0 : vector<32x32xf32>, i32 -> vector<32x32xf32>
    %c-1_i32_224 = arith.constant -1 : i32
    %437 = vector.broadcast %c-1_i32_224 : i32 to vector<32x1xi32>
    %438 = arith.addi %1, %437 : vector<32x1xi32>
    %c0_i32_225 = arith.constant 0 : i32
    %439 = vector.broadcast %c0_i32_225 : i32 to vector<32x1xi32>
    %440 = arith.cmpi sge, %438, %439 : vector<32x1xi32>
    %c-1_i32_226 = arith.constant -1 : i32
    %441 = vector.broadcast %c-1_i32_226 : i32 to vector<32x1xi32>
    %442 = arith.addi %1, %441 : vector<32x1xi32>
    %c32_i32_227 = arith.constant 32 : i32
    %443 = vector.broadcast %c32_i32_227 : i32 to vector<32x1xi32>
    %444 = arith.cmpi slt, %442, %443 : vector<32x1xi32>
    %445 = arith.andi %440, %444 : vector<32x1xi1>
    %cst_228 = arith.constant 0.000000e+00 : f32
    %446 = vector.broadcast %cst_228 : f32 to vector<32x32xf32>
    %447 = vector.shape_cast %445 : vector<32x1xi1> to vector<32x1xi1>
    %448 = vector.broadcast %447 : vector<32x1xi1> to vector<32x32xi1>
    %449 = arith.select %448, %436, %446 : vector<32x32xi1>, vector<32x32xf32>
    %450 = arith.addf %432, %449 : vector<32x32xf32>
    %c1_229 = arith.constant 1 : index
    %c4_230 = arith.constant 4 : index
    %c0_231 = arith.constant 0 : index
    %c0_232 = arith.constant 0 : index
    %451 = vector.load %arg8[%c1_229, %c4_230, %c0_231, %c0_232] : memref<5x9x32x32xbf16, #tpu.memory_space<vmem>>, vector<1x1x32x32xbf16>
    %452 = vector.shape_cast %451 : vector<1x1x32x32xbf16> to vector<32x32xbf16>
    %cst_233 = arith.constant dense<0.000000e+00> : vector<32x32xf32>
    %453 = tpu.matmul %379, %452, %cst_233 {dimension_numbers = #tpu.dot_dimension_numbers<[1], [0], [0], [1], [0, 0, 1, 1], [], []>} : vector<32x32xbf16>, vector<32x32xbf16>, vector<32x32xf32> -> vector<32x32xf32>
    %454 = arith.addf %450, %453 : vector<32x32xf32>
    %c1_234 = arith.constant 1 : index
    %c5_235 = arith.constant 5 : index
    %c0_236 = arith.constant 0 : index
    %c0_237 = arith.constant 0 : index
    %455 = vector.load %arg8[%c1_234, %c5_235, %c0_236, %c0_237] : memref<5x9x32x32xbf16, #tpu.memory_space<vmem>>, vector<1x1x32x32xbf16>
    %456 = vector.shape_cast %455 : vector<1x1x32x32xbf16> to vector<32x32xbf16>
    %cst_238 = arith.constant dense<0.000000e+00> : vector<32x32xf32>
    %457 = tpu.matmul %379, %456, %cst_238 {dimension_numbers = #tpu.dot_dimension_numbers<[1], [0], [0], [1], [0, 0, 1, 1], [], []>} : vector<32x32xbf16>, vector<32x32xbf16>, vector<32x32xf32> -> vector<32x32xf32>
    %c31_i32_239 = arith.constant 31 : i32
    %458 = tpu.dynamic_rotate %457 by %c31_i32_239 dim 0 : vector<32x32xf32>, i32 -> vector<32x32xf32>
    %c1_i32_240 = arith.constant 1 : i32
    %459 = vector.broadcast %c1_i32_240 : i32 to vector<32x1xi32>
    %460 = arith.addi %1, %459 : vector<32x1xi32>
    %c0_i32_241 = arith.constant 0 : i32
    %461 = vector.broadcast %c0_i32_241 : i32 to vector<32x1xi32>
    %462 = arith.cmpi sge, %460, %461 : vector<32x1xi32>
    %c1_i32_242 = arith.constant 1 : i32
    %463 = vector.broadcast %c1_i32_242 : i32 to vector<32x1xi32>
    %464 = arith.addi %1, %463 : vector<32x1xi32>
    %c32_i32_243 = arith.constant 32 : i32
    %465 = vector.broadcast %c32_i32_243 : i32 to vector<32x1xi32>
    %466 = arith.cmpi slt, %464, %465 : vector<32x1xi32>
    %467 = arith.andi %462, %466 : vector<32x1xi1>
    %cst_244 = arith.constant 0.000000e+00 : f32
    %468 = vector.broadcast %cst_244 : f32 to vector<32x32xf32>
    %469 = vector.shape_cast %467 : vector<32x1xi1> to vector<32x1xi1>
    %470 = vector.broadcast %469 : vector<32x1xi1> to vector<32x32xi1>
    %471 = arith.select %470, %458, %468 : vector<32x32xi1>, vector<32x32xf32>
    %472 = arith.addf %454, %471 : vector<32x32xf32>
    %c1_245 = arith.constant 1 : index
    %c6_246 = arith.constant 6 : index
    %c0_247 = arith.constant 0 : index
    %c0_248 = arith.constant 0 : index
    %473 = vector.load %arg8[%c1_245, %c6_246, %c0_247, %c0_248] : memref<5x9x32x32xbf16, #tpu.memory_space<vmem>>, vector<1x1x32x32xbf16>
    %474 = vector.shape_cast %473 : vector<1x1x32x32xbf16> to vector<32x32xbf16>
    %cst_249 = arith.constant dense<0.000000e+00> : vector<32x32xf32>
    %475 = tpu.matmul %379, %474, %cst_249 {dimension_numbers = #tpu.dot_dimension_numbers<[1], [0], [0], [1], [0, 0, 1, 1], [], []>} : vector<32x32xbf16>, vector<32x32xbf16>, vector<32x32xf32> -> vector<32x32xf32>
    %c30_i32_250 = arith.constant 30 : i32
    %476 = tpu.dynamic_rotate %475 by %c30_i32_250 dim 0 : vector<32x32xf32>, i32 -> vector<32x32xf32>
    %c2_i32_251 = arith.constant 2 : i32
    %477 = vector.broadcast %c2_i32_251 : i32 to vector<32x1xi32>
    %478 = arith.addi %1, %477 : vector<32x1xi32>
    %c0_i32_252 = arith.constant 0 : i32
    %479 = vector.broadcast %c0_i32_252 : i32 to vector<32x1xi32>
    %480 = arith.cmpi sge, %478, %479 : vector<32x1xi32>
    %c2_i32_253 = arith.constant 2 : i32
    %481 = vector.broadcast %c2_i32_253 : i32 to vector<32x1xi32>
    %482 = arith.addi %1, %481 : vector<32x1xi32>
    %c32_i32_254 = arith.constant 32 : i32
    %483 = vector.broadcast %c32_i32_254 : i32 to vector<32x1xi32>
    %484 = arith.cmpi slt, %482, %483 : vector<32x1xi32>
    %485 = arith.andi %480, %484 : vector<32x1xi1>
    %cst_255 = arith.constant 0.000000e+00 : f32
    %486 = vector.broadcast %cst_255 : f32 to vector<32x32xf32>
    %487 = vector.shape_cast %485 : vector<32x1xi1> to vector<32x1xi1>
    %488 = vector.broadcast %487 : vector<32x1xi1> to vector<32x32xi1>
    %489 = arith.select %488, %476, %486 : vector<32x32xi1>, vector<32x32xf32>
    %490 = arith.addf %472, %489 : vector<32x32xf32>
    %c1_256 = arith.constant 1 : index
    %c7_257 = arith.constant 7 : index
    %c0_258 = arith.constant 0 : index
    %c0_259 = arith.constant 0 : index
    %491 = vector.load %arg8[%c1_256, %c7_257, %c0_258, %c0_259] : memref<5x9x32x32xbf16, #tpu.memory_space<vmem>>, vector<1x1x32x32xbf16>
    %492 = vector.shape_cast %491 : vector<1x1x32x32xbf16> to vector<32x32xbf16>
    %cst_260 = arith.constant dense<0.000000e+00> : vector<32x32xf32>
    %493 = tpu.matmul %379, %492, %cst_260 {dimension_numbers = #tpu.dot_dimension_numbers<[1], [0], [0], [1], [0, 0, 1, 1], [], []>} : vector<32x32xbf16>, vector<32x32xbf16>, vector<32x32xf32> -> vector<32x32xf32>
    %c29_i32_261 = arith.constant 29 : i32
    %494 = tpu.dynamic_rotate %493 by %c29_i32_261 dim 0 : vector<32x32xf32>, i32 -> vector<32x32xf32>
    %c3_i32_262 = arith.constant 3 : i32
    %495 = vector.broadcast %c3_i32_262 : i32 to vector<32x1xi32>
    %496 = arith.addi %1, %495 : vector<32x1xi32>
    %c0_i32_263 = arith.constant 0 : i32
    %497 = vector.broadcast %c0_i32_263 : i32 to vector<32x1xi32>
    %498 = arith.cmpi sge, %496, %497 : vector<32x1xi32>
    %c3_i32_264 = arith.constant 3 : i32
    %499 = vector.broadcast %c3_i32_264 : i32 to vector<32x1xi32>
    %500 = arith.addi %1, %499 : vector<32x1xi32>
    %c32_i32_265 = arith.constant 32 : i32
    %501 = vector.broadcast %c32_i32_265 : i32 to vector<32x1xi32>
    %502 = arith.cmpi slt, %500, %501 : vector<32x1xi32>
    %503 = arith.andi %498, %502 : vector<32x1xi1>
    %cst_266 = arith.constant 0.000000e+00 : f32
    %504 = vector.broadcast %cst_266 : f32 to vector<32x32xf32>
    %505 = vector.shape_cast %503 : vector<32x1xi1> to vector<32x1xi1>
    %506 = vector.broadcast %505 : vector<32x1xi1> to vector<32x32xi1>
    %507 = arith.select %506, %494, %504 : vector<32x32xi1>, vector<32x32xf32>
    %508 = arith.addf %490, %507 : vector<32x32xf32>
    %c1_267 = arith.constant 1 : index
    %c8_268 = arith.constant 8 : index
    %c0_269 = arith.constant 0 : index
    %c0_270 = arith.constant 0 : index
    %509 = vector.load %arg8[%c1_267, %c8_268, %c0_269, %c0_270] : memref<5x9x32x32xbf16, #tpu.memory_space<vmem>>, vector<1x1x32x32xbf16>
    %510 = vector.shape_cast %509 : vector<1x1x32x32xbf16> to vector<32x32xbf16>
    %cst_271 = arith.constant dense<0.000000e+00> : vector<32x32xf32>
    %511 = tpu.matmul %379, %510, %cst_271 {dimension_numbers = #tpu.dot_dimension_numbers<[1], [0], [0], [1], [0, 0, 1, 1], [], []>} : vector<32x32xbf16>, vector<32x32xbf16>, vector<32x32xf32> -> vector<32x32xf32>
    %c28_i32_272 = arith.constant 28 : i32
    %512 = tpu.dynamic_rotate %511 by %c28_i32_272 dim 0 : vector<32x32xf32>, i32 -> vector<32x32xf32>
    %c4_i32_273 = arith.constant 4 : i32
    %513 = vector.broadcast %c4_i32_273 : i32 to vector<32x1xi32>
    %514 = arith.addi %1, %513 : vector<32x1xi32>
    %c0_i32_274 = arith.constant 0 : i32
    %515 = vector.broadcast %c0_i32_274 : i32 to vector<32x1xi32>
    %516 = arith.cmpi sge, %514, %515 : vector<32x1xi32>
    %c4_i32_275 = arith.constant 4 : i32
    %517 = vector.broadcast %c4_i32_275 : i32 to vector<32x1xi32>
    %518 = arith.addi %1, %517 : vector<32x1xi32>
    %c32_i32_276 = arith.constant 32 : i32
    %519 = vector.broadcast %c32_i32_276 : i32 to vector<32x1xi32>
    %520 = arith.cmpi slt, %518, %519 : vector<32x1xi32>
    %521 = arith.andi %516, %520 : vector<32x1xi1>
    %cst_277 = arith.constant 0.000000e+00 : f32
    %522 = vector.broadcast %cst_277 : f32 to vector<32x32xf32>
    %523 = vector.shape_cast %521 : vector<32x1xi1> to vector<32x1xi1>
    %524 = vector.broadcast %523 : vector<32x1xi1> to vector<32x32xi1>
    %525 = arith.select %524, %512, %522 : vector<32x32xi1>, vector<32x32xf32>
    %526 = arith.addf %508, %525 : vector<32x32xf32>
    %c1_278 = arith.constant 1 : index
    %c0_279 = arith.constant 0 : index
    %527 = vector.load %arg7[%c1_278, %c0_279] : memref<5x32xf32, #tpu.memory_space<vmem>>, vector<1x32xf32>
    %528 = vector.broadcast %527 : vector<1x32xf32> to vector<32x32xf32>
    %529 = arith.addf %526, %528 : vector<32x32xf32>
    %cst_280 = arith.constant 0.000000e+00 : f32
    %530 = vector.broadcast %cst_280 : f32 to vector<32x32xf32>
    %531 = arith.maximumf %529, %530 : vector<32x32xf32>
    %532 = arith.addf %531, %347 : vector<32x32xf32>
    %533 = vector.extract_strided_slice %162 {offsets = [0, 2, 0], sizes = [1, 1, 32], strides = [1, 1, 1]} : vector<1x5x32xf32> to vector<1x1x32xf32>
    %534 = vector.shape_cast %533 : vector<1x1x32xf32> to vector<1x1x32xf32>
    %535 = vector.broadcast %534 : vector<1x1x32xf32> to vector<1x32x32xf32>
    %536 = vector.shape_cast %535 : vector<1x32x32xf32> to vector<32x32xf32>
    %537 = arith.addf %532, %536 : vector<32x32xf32>
    %cst_281 = arith.constant dense<0.000000e+00> : vector<32xf32>
    %538 = vector.multi_reduction <add>, %537, %cst_281 [1] : vector<32x32xf32> to vector<32xf32>
    %539 = vector.shape_cast %538 : vector<32xf32> to vector<32x1xf32>
    %cst_282 = arith.constant 3.200000e+01 : f32
    %540 = vector.broadcast %cst_282 : f32 to vector<32x1xf32>
    %541 = arith.divf %539, %540 : vector<32x1xf32>
    %542 = arith.mulf %537, %537 : vector<32x32xf32>
    %cst_283 = arith.constant dense<0.000000e+00> : vector<32xf32>
    %543 = vector.multi_reduction <add>, %542, %cst_283 [1] : vector<32x32xf32> to vector<32xf32>
    %544 = vector.shape_cast %543 : vector<32xf32> to vector<32x1xf32>
    %cst_284 = arith.constant 3.200000e+01 : f32
    %545 = vector.broadcast %cst_284 : f32 to vector<32x1xf32>
    %546 = arith.divf %544, %545 : vector<32x1xf32>
    %547 = arith.mulf %541, %541 : vector<32x1xf32>
    %548 = arith.subf %546, %547 : vector<32x1xf32>
    %cst_285 = arith.constant 0.000000e+00 : f32
    %549 = vector.broadcast %cst_285 : f32 to vector<32x1xf32>
    %550 = arith.maximumf %548, %549 : vector<32x1xf32>
    %cst_286 = arith.constant 9.99999974E-6 : f32
    %551 = vector.broadcast %cst_286 : f32 to vector<32x1xf32>
    %552 = arith.addf %550, %551 : vector<32x1xf32>
    %553 = math.rsqrt %552 : vector<32x1xf32>
    %c2_287 = arith.constant 2 : index
    %c0_288 = arith.constant 0 : index
    %554 = vector.load %arg5[%c2_287, %c0_288] : memref<5x32xf32, #tpu.memory_space<vmem>>, vector<1x32xf32>
    %555 = vector.broadcast %553 : vector<32x1xf32> to vector<32x32xf32>
    %556 = vector.broadcast %554 : vector<1x32xf32> to vector<32x32xf32>
    %557 = arith.mulf %555, %556 : vector<32x32xf32>
    %558 = vector.broadcast %541 : vector<32x1xf32> to vector<32x32xf32>
    %559 = arith.subf %537, %558 : vector<32x32xf32>
    %560 = arith.mulf %559, %557 : vector<32x32xf32>
    %c2_289 = arith.constant 2 : index
    %c0_290 = arith.constant 0 : index
    %561 = vector.load %arg6[%c2_289, %c0_290] : memref<5x32xf32, #tpu.memory_space<vmem>>, vector<1x32xf32>
    %562 = vector.broadcast %561 : vector<1x32xf32> to vector<32x32xf32>
    %563 = arith.addf %560, %562 : vector<32x32xf32>
    %564 = arith.truncf %563 : vector<32x32xf32> to vector<32x32xbf16>
    %c2_291 = arith.constant 2 : index
    %c0_292 = arith.constant 0 : index
    %c0_293 = arith.constant 0 : index
    %c0_294 = arith.constant 0 : index
    %565 = vector.load %arg8[%c2_291, %c0_292, %c0_293, %c0_294] : memref<5x9x32x32xbf16, #tpu.memory_space<vmem>>, vector<1x1x32x32xbf16>
    %566 = vector.shape_cast %565 : vector<1x1x32x32xbf16> to vector<32x32xbf16>
    %cst_295 = arith.constant dense<0.000000e+00> : vector<32x32xf32>
    %567 = tpu.matmul %564, %566, %cst_295 {dimension_numbers = #tpu.dot_dimension_numbers<[1], [0], [0], [1], [0, 0, 1, 1], [], []>} : vector<32x32xbf16>, vector<32x32xbf16>, vector<32x32xf32> -> vector<32x32xf32>
    %c16_i32 = arith.constant 16 : i32
    %568 = tpu.dynamic_rotate %567 by %c16_i32 dim 0 : vector<32x32xf32>, i32 -> vector<32x32xf32>
    %c-16_i32 = arith.constant -16 : i32
    %569 = vector.broadcast %c-16_i32 : i32 to vector<32x1xi32>
    %570 = arith.addi %1, %569 : vector<32x1xi32>
    %c0_i32_296 = arith.constant 0 : i32
    %571 = vector.broadcast %c0_i32_296 : i32 to vector<32x1xi32>
    %572 = arith.cmpi sge, %570, %571 : vector<32x1xi32>
    %c-16_i32_297 = arith.constant -16 : i32
    %573 = vector.broadcast %c-16_i32_297 : i32 to vector<32x1xi32>
    %574 = arith.addi %1, %573 : vector<32x1xi32>
    %c32_i32_298 = arith.constant 32 : i32
    %575 = vector.broadcast %c32_i32_298 : i32 to vector<32x1xi32>
    %576 = arith.cmpi slt, %574, %575 : vector<32x1xi32>
    %577 = arith.andi %572, %576 : vector<32x1xi1>
    %cst_299 = arith.constant 0.000000e+00 : f32
    %578 = vector.broadcast %cst_299 : f32 to vector<32x32xf32>
    %579 = vector.shape_cast %577 : vector<32x1xi1> to vector<32x1xi1>
    %580 = vector.broadcast %579 : vector<32x1xi1> to vector<32x32xi1>
    %581 = arith.select %580, %568, %578 : vector<32x32xi1>, vector<32x32xf32>
    %c2_300 = arith.constant 2 : index
    %c1_301 = arith.constant 1 : index
    %c0_302 = arith.constant 0 : index
    %c0_303 = arith.constant 0 : index
    %582 = vector.load %arg8[%c2_300, %c1_301, %c0_302, %c0_303] : memref<5x9x32x32xbf16, #tpu.memory_space<vmem>>, vector<1x1x32x32xbf16>
    %583 = vector.shape_cast %582 : vector<1x1x32x32xbf16> to vector<32x32xbf16>
    %cst_304 = arith.constant dense<0.000000e+00> : vector<32x32xf32>
    %584 = tpu.matmul %564, %583, %cst_304 {dimension_numbers = #tpu.dot_dimension_numbers<[1], [0], [0], [1], [0, 0, 1, 1], [], []>} : vector<32x32xbf16>, vector<32x32xbf16>, vector<32x32xf32> -> vector<32x32xf32>
    %c12_i32 = arith.constant 12 : i32
    %585 = tpu.dynamic_rotate %584 by %c12_i32 dim 0 : vector<32x32xf32>, i32 -> vector<32x32xf32>
    %c-12_i32 = arith.constant -12 : i32
    %586 = vector.broadcast %c-12_i32 : i32 to vector<32x1xi32>
    %587 = arith.addi %1, %586 : vector<32x1xi32>
    %c0_i32_305 = arith.constant 0 : i32
    %588 = vector.broadcast %c0_i32_305 : i32 to vector<32x1xi32>
    %589 = arith.cmpi sge, %587, %588 : vector<32x1xi32>
    %c-12_i32_306 = arith.constant -12 : i32
    %590 = vector.broadcast %c-12_i32_306 : i32 to vector<32x1xi32>
    %591 = arith.addi %1, %590 : vector<32x1xi32>
    %c32_i32_307 = arith.constant 32 : i32
    %592 = vector.broadcast %c32_i32_307 : i32 to vector<32x1xi32>
    %593 = arith.cmpi slt, %591, %592 : vector<32x1xi32>
    %594 = arith.andi %589, %593 : vector<32x1xi1>
    %cst_308 = arith.constant 0.000000e+00 : f32
    %595 = vector.broadcast %cst_308 : f32 to vector<32x32xf32>
    %596 = vector.shape_cast %594 : vector<32x1xi1> to vector<32x1xi1>
    %597 = vector.broadcast %596 : vector<32x1xi1> to vector<32x32xi1>
    %598 = arith.select %597, %585, %595 : vector<32x32xi1>, vector<32x32xf32>
    %599 = arith.addf %581, %598 : vector<32x32xf32>
    %c2_309 = arith.constant 2 : index
    %c2_310 = arith.constant 2 : index
    %c0_311 = arith.constant 0 : index
    %c0_312 = arith.constant 0 : index
    %600 = vector.load %arg8[%c2_309, %c2_310, %c0_311, %c0_312] : memref<5x9x32x32xbf16, #tpu.memory_space<vmem>>, vector<1x1x32x32xbf16>
    %601 = vector.shape_cast %600 : vector<1x1x32x32xbf16> to vector<32x32xbf16>
    %cst_313 = arith.constant dense<0.000000e+00> : vector<32x32xf32>
    %602 = tpu.matmul %564, %601, %cst_313 {dimension_numbers = #tpu.dot_dimension_numbers<[1], [0], [0], [1], [0, 0, 1, 1], [], []>} : vector<32x32xbf16>, vector<32x32xbf16>, vector<32x32xf32> -> vector<32x32xf32>
    %c8_i32 = arith.constant 8 : i32
    %603 = tpu.dynamic_rotate %602 by %c8_i32 dim 0 : vector<32x32xf32>, i32 -> vector<32x32xf32>
    %c-8_i32 = arith.constant -8 : i32
    %604 = vector.broadcast %c-8_i32 : i32 to vector<32x1xi32>
    %605 = arith.addi %1, %604 : vector<32x1xi32>
    %c0_i32_314 = arith.constant 0 : i32
    %606 = vector.broadcast %c0_i32_314 : i32 to vector<32x1xi32>
    %607 = arith.cmpi sge, %605, %606 : vector<32x1xi32>
    %c-8_i32_315 = arith.constant -8 : i32
    %608 = vector.broadcast %c-8_i32_315 : i32 to vector<32x1xi32>
    %609 = arith.addi %1, %608 : vector<32x1xi32>
    %c32_i32_316 = arith.constant 32 : i32
    %610 = vector.broadcast %c32_i32_316 : i32 to vector<32x1xi32>
    %611 = arith.cmpi slt, %609, %610 : vector<32x1xi32>
    %612 = arith.andi %607, %611 : vector<32x1xi1>
    %cst_317 = arith.constant 0.000000e+00 : f32
    %613 = vector.broadcast %cst_317 : f32 to vector<32x32xf32>
    %614 = vector.shape_cast %612 : vector<32x1xi1> to vector<32x1xi1>
    %615 = vector.broadcast %614 : vector<32x1xi1> to vector<32x32xi1>
    %616 = arith.select %615, %603, %613 : vector<32x32xi1>, vector<32x32xf32>
    %617 = arith.addf %599, %616 : vector<32x32xf32>
    %c2_318 = arith.constant 2 : index
    %c3_319 = arith.constant 3 : index
    %c0_320 = arith.constant 0 : index
    %c0_321 = arith.constant 0 : index
    %618 = vector.load %arg8[%c2_318, %c3_319, %c0_320, %c0_321] : memref<5x9x32x32xbf16, #tpu.memory_space<vmem>>, vector<1x1x32x32xbf16>
    %619 = vector.shape_cast %618 : vector<1x1x32x32xbf16> to vector<32x32xbf16>
    %cst_322 = arith.constant dense<0.000000e+00> : vector<32x32xf32>
    %620 = tpu.matmul %564, %619, %cst_322 {dimension_numbers = #tpu.dot_dimension_numbers<[1], [0], [0], [1], [0, 0, 1, 1], [], []>} : vector<32x32xbf16>, vector<32x32xbf16>, vector<32x32xf32> -> vector<32x32xf32>
    %c4_i32_323 = arith.constant 4 : i32
    %621 = tpu.dynamic_rotate %620 by %c4_i32_323 dim 0 : vector<32x32xf32>, i32 -> vector<32x32xf32>
    %c-4_i32_324 = arith.constant -4 : i32
    %622 = vector.broadcast %c-4_i32_324 : i32 to vector<32x1xi32>
    %623 = arith.addi %1, %622 : vector<32x1xi32>
    %c0_i32_325 = arith.constant 0 : i32
    %624 = vector.broadcast %c0_i32_325 : i32 to vector<32x1xi32>
    %625 = arith.cmpi sge, %623, %624 : vector<32x1xi32>
    %c-4_i32_326 = arith.constant -4 : i32
    %626 = vector.broadcast %c-4_i32_326 : i32 to vector<32x1xi32>
    %627 = arith.addi %1, %626 : vector<32x1xi32>
    %c32_i32_327 = arith.constant 32 : i32
    %628 = vector.broadcast %c32_i32_327 : i32 to vector<32x1xi32>
    %629 = arith.cmpi slt, %627, %628 : vector<32x1xi32>
    %630 = arith.andi %625, %629 : vector<32x1xi1>
    %cst_328 = arith.constant 0.000000e+00 : f32
    %631 = vector.broadcast %cst_328 : f32 to vector<32x32xf32>
    %632 = vector.shape_cast %630 : vector<32x1xi1> to vector<32x1xi1>
    %633 = vector.broadcast %632 : vector<32x1xi1> to vector<32x32xi1>
    %634 = arith.select %633, %621, %631 : vector<32x32xi1>, vector<32x32xf32>
    %635 = arith.addf %617, %634 : vector<32x32xf32>
    %c2_329 = arith.constant 2 : index
    %c4_330 = arith.constant 4 : index
    %c0_331 = arith.constant 0 : index
    %c0_332 = arith.constant 0 : index
    %636 = vector.load %arg8[%c2_329, %c4_330, %c0_331, %c0_332] : memref<5x9x32x32xbf16, #tpu.memory_space<vmem>>, vector<1x1x32x32xbf16>
    %637 = vector.shape_cast %636 : vector<1x1x32x32xbf16> to vector<32x32xbf16>
    %cst_333 = arith.constant dense<0.000000e+00> : vector<32x32xf32>
    %638 = tpu.matmul %564, %637, %cst_333 {dimension_numbers = #tpu.dot_dimension_numbers<[1], [0], [0], [1], [0, 0, 1, 1], [], []>} : vector<32x32xbf16>, vector<32x32xbf16>, vector<32x32xf32> -> vector<32x32xf32>
    %639 = arith.addf %635, %638 : vector<32x32xf32>
    %c2_334 = arith.constant 2 : index
    %c5_335 = arith.constant 5 : index
    %c0_336 = arith.constant 0 : index
    %c0_337 = arith.constant 0 : index
    %640 = vector.load %arg8[%c2_334, %c5_335, %c0_336, %c0_337] : memref<5x9x32x32xbf16, #tpu.memory_space<vmem>>, vector<1x1x32x32xbf16>
    %641 = vector.shape_cast %640 : vector<1x1x32x32xbf16> to vector<32x32xbf16>
    %cst_338 = arith.constant dense<0.000000e+00> : vector<32x32xf32>
    %642 = tpu.matmul %564, %641, %cst_338 {dimension_numbers = #tpu.dot_dimension_numbers<[1], [0], [0], [1], [0, 0, 1, 1], [], []>} : vector<32x32xbf16>, vector<32x32xbf16>, vector<32x32xf32> -> vector<32x32xf32>
    %c28_i32_339 = arith.constant 28 : i32
    %643 = tpu.dynamic_rotate %642 by %c28_i32_339 dim 0 : vector<32x32xf32>, i32 -> vector<32x32xf32>
    %c4_i32_340 = arith.constant 4 : i32
    %644 = vector.broadcast %c4_i32_340 : i32 to vector<32x1xi32>
    %645 = arith.addi %1, %644 : vector<32x1xi32>
    %c0_i32_341 = arith.constant 0 : i32
    %646 = vector.broadcast %c0_i32_341 : i32 to vector<32x1xi32>
    %647 = arith.cmpi sge, %645, %646 : vector<32x1xi32>
    %c4_i32_342 = arith.constant 4 : i32
    %648 = vector.broadcast %c4_i32_342 : i32 to vector<32x1xi32>
    %649 = arith.addi %1, %648 : vector<32x1xi32>
    %c32_i32_343 = arith.constant 32 : i32
    %650 = vector.broadcast %c32_i32_343 : i32 to vector<32x1xi32>
    %651 = arith.cmpi slt, %649, %650 : vector<32x1xi32>
    %652 = arith.andi %647, %651 : vector<32x1xi1>
    %cst_344 = arith.constant 0.000000e+00 : f32
    %653 = vector.broadcast %cst_344 : f32 to vector<32x32xf32>
    %654 = vector.shape_cast %652 : vector<32x1xi1> to vector<32x1xi1>
    %655 = vector.broadcast %654 : vector<32x1xi1> to vector<32x32xi1>
    %656 = arith.select %655, %643, %653 : vector<32x32xi1>, vector<32x32xf32>
    %657 = arith.addf %639, %656 : vector<32x32xf32>
    %c2_345 = arith.constant 2 : index
    %c6_346 = arith.constant 6 : index
    %c0_347 = arith.constant 0 : index
    %c0_348 = arith.constant 0 : index
    %658 = vector.load %arg8[%c2_345, %c6_346, %c0_347, %c0_348] : memref<5x9x32x32xbf16, #tpu.memory_space<vmem>>, vector<1x1x32x32xbf16>
    %659 = vector.shape_cast %658 : vector<1x1x32x32xbf16> to vector<32x32xbf16>
    %cst_349 = arith.constant dense<0.000000e+00> : vector<32x32xf32>
    %660 = tpu.matmul %564, %659, %cst_349 {dimension_numbers = #tpu.dot_dimension_numbers<[1], [0], [0], [1], [0, 0, 1, 1], [], []>} : vector<32x32xbf16>, vector<32x32xbf16>, vector<32x32xf32> -> vector<32x32xf32>
    %c24_i32 = arith.constant 24 : i32
    %661 = tpu.dynamic_rotate %660 by %c24_i32 dim 0 : vector<32x32xf32>, i32 -> vector<32x32xf32>
    %c8_i32_350 = arith.constant 8 : i32
    %662 = vector.broadcast %c8_i32_350 : i32 to vector<32x1xi32>
    %663 = arith.addi %1, %662 : vector<32x1xi32>
    %c0_i32_351 = arith.constant 0 : i32
    %664 = vector.broadcast %c0_i32_351 : i32 to vector<32x1xi32>
    %665 = arith.cmpi sge, %663, %664 : vector<32x1xi32>
    %c8_i32_352 = arith.constant 8 : i32
    %666 = vector.broadcast %c8_i32_352 : i32 to vector<32x1xi32>
    %667 = arith.addi %1, %666 : vector<32x1xi32>
    %c32_i32_353 = arith.constant 32 : i32
    %668 = vector.broadcast %c32_i32_353 : i32 to vector<32x1xi32>
    %669 = arith.cmpi slt, %667, %668 : vector<32x1xi32>
    %670 = arith.andi %665, %669 : vector<32x1xi1>
    %cst_354 = arith.constant 0.000000e+00 : f32
    %671 = vector.broadcast %cst_354 : f32 to vector<32x32xf32>
    %672 = vector.shape_cast %670 : vector<32x1xi1> to vector<32x1xi1>
    %673 = vector.broadcast %672 : vector<32x1xi1> to vector<32x32xi1>
    %674 = arith.select %673, %661, %671 : vector<32x32xi1>, vector<32x32xf32>
    %675 = arith.addf %657, %674 : vector<32x32xf32>
    %c2_355 = arith.constant 2 : index
    %c7_356 = arith.constant 7 : index
    %c0_357 = arith.constant 0 : index
    %c0_358 = arith.constant 0 : index
    %676 = vector.load %arg8[%c2_355, %c7_356, %c0_357, %c0_358] : memref<5x9x32x32xbf16, #tpu.memory_space<vmem>>, vector<1x1x32x32xbf16>
    %677 = vector.shape_cast %676 : vector<1x1x32x32xbf16> to vector<32x32xbf16>
    %cst_359 = arith.constant dense<0.000000e+00> : vector<32x32xf32>
    %678 = tpu.matmul %564, %677, %cst_359 {dimension_numbers = #tpu.dot_dimension_numbers<[1], [0], [0], [1], [0, 0, 1, 1], [], []>} : vector<32x32xbf16>, vector<32x32xbf16>, vector<32x32xf32> -> vector<32x32xf32>
    %c20_i32 = arith.constant 20 : i32
    %679 = tpu.dynamic_rotate %678 by %c20_i32 dim 0 : vector<32x32xf32>, i32 -> vector<32x32xf32>
    %c12_i32_360 = arith.constant 12 : i32
    %680 = vector.broadcast %c12_i32_360 : i32 to vector<32x1xi32>
    %681 = arith.addi %1, %680 : vector<32x1xi32>
    %c0_i32_361 = arith.constant 0 : i32
    %682 = vector.broadcast %c0_i32_361 : i32 to vector<32x1xi32>
    %683 = arith.cmpi sge, %681, %682 : vector<32x1xi32>
    %c12_i32_362 = arith.constant 12 : i32
    %684 = vector.broadcast %c12_i32_362 : i32 to vector<32x1xi32>
    %685 = arith.addi %1, %684 : vector<32x1xi32>
    %c32_i32_363 = arith.constant 32 : i32
    %686 = vector.broadcast %c32_i32_363 : i32 to vector<32x1xi32>
    %687 = arith.cmpi slt, %685, %686 : vector<32x1xi32>
    %688 = arith.andi %683, %687 : vector<32x1xi1>
    %cst_364 = arith.constant 0.000000e+00 : f32
    %689 = vector.broadcast %cst_364 : f32 to vector<32x32xf32>
    %690 = vector.shape_cast %688 : vector<32x1xi1> to vector<32x1xi1>
    %691 = vector.broadcast %690 : vector<32x1xi1> to vector<32x32xi1>
    %692 = arith.select %691, %679, %689 : vector<32x32xi1>, vector<32x32xf32>
    %693 = arith.addf %675, %692 : vector<32x32xf32>
    %c2_365 = arith.constant 2 : index
    %c8_366 = arith.constant 8 : index
    %c0_367 = arith.constant 0 : index
    %c0_368 = arith.constant 0 : index
    %694 = vector.load %arg8[%c2_365, %c8_366, %c0_367, %c0_368] : memref<5x9x32x32xbf16, #tpu.memory_space<vmem>>, vector<1x1x32x32xbf16>
    %695 = vector.shape_cast %694 : vector<1x1x32x32xbf16> to vector<32x32xbf16>
    %cst_369 = arith.constant dense<0.000000e+00> : vector<32x32xf32>
    %696 = tpu.matmul %564, %695, %cst_369 {dimension_numbers = #tpu.dot_dimension_numbers<[1], [0], [0], [1], [0, 0, 1, 1], [], []>} : vector<32x32xbf16>, vector<32x32xbf16>, vector<32x32xf32> -> vector<32x32xf32>
    %c16_i32_370 = arith.constant 16 : i32
    %697 = tpu.dynamic_rotate %696 by %c16_i32_370 dim 0 : vector<32x32xf32>, i32 -> vector<32x32xf32>
    %c16_i32_371 = arith.constant 16 : i32
    %698 = vector.broadcast %c16_i32_371 : i32 to vector<32x1xi32>
    %699 = arith.addi %1, %698 : vector<32x1xi32>
    %c0_i32_372 = arith.constant 0 : i32
    %700 = vector.broadcast %c0_i32_372 : i32 to vector<32x1xi32>
    %701 = arith.cmpi sge, %699, %700 : vector<32x1xi32>
    %c16_i32_373 = arith.constant 16 : i32
    %702 = vector.broadcast %c16_i32_373 : i32 to vector<32x1xi32>
    %703 = arith.addi %1, %702 : vector<32x1xi32>
    %c32_i32_374 = arith.constant 32 : i32
    %704 = vector.broadcast %c32_i32_374 : i32 to vector<32x1xi32>
    %705 = arith.cmpi slt, %703, %704 : vector<32x1xi32>
    %706 = arith.andi %701, %705 : vector<32x1xi1>
    %cst_375 = arith.constant 0.000000e+00 : f32
    %707 = vector.broadcast %cst_375 : f32 to vector<32x32xf32>
    %708 = vector.shape_cast %706 : vector<32x1xi1> to vector<32x1xi1>
    %709 = vector.broadcast %708 : vector<32x1xi1> to vector<32x32xi1>
    %710 = arith.select %709, %697, %707 : vector<32x32xi1>, vector<32x32xf32>
    %711 = arith.addf %693, %710 : vector<32x32xf32>
    %c2_376 = arith.constant 2 : index
    %c0_377 = arith.constant 0 : index
    %712 = vector.load %arg7[%c2_376, %c0_377] : memref<5x32xf32, #tpu.memory_space<vmem>>, vector<1x32xf32>
    %713 = vector.broadcast %712 : vector<1x32xf32> to vector<32x32xf32>
    %714 = arith.addf %711, %713 : vector<32x32xf32>
    %cst_378 = arith.constant 0.000000e+00 : f32
    %715 = vector.broadcast %cst_378 : f32 to vector<32x32xf32>
    %716 = arith.maximumf %714, %715 : vector<32x32xf32>
    %717 = arith.addf %716, %532 : vector<32x32xf32>
    %718 = vector.extract_strided_slice %162 {offsets = [0, 3, 0], sizes = [1, 1, 32], strides = [1, 1, 1]} : vector<1x5x32xf32> to vector<1x1x32xf32>
    %719 = vector.shape_cast %718 : vector<1x1x32xf32> to vector<1x1x32xf32>
    %720 = vector.broadcast %719 : vector<1x1x32xf32> to vector<1x32x32xf32>
    %721 = vector.shape_cast %720 : vector<1x32x32xf32> to vector<32x32xf32>
    %722 = arith.addf %717, %721 : vector<32x32xf32>
    %cst_379 = arith.constant dense<0.000000e+00> : vector<32xf32>
    %723 = vector.multi_reduction <add>, %722, %cst_379 [1] : vector<32x32xf32> to vector<32xf32>
    %724 = vector.shape_cast %723 : vector<32xf32> to vector<32x1xf32>
    %cst_380 = arith.constant 3.200000e+01 : f32
    %725 = vector.broadcast %cst_380 : f32 to vector<32x1xf32>
    %726 = arith.divf %724, %725 : vector<32x1xf32>
    %727 = arith.mulf %722, %722 : vector<32x32xf32>
    %cst_381 = arith.constant dense<0.000000e+00> : vector<32xf32>
    %728 = vector.multi_reduction <add>, %727, %cst_381 [1] : vector<32x32xf32> to vector<32xf32>
    %729 = vector.shape_cast %728 : vector<32xf32> to vector<32x1xf32>
    %cst_382 = arith.constant 3.200000e+01 : f32
    %730 = vector.broadcast %cst_382 : f32 to vector<32x1xf32>
    %731 = arith.divf %729, %730 : vector<32x1xf32>
    %732 = arith.mulf %726, %726 : vector<32x1xf32>
    %733 = arith.subf %731, %732 : vector<32x1xf32>
    %cst_383 = arith.constant 0.000000e+00 : f32
    %734 = vector.broadcast %cst_383 : f32 to vector<32x1xf32>
    %735 = arith.maximumf %733, %734 : vector<32x1xf32>
    %cst_384 = arith.constant 9.99999974E-6 : f32
    %736 = vector.broadcast %cst_384 : f32 to vector<32x1xf32>
    %737 = arith.addf %735, %736 : vector<32x1xf32>
    %738 = math.rsqrt %737 : vector<32x1xf32>
    %c3_385 = arith.constant 3 : index
    %c0_386 = arith.constant 0 : index
    %739 = vector.load %arg5[%c3_385, %c0_386] : memref<5x32xf32, #tpu.memory_space<vmem>>, vector<1x32xf32>
    %740 = vector.broadcast %738 : vector<32x1xf32> to vector<32x32xf32>
    %741 = vector.broadcast %739 : vector<1x32xf32> to vector<32x32xf32>
    %742 = arith.mulf %740, %741 : vector<32x32xf32>
    %743 = vector.broadcast %726 : vector<32x1xf32> to vector<32x32xf32>
    %744 = arith.subf %722, %743 : vector<32x32xf32>
    %745 = arith.mulf %744, %742 : vector<32x32xf32>
    %c3_387 = arith.constant 3 : index
    %c0_388 = arith.constant 0 : index
    %746 = vector.load %arg6[%c3_387, %c0_388] : memref<5x32xf32, #tpu.memory_space<vmem>>, vector<1x32xf32>
    %747 = vector.broadcast %746 : vector<1x32xf32> to vector<32x32xf32>
    %748 = arith.addf %745, %747 : vector<32x32xf32>
    %749 = arith.truncf %748 : vector<32x32xf32> to vector<32x32xbf16>
    %c3_389 = arith.constant 3 : index
    %c3_390 = arith.constant 3 : index
    %c0_391 = arith.constant 0 : index
    %c0_392 = arith.constant 0 : index
    %750 = vector.load %arg8[%c3_389, %c3_390, %c0_391, %c0_392] : memref<5x9x32x32xbf16, #tpu.memory_space<vmem>>, vector<1x1x32x32xbf16>
    %751 = vector.shape_cast %750 : vector<1x1x32x32xbf16> to vector<32x32xbf16>
    %cst_393 = arith.constant dense<0.000000e+00> : vector<32x32xf32>
    %752 = tpu.matmul %749, %751, %cst_393 {dimension_numbers = #tpu.dot_dimension_numbers<[1], [0], [0], [1], [0, 0, 1, 1], [], []>} : vector<32x32xbf16>, vector<32x32xbf16>, vector<32x32xf32> -> vector<32x32xf32>
    %c16_i32_394 = arith.constant 16 : i32
    %753 = tpu.dynamic_rotate %752 by %c16_i32_394 dim 0 : vector<32x32xf32>, i32 -> vector<32x32xf32>
    %c-16_i32_395 = arith.constant -16 : i32
    %754 = vector.broadcast %c-16_i32_395 : i32 to vector<32x1xi32>
    %755 = arith.addi %1, %754 : vector<32x1xi32>
    %c0_i32_396 = arith.constant 0 : i32
    %756 = vector.broadcast %c0_i32_396 : i32 to vector<32x1xi32>
    %757 = arith.cmpi sge, %755, %756 : vector<32x1xi32>
    %c-16_i32_397 = arith.constant -16 : i32
    %758 = vector.broadcast %c-16_i32_397 : i32 to vector<32x1xi32>
    %759 = arith.addi %1, %758 : vector<32x1xi32>
    %c32_i32_398 = arith.constant 32 : i32
    %760 = vector.broadcast %c32_i32_398 : i32 to vector<32x1xi32>
    %761 = arith.cmpi slt, %759, %760 : vector<32x1xi32>
    %762 = arith.andi %757, %761 : vector<32x1xi1>
    %cst_399 = arith.constant 0.000000e+00 : f32
    %763 = vector.broadcast %cst_399 : f32 to vector<32x32xf32>
    %764 = vector.shape_cast %762 : vector<32x1xi1> to vector<32x1xi1>
    %765 = vector.broadcast %764 : vector<32x1xi1> to vector<32x32xi1>
    %766 = arith.select %765, %753, %763 : vector<32x32xi1>, vector<32x32xf32>
    %c3_400 = arith.constant 3 : index
    %c4_401 = arith.constant 4 : index
    %c0_402 = arith.constant 0 : index
    %c0_403 = arith.constant 0 : index
    %767 = vector.load %arg8[%c3_400, %c4_401, %c0_402, %c0_403] : memref<5x9x32x32xbf16, #tpu.memory_space<vmem>>, vector<1x1x32x32xbf16>
    %768 = vector.shape_cast %767 : vector<1x1x32x32xbf16> to vector<32x32xbf16>
    %cst_404 = arith.constant dense<0.000000e+00> : vector<32x32xf32>
    %769 = tpu.matmul %749, %768, %cst_404 {dimension_numbers = #tpu.dot_dimension_numbers<[1], [0], [0], [1], [0, 0, 1, 1], [], []>} : vector<32x32xbf16>, vector<32x32xbf16>, vector<32x32xf32> -> vector<32x32xf32>
    %770 = arith.addf %766, %769 : vector<32x32xf32>
    %c3_405 = arith.constant 3 : index
    %c5_406 = arith.constant 5 : index
    %c0_407 = arith.constant 0 : index
    %c0_408 = arith.constant 0 : index
    %771 = vector.load %arg8[%c3_405, %c5_406, %c0_407, %c0_408] : memref<5x9x32x32xbf16, #tpu.memory_space<vmem>>, vector<1x1x32x32xbf16>
    %772 = vector.shape_cast %771 : vector<1x1x32x32xbf16> to vector<32x32xbf16>
    %cst_409 = arith.constant dense<0.000000e+00> : vector<32x32xf32>
    %773 = tpu.matmul %749, %772, %cst_409 {dimension_numbers = #tpu.dot_dimension_numbers<[1], [0], [0], [1], [0, 0, 1, 1], [], []>} : vector<32x32xbf16>, vector<32x32xbf16>, vector<32x32xf32> -> vector<32x32xf32>
    %c16_i32_410 = arith.constant 16 : i32
    %774 = tpu.dynamic_rotate %773 by %c16_i32_410 dim 0 : vector<32x32xf32>, i32 -> vector<32x32xf32>
    %c16_i32_411 = arith.constant 16 : i32
    %775 = vector.broadcast %c16_i32_411 : i32 to vector<32x1xi32>
    %776 = arith.addi %1, %775 : vector<32x1xi32>
    %c0_i32_412 = arith.constant 0 : i32
    %777 = vector.broadcast %c0_i32_412 : i32 to vector<32x1xi32>
    %778 = arith.cmpi sge, %776, %777 : vector<32x1xi32>
    %c16_i32_413 = arith.constant 16 : i32
    %779 = vector.broadcast %c16_i32_413 : i32 to vector<32x1xi32>
    %780 = arith.addi %1, %779 : vector<32x1xi32>
    %c32_i32_414 = arith.constant 32 : i32
    %781 = vector.broadcast %c32_i32_414 : i32 to vector<32x1xi32>
    %782 = arith.cmpi slt, %780, %781 : vector<32x1xi32>
    %783 = arith.andi %778, %782 : vector<32x1xi1>
    %cst_415 = arith.constant 0.000000e+00 : f32
    %784 = vector.broadcast %cst_415 : f32 to vector<32x32xf32>
    %785 = vector.shape_cast %783 : vector<32x1xi1> to vector<32x1xi1>
    %786 = vector.broadcast %785 : vector<32x1xi1> to vector<32x32xi1>
    %787 = arith.select %786, %774, %784 : vector<32x32xi1>, vector<32x32xf32>
    %788 = arith.addf %770, %787 : vector<32x32xf32>
    %c3_416 = arith.constant 3 : index
    %c0_417 = arith.constant 0 : index
    %789 = vector.load %arg7[%c3_416, %c0_417] : memref<5x32xf32, #tpu.memory_space<vmem>>, vector<1x32xf32>
    %790 = vector.broadcast %789 : vector<1x32xf32> to vector<32x32xf32>
    %791 = arith.addf %788, %790 : vector<32x32xf32>
    %cst_418 = arith.constant 0.000000e+00 : f32
    %792 = vector.broadcast %cst_418 : f32 to vector<32x32xf32>
    %793 = arith.maximumf %791, %792 : vector<32x32xf32>
    %794 = arith.addf %793, %717 : vector<32x32xf32>
    %795 = vector.extract_strided_slice %162 {offsets = [0, 4, 0], sizes = [1, 1, 32], strides = [1, 1, 1]} : vector<1x5x32xf32> to vector<1x1x32xf32>
    %796 = vector.shape_cast %795 : vector<1x1x32xf32> to vector<1x1x32xf32>
    %797 = vector.broadcast %796 : vector<1x1x32xf32> to vector<1x32x32xf32>
    %798 = vector.shape_cast %797 : vector<1x32x32xf32> to vector<32x32xf32>
    %799 = arith.addf %794, %798 : vector<32x32xf32>
    %cst_419 = arith.constant dense<0.000000e+00> : vector<32xf32>
    %800 = vector.multi_reduction <add>, %799, %cst_419 [1] : vector<32x32xf32> to vector<32xf32>
    %801 = vector.shape_cast %800 : vector<32xf32> to vector<32x1xf32>
    %cst_420 = arith.constant 3.200000e+01 : f32
    %802 = vector.broadcast %cst_420 : f32 to vector<32x1xf32>
    %803 = arith.divf %801, %802 : vector<32x1xf32>
    %804 = arith.mulf %799, %799 : vector<32x32xf32>
    %cst_421 = arith.constant dense<0.000000e+00> : vector<32xf32>
    %805 = vector.multi_reduction <add>, %804, %cst_421 [1] : vector<32x32xf32> to vector<32xf32>
    %806 = vector.shape_cast %805 : vector<32xf32> to vector<32x1xf32>
    %cst_422 = arith.constant 3.200000e+01 : f32
    %807 = vector.broadcast %cst_422 : f32 to vector<32x1xf32>
    %808 = arith.divf %806, %807 : vector<32x1xf32>
    %809 = arith.mulf %803, %803 : vector<32x1xf32>
    %810 = arith.subf %808, %809 : vector<32x1xf32>
    %cst_423 = arith.constant 0.000000e+00 : f32
    %811 = vector.broadcast %cst_423 : f32 to vector<32x1xf32>
    %812 = arith.maximumf %810, %811 : vector<32x1xf32>
    %cst_424 = arith.constant 9.99999974E-6 : f32
    %813 = vector.broadcast %cst_424 : f32 to vector<32x1xf32>
    %814 = arith.addf %812, %813 : vector<32x1xf32>
    %815 = math.rsqrt %814 : vector<32x1xf32>
    %c4_425 = arith.constant 4 : index
    %c0_426 = arith.constant 0 : index
    %816 = vector.load %arg5[%c4_425, %c0_426] : memref<5x32xf32, #tpu.memory_space<vmem>>, vector<1x32xf32>
    %817 = vector.broadcast %815 : vector<32x1xf32> to vector<32x32xf32>
    %818 = vector.broadcast %816 : vector<1x32xf32> to vector<32x32xf32>
    %819 = arith.mulf %817, %818 : vector<32x32xf32>
    %820 = vector.broadcast %803 : vector<32x1xf32> to vector<32x32xf32>
    %821 = arith.subf %799, %820 : vector<32x32xf32>
    %822 = arith.mulf %821, %819 : vector<32x32xf32>
    %c4_427 = arith.constant 4 : index
    %c0_428 = arith.constant 0 : index
    %823 = vector.load %arg6[%c4_427, %c0_428] : memref<5x32xf32, #tpu.memory_space<vmem>>, vector<1x32xf32>
    %824 = vector.broadcast %823 : vector<1x32xf32> to vector<32x32xf32>
    %825 = arith.addf %822, %824 : vector<32x32xf32>
    %826 = arith.truncf %825 : vector<32x32xf32> to vector<32x32xbf16>
    %c4_429 = arith.constant 4 : index
    %c4_430 = arith.constant 4 : index
    %c0_431 = arith.constant 0 : index
    %c0_432 = arith.constant 0 : index
    %827 = vector.load %arg8[%c4_429, %c4_430, %c0_431, %c0_432] : memref<5x9x32x32xbf16, #tpu.memory_space<vmem>>, vector<1x1x32x32xbf16>
    %828 = vector.shape_cast %827 : vector<1x1x32x32xbf16> to vector<32x32xbf16>
    %cst_433 = arith.constant dense<0.000000e+00> : vector<32x32xf32>
    %829 = tpu.matmul %826, %828, %cst_433 {dimension_numbers = #tpu.dot_dimension_numbers<[1], [0], [0], [1], [0, 0, 1, 1], [], []>} : vector<32x32xbf16>, vector<32x32xbf16>, vector<32x32xf32> -> vector<32x32xf32>
    %c4_434 = arith.constant 4 : index
    %c0_435 = arith.constant 0 : index
    %830 = vector.load %arg7[%c4_434, %c0_435] : memref<5x32xf32, #tpu.memory_space<vmem>>, vector<1x32xf32>
    %831 = vector.broadcast %830 : vector<1x32xf32> to vector<32x32xf32>
    %832 = arith.addf %829, %831 : vector<32x32xf32>
    %cst_436 = arith.constant 0.000000e+00 : f32
    %833 = vector.broadcast %cst_436 : f32 to vector<32x32xf32>
    %834 = arith.maximumf %832, %833 : vector<32x32xf32>
    %835 = arith.addf %834, %794 : vector<32x32xf32>
    %836 = arith.truncf %835 : vector<32x32xf32> to vector<32x32xbf16>
    %c0_437 = arith.constant 0 : index
    %c0_438 = arith.constant 0 : index
    %837 = vector.load %arg9[%c0_437, %c0_438] : memref<32x32xbf16, #tpu.memory_space<vmem>>, vector<32x32xbf16>
    %cst_439 = arith.constant dense<0.000000e+00> : vector<32x32xf32>
    %838 = tpu.matmul %836, %837, %cst_439 {dimension_numbers = #tpu.dot_dimension_numbers<[1], [0], [0], [1], [0, 0, 1, 1], [], []>} : vector<32x32xbf16>, vector<32x32xbf16>, vector<32x32xf32> -> vector<32x32xf32>
    %c0_440 = arith.constant 0 : index
    %c0_441 = arith.constant 0 : index
    %839 = vector.load %arg10[%c0_440, %c0_441] : memref<1x32xf32, #tpu.memory_space<vmem>>, vector<1x32xf32>
    %840 = vector.broadcast %839 : vector<1x32xf32> to vector<32x32xf32>
    %841 = arith.addf %838, %840 : vector<32x32xf32>
    %cst_442 = arith.constant 0.000000e+00 : f32
    %842 = vector.broadcast %cst_442 : f32 to vector<32x32xf32>
    %843 = arith.maximumf %841, %842 : vector<32x32xf32>
    %844 = arith.truncf %843 : vector<32x32xf32> to vector<32x32xbf16>
    %c0_443 = arith.constant 0 : index
    %c0_444 = arith.constant 0 : index
    %845 = vector.load %arg11[%c0_443, %c0_444] : memref<32x128xbf16, #tpu.memory_space<vmem>>, vector<32x128xbf16>
    %cst_445 = arith.constant dense<0.000000e+00> : vector<32x128xf32>
    %846 = tpu.matmul %844, %845, %cst_445 {dimension_numbers = #tpu.dot_dimension_numbers<[1], [0], [0], [1], [0, 0, 1, 1], [], []>} : vector<32x32xbf16>, vector<32x128xbf16>, vector<32x128xf32> -> vector<32x128xf32>
    %c0_446 = arith.constant 0 : index
    %c0_447 = arith.constant 0 : index
    %847 = vector.load %arg12[%c0_446, %c0_447] : memref<1x128xf32, #tpu.memory_space<vmem>>, vector<1x128xf32>
    %848 = vector.broadcast %847 : vector<1x128xf32> to vector<32x128xf32>
    %849 = arith.addf %846, %848 : vector<32x128xf32>
    %850 = vector.shape_cast %849 : vector<32x128xf32> to vector<1x32x128xf32>
    %c0_448 = arith.constant 0 : index
    %c0_449 = arith.constant 0 : index
    %c0_450 = arith.constant 0 : index
    %851 = vector.load %arg13[%c0_448, %c0_449, %c0_450] : memref<1x32x128xf32, #tpu.memory_space<vmem>>, vector<1x32x128xf32>
    tpu.vector_store %arg13[%c0_448, %c0_449, %c0_450], %850 {strides = array<i32>} : memref<1x32x128xf32, #tpu.memory_space<vmem>>, vector<1x32x128xf32>,
    return
  }
  func.func @transform_0(%arg0: i32) -> (i32, i32, i32) {
    %c0_i32 = arith.constant 0 : i32
    %c0_i32_0 = arith.constant 0 : i32
    %c0_i32_1 = arith.constant 0 : i32
    return %arg0, %c0_i32, %c0_i32_0 : i32, i32, i32
  }
  func.func @transform_1(%arg0: i32) -> (i32, i32, i32) {
    %c0_i32 = arith.constant 0 : i32
    %c0_i32_0 = arith.constant 0 : i32
    %c0_i32_1 = arith.constant 0 : i32
    return %arg0, %c0_i32, %c0_i32_0 : i32, i32, i32
  }
  func.func @transform_2(%arg0: i32) -> (i32, i32, i32) {
    %c0_i32 = arith.constant 0 : i32
    %c0_i32_0 = arith.constant 0 : i32
    %c0_i32_1 = arith.constant 0 : i32
    %c0_i32_2 = arith.constant 0 : i32
    return %c0_i32, %c0_i32_0, %c0_i32_1 : i32, i32, i32
  }
  func.func @transform_3(%arg0: i32) -> (i32, i32) {
    %c0_i32 = arith.constant 0 : i32
    %c0_i32_0 = arith.constant 0 : i32
    %c0_i32_1 = arith.constant 0 : i32
    return %c0_i32, %c0_i32_0 : i32, i32
  }
  func.func @transform_4(%arg0: i32) -> (i32, i32) {
    %c0_i32 = arith.constant 0 : i32
    %c0_i32_0 = arith.constant 0 : i32
    %c0_i32_1 = arith.constant 0 : i32
    return %c0_i32, %c0_i32_0 : i32, i32
  }
  func.func @transform_5(%arg0: i32) -> (i32, i32) {
    %c0_i32 = arith.constant 0 : i32
    %c0_i32_0 = arith.constant 0 : i32
    %c0_i32_1 = arith.constant 0 : i32
    return %c0_i32, %c0_i32_0 : i32, i32
  }
  func.func @transform_6(%arg0: i32) -> (i32, i32) {
    %c0_i32 = arith.constant 0 : i32
    %c0_i32_0 = arith.constant 0 : i32
    %c0_i32_1 = arith.constant 0 : i32
    return %c0_i32, %c0_i32_0 : i32, i32
  }
  func.func @transform_7(%arg0: i32) -> (i32, i32, i32, i32) {
    %c0_i32 = arith.constant 0 : i32
    %c0_i32_0 = arith.constant 0 : i32
    %c0_i32_1 = arith.constant 0 : i32
    %c0_i32_2 = arith.constant 0 : i32
    %c0_i32_3 = arith.constant 0 : i32
    return %c0_i32, %c0_i32_0, %c0_i32_1, %c0_i32_2 : i32, i32, i32, i32
  }
  func.func @transform_8(%arg0: i32) -> (i32, i32) {
    %c0_i32 = arith.constant 0 : i32
    %c0_i32_0 = arith.constant 0 : i32
    %c0_i32_1 = arith.constant 0 : i32
    return %c0_i32, %c0_i32_0 : i32, i32
  }
  func.func @transform_9(%arg0: i32) -> (i32, i32) {
    %c0_i32 = arith.constant 0 : i32
    %c0_i32_0 = arith.constant 0 : i32
    %c0_i32_1 = arith.constant 0 : i32
    return %c0_i32, %c0_i32_0 : i32, i32
  }
  func.func @transform_10(%arg0: i32) -> (i32, i32) {
    %c0_i32 = arith.constant 0 : i32
    %c0_i32_0 = arith.constant 0 : i32
    %c0_i32_1 = arith.constant 0 : i32
    return %c0_i32, %c0_i32_0 : i32, i32
  }
  func.func @transform_11(%arg0: i32) -> (i32, i32) {
    %c0_i32 = arith.constant 0 : i32
    %c0_i32_0 = arith.constant 0 : i32
    %c0_i32_1 = arith.constant 0 : i32
    return %c0_i32, %c0_i32_0 : i32, i32
  }
  func.func @transform_12(%arg0: i32) -> (i32, i32, i32) {
    %c0_i32 = arith.constant 0 : i32
    %c0_i32_0 = arith.constant 0 : i32
    %c0_i32_1 = arith.constant 0 : i32
    return %arg0, %c0_i32, %c0_i32_0 : i32, i32, i32
  }
}

</mosaic_0001>

<llo_original>
// kernel: denoising_cnn_forward.1
$region0: #{denoising_cnn_forward.1}
  #allocation0 [shape = 'u32[]', space=smem, size = 0x4, offset = 0x4, fixed_abs, tag = 'smem constant byte address 0x4 - core index']
  #allocation1 [shape = 'u32[144,128]{1,0:T(1,128)}', space=vmem, size = 0x12000, scoped, tag = 'internal scratch']
  %s0 = inlined_call_operand.vmem [shape: s32[2,32,1], index: 0, kind: input, shape index: {}]
  %s1 = inlined_call_operand.vmem [shape: f32[2,5,32], index: 1, kind: input, shape index: {}]
  %s2 = inlined_call_operand.vmem [shape: bf16[9,8,32], index: 2, kind: input, shape index: {}]
  %s3 = inlined_call_operand.vmem [shape: f32[1,32], index: 3, kind: input, shape index: {}]
  %s4 = inlined_call_operand.vmem [shape: f32[5,32], index: 4, kind: input, shape index: {}]
  %s5 = inlined_call_operand.vmem [shape: f32[5,32], index: 5, kind: input, shape index: {}]
  %s6 = inlined_call_operand.vmem [shape: f32[5,32], index: 6, kind: input, shape index: {}]
  %s7 = inlined_call_operand.vmem [shape: bf16[5,9,32,32], index: 7, kind: input, shape index: {}]
  %s8 = inlined_call_operand.vmem [shape: bf16[32,32], index: 8, kind: input, shape index: {}]
  %s9 = inlined_call_operand.vmem [shape: f32[1,32], index: 9, kind: input, shape index: {}]
  %s10 = inlined_call_operand.vmem [shape: bf16[32,128], index: 10, kind: input, shape index: {}]
  %s11 = inlined_call_operand.vmem [shape: f32[1,128], index: 11, kind: input, shape index: {}]
  %s12 = inlined_call_operand.vmem [shape: f32[2,32,128], index: 12, kind: output, shape index: {}]
  %s13 = sld [smem:[#allocation0]]
  $region81: #{denoising_cnn_forward.1} parent=0
    _
  %s15 = ssub.s32 1, %s13
  %s16 = scalar_select 0, %s15, %s13
  loop: start=0, step=1, limit=4
  $region2: #{denoising_cnn_forward.1} parent=0 // loop_pre_header
    _
  $region3: #{denoising_cnn_forward.1} parent=0 // loop_header
    %s18 = sphi 0, %s22
    %p19 = scmp.ge.s32.totalorder %s18, 4
    %s28 = sphi 0, %s30
    %s31 = sphi 0, %s28
    %s32 = sphi 0, %s31
    %s48 = sphi 0, %s32
    %s54 = sphi 0, %s56
    %s57 = sphi 0, %s54
    %s58 = sphi 0, %s57
    %s74 = sphi 0, %s58
    %s78 = sphi 0, %s78
    %s80 = sphi 0, %s78
    %s81 = sphi 0, %s80
    %s95 = sphi 0, %s81
    %s99 = sphi 0, %s99
    %s101 = sphi 0, %s99
    %s102 = sphi 0, %s101
    %s116 = sphi 0, %s102
    %s120 = sphi 0, %s120
    %s122 = sphi 0, %s120
    %s123 = sphi 0, %s122
    %s137 = sphi 0, %s123
    %s141 = sphi 0, %s141
    %s143 = sphi 0, %s141
    %s144 = sphi 0, %s143
    %s158 = sphi 0, %s144
    %s162 = sphi 0, %s162
    %s164 = sphi 0, %s162
    %s165 = sphi 0, %s164
    %s179 = sphi 0, %s165
    %s183 = sphi 0, %s183
    %s185 = sphi 0, %s183
    %s186 = sphi 0, %s185
    %s200 = sphi 0, %s186
    %s204 = sphi 0, %s204
    %s206 = sphi 0, %s204
    %s207 = sphi 0, %s206
    %s221 = sphi 0, %s207
    %s225 = sphi 0, %s225
    %s227 = sphi 0, %s225
    %s228 = sphi 0, %s227
    %s242 = sphi 0, %s228
    %s246 = sphi 0, %s246
    %s248 = sphi 0, %s246
    %s249 = sphi 0, %s248
    %s263 = sphi 0, %s249
    %s267 = sphi 0, %s267
    %s269 = sphi 0, %s267
    %s270 = sphi 0, %s269
    %s284 = sphi 0, %s270
    %s290 = sphi 0, %s292
    %s293 = sphi 0, %s290
    %s294 = sphi 0, %s293
    %s310 = sphi 0, %s294
  $region4: #{denoising_cnn_forward.1} parent=0 // loop_header_branch
    %21 = sbr.rel (%p19) target = $region8
  $region5: #{denoising_cnn_forward.1} parent=0 // loop_body
    %s23 = ssub.s32 %s18, 1
    %s24 = ssub.s32 %s18, 2
    %s25 = sadd.s32 %s18, 1
    %s26 = ssub.s32 %s18, %s25
    %p27 = scmp.eq.s32.totalorder %s26, 0
    %s29 = sadd.s32 %s28, 1
    %s30 = scalar_select %p27, %s28, %s29
    %p33 = pneg %p27
    %p34 = scmp.eq.s32.totalorder %s18, 1
    %p35 = por %p33, %p34
    %p36 = scmp.ne.s32.totalorder %s28, %s31
    %p37 = scmp.eq.s32.totalorder %s18, 0
    %p38 = por %p36, %p37
    %p39 = scmp.ne.s32.totalorder %s28, %s31
    %p40 = scmp.eq.s32.totalorder %s23, 1
    %p41 = por %p39, %p40
    %p42 = scmp.ne.s32.totalorder %s31, %s32
    %p43 = scmp.eq.s32.totalorder %s23, 0
    %p44 = por %p42, %p43
    %p45 = scmp.ne.s32.totalorder %s31, %s32
    %p46 = scmp.eq.s32.totalorder %s24, 1
    %p47 = por %p45, %p46
    %p49 = scmp.ne.s32.totalorder %s32, %s48
    %p50 = scmp.eq.s32.totalorder %s24, 0
    %p51 = por %p49, %p50
    %s52 = ssub.s32 %s18, %s25
    %p53 = scmp.eq.s32.totalorder %s52, 0
    %s55 = sadd.s32 %s54, 1
    %s56 = scalar_select %p53, %s54, %s55
    %p59 = pneg %p53
    %p60 = scmp.eq.s32.totalorder %s18, 1
    %p61 = por %p59, %p60
    %p62 = scmp.ne.s32.totalorder %s54, %s57
    %p63 = scmp.eq.s32.totalorder %s18, 0
    %p64 = por %p62, %p63
    %p65 = scmp.ne.s32.totalorder %s54, %s57
    %p66 = scmp.eq.s32.totalorder %s23, 1
    %p67 = por %p65, %p66
    %p68 = scmp.ne.s32.totalorder %s57, %s58
    %p69 = scmp.eq.s32.totalorder %s23, 0
    %p70 = por %p68, %p69
    %p71 = scmp.ne.s32.totalorder %s57, %s58
    %p72 = scmp.eq.s32.totalorder %s24, 1
    %p73 = por %p71, %p72
    %p75 = scmp.ne.s32.totalorder %s58, %s74
    %p76 = scmp.eq.s32.totalorder %s24, 0
    %p77 = por %p75, %p76
    %s79 = sadd.s32 %s78, 1
    %p82 = scmp.eq.s32.totalorder %s18, 1
    %p83 = scmp.ne.s32.totalorder %s78, %s80
    %p84 = scmp.eq.s32.totalorder %s18, 0
    %p85 = por %p83, %p84
    %p86 = scmp.ne.s32.totalorder %s78, %s80
    %p87 = scmp.eq.s32.totalorder %s23, 1
    %p88 = por %p86, %p87
    %p89 = scmp.ne.s32.totalorder %s80, %s81
    %p90 = scmp.eq.s32.totalorder %s23, 0
    %p91 = por %p89, %p90
    %p92 = scmp.ne.s32.totalorder %s80, %s81
    %p93 = scmp.eq.s32.totalorder %s24, 1
    %p94 = por %p92, %p93
    %p96 = scmp.ne.s32.totalorder %s81, %s95
    %p97 = scmp.eq.s32.totalorder %s24, 0
    %p98 = por %p96, %p97
    %s100 = sadd.s32 %s99, 1
    %p103 = scmp.eq.s32.totalorder %s18, 1
    %p104 = scmp.ne.s32.totalorder %s99, %s101
    %p105 = scmp.eq.s32.totalorder %s18, 0
    %p106 = por %p104, %p105
    %p107 = scmp.ne.s32.totalorder %s99, %s101
    %p108 = scmp.eq.s32.totalorder %s23, 1
    %p109 = por %p107, %p108
    %p110 = scmp.ne.s32.totalorder %s101, %s102
    %p111 = scmp.eq.s32.totalorder %s23, 0
    %p112 = por %p110, %p111
    %p113 = scmp.ne.s32.totalorder %s101, %s102
    %p114 = scmp.eq.s32.totalorder %s24, 1
    %p115 = por %p113, %p114
    %p117 = scmp.ne.s32.totalorder %s102, %s116
    %p118 = scmp.eq.s32.totalorder %s24, 0
    %p119 = por %p117, %p118
    %s121 = sadd.s32 %s120, 1
    %p124 = scmp.eq.s32.totalorder %s18, 1
    %p125 = scmp.ne.s32.totalorder %s120, %s122
    %p126 = scmp.eq.s32.totalorder %s18, 0
    %p127 = por %p125, %p126
    %p128 = scmp.ne.s32.totalorder %s120, %s122
    %p129 = scmp.eq.s32.totalorder %s23, 1
    %p130 = por %p128, %p129
    %p131 = scmp.ne.s32.totalorder %s122, %s123
    %p132 = scmp.eq.s32.totalorder %s23, 0
    %p133 = por %p131, %p132
    %p134 = scmp.ne.s32.totalorder %s122, %s123
    %p135 = scmp.eq.s32.totalorder %s24, 1
    %p136 = por %p134, %p135
    %p138 = scmp.ne.s32.totalorder %s123, %s137
    %p139 = scmp.eq.s32.totalorder %s24, 0
    %p140 = por %p138, %p139
    %s142 = sadd.s32 %s141, 1
    %p145 = scmp.eq.s32.totalorder %s18, 1
    %p146 = scmp.ne.s32.totalorder %s141, %s143
    %p147 = scmp.eq.s32.totalorder %s18, 0
    %p148 = por %p146, %p147
    %p149 = scmp.ne.s32.totalorder %s141, %s143
    %p150 = scmp.eq.s32.totalorder %s23, 1
    %p151 = por %p149, %p150
    %p152 = scmp.ne.s32.totalorder %s143, %s144
    %p153 = scmp.eq.s32.totalorder %s23, 0
    %p154 = por %p152, %p153
    %p155 = scmp.ne.s32.totalorder %s143, %s144
    %p156 = scmp.eq.s32.totalorder %s24, 1
    %p157 = por %p155, %p156
    %p159 = scmp.ne.s32.totalorder %s144, %s158
    %p160 = scmp.eq.s32.totalorder %s24, 0
    %p161 = por %p159, %p160
    %s163 = sadd.s32 %s162, 1
    %p166 = scmp.eq.s32.totalorder %s18, 1
    %p167 = scmp.ne.s32.totalorder %s162, %s164
    %p168 = scmp.eq.s32.totalorder %s18, 0
    %p169 = por %p167, %p168
    %p170 = scmp.ne.s32.totalorder %s162, %s164
    %p171 = scmp.eq.s32.totalorder %s23, 1
    %p172 = por %p170, %p171
    %p173 = scmp.ne.s32.totalorder %s164, %s165
    %p174 = scmp.eq.s32.totalorder %s23, 0
    %p175 = por %p173, %p174
    %p176 = scmp.ne.s32.totalorder %s164, %s165
    %p177 = scmp.eq.s32.totalorder %s24, 1
    %p178 = por %p176, %p177
    %p180 = scmp.ne.s32.totalorder %s165, %s179
    %p181 = scmp.eq.s32.totalorder %s24, 0
    %p182 = por %p180, %p181
    %s184 = sadd.s32 %s183, 1
    %p187 = scmp.eq.s32.totalorder %s18, 1
    %p188 = scmp.ne.s32.totalorder %s183, %s185
    %p189 = scmp.eq.s32.totalorder %s18, 0
    %p190 = por %p188, %p189
    %p191 = scmp.ne.s32.totalorder %s183, %s185
    %p192 = scmp.eq.s32.totalorder %s23, 1
    %p193 = por %p191, %p192
    %p194 = scmp.ne.s32.totalorder %s185, %s186
    %p195 = scmp.eq.s32.totalorder %s23, 0
    %p196 = por %p194, %p195
    %p197 = scmp.ne.s32.totalorder %s185, %s186
    %p198 = scmp.eq.s32.totalorder %s24, 1
    %p199 = por %p197, %p198
    %p201 = scmp.ne.s32.totalorder %s186, %s200
    %p202 = scmp.eq.s32.totalorder %s24, 0
    %p203 = por %p201, %p202
    %s205 = sadd.s32 %s204, 1
    %p208 = scmp.eq.s32.totalorder %s18, 1
    %p209 = scmp.ne.s32.totalorder %s204, %s206
    %p210 = scmp.eq.s32.totalorder %s18, 0
    %p211 = por %p209, %p210
    %p212 = scmp.ne.s32.totalorder %s204, %s206
    %p213 = scmp.eq.s32.totalorder %s23, 1
    %p214 = por %p212, %p213
    %p215 = scmp.ne.s32.totalorder %s206, %s207
    %p216 = scmp.eq.s32.totalorder %s23, 0
    %p217 = por %p215, %p216
    %p218 = scmp.ne.s32.totalorder %s206, %s207
    %p219 = scmp.eq.s32.totalorder %s24, 1
    %p220 = por %p218, %p219
    %p222 = scmp.ne.s32.totalorder %s207, %s221
    %p223 = scmp.eq.s32.totalorder %s24, 0
    %p224 = por %p222, %p223
    %s226 = sadd.s32 %s225, 1
    %p229 = scmp.eq.s32.totalorder %s18, 1
    %p230 = scmp.ne.s32.totalorder %s225, %s227
    %p231 = scmp.eq.s32.totalorder %s18, 0
    %p232 = por %p230, %p231
    %p233 = scmp.ne.s32.totalorder %s225, %s227
    %p234 = scmp.eq.s32.totalorder %s23, 1
    %p235 = por %p233, %p234
    %p236 = scmp.ne.s32.totalorder %s227, %s228
    %p237 = scmp.eq.s32.totalorder %s23, 0
    %p238 = por %p236, %p237
    %p239 = scmp.ne.s32.totalorder %s227, %s228
    %p240 = scmp.eq.s32.totalorder %s24, 1
    %p241 = por %p239, %p240
    %p243 = scmp.ne.s32.totalorder %s228, %s242
    %p244 = scmp.eq.s32.totalorder %s24, 0
    %p245 = por %p243, %p244
    %s247 = sadd.s32 %s246, 1
    %p250 = scmp.eq.s32.totalorder %s18, 1
    %p251 = scmp.ne.s32.totalorder %s246, %s248
    %p252 = scmp.eq.s32.totalorder %s18, 0
    %p253 = por %p251, %p252
    %p254 = scmp.ne.s32.totalorder %s246, %s248
    %p255 = scmp.eq.s32.totalorder %s23, 1
    %p256 = por %p254, %p255
    %p257 = scmp.ne.s32.totalorder %s248, %s249
    %p258 = scmp.eq.s32.totalorder %s23, 0
    %p259 = por %p257, %p258
    %p260 = scmp.ne.s32.totalorder %s248, %s249
    %p261 = scmp.eq.s32.totalorder %s24, 1
    %p262 = por %p260, %p261
    %p264 = scmp.ne.s32.totalorder %s249, %s263
    %p265 = scmp.eq.s32.totalorder %s24, 0
    %p266 = por %p264, %p265
    %s268 = sadd.s32 %s267, 1
    %p271 = scmp.eq.s32.totalorder %s18, 1
    %p272 = scmp.ne.s32.totalorder %s267, %s269
    %p273 = scmp.eq.s32.totalorder %s18, 0
    %p274 = por %p272, %p273
    %p275 = scmp.ne.s32.totalorder %s267, %s269
    %p276 = scmp.eq.s32.totalorder %s23, 1
    %p277 = por %p275, %p276
    %p278 = scmp.ne.s32.totalorder %s269, %s270
    %p279 = scmp.eq.s32.totalorder %s23, 0
    %p280 = por %p278, %p279
    %p281 = scmp.ne.s32.totalorder %s269, %s270
    %p282 = scmp.eq.s32.totalorder %s24, 1
    %p283 = por %p281, %p282
    %p285 = scmp.ne.s32.totalorder %s270, %s284
    %p286 = scmp.eq.s32.totalorder %s24, 0
    %p287 = por %p285, %p286
    %s288 = ssub.s32 %s18, %s25
    %p289 = scmp.eq.s32.totalorder %s288, 0
    %s291 = sadd.s32 %s290, 1
    %s292 = scalar_select %p289, %s290, %s291
    %p295 = pneg %p289
    %p296 = scmp.eq.s32.totalorder %s18, 1
    %p297 = por %p295, %p296
    %p298 = scmp.ne.s32.totalorder %s290, %s293
    %p299 = scmp.eq.s32.totalorder %s18, 0
    %p300 = por %p298, %p299
    %p301 = scmp.ne.s32.totalorder %s290, %s293
    %p302 = scmp.eq.s32.totalorder %s23, 1
    %p303 = por %p301, %p302
    %p304 = scmp.ne.s32.totalorder %s293, %s294
    %p305 = scmp.eq.s32.totalorder %s23, 0
    %p306 = por %p304, %p305
    %p307 = scmp.ne.s32.totalorder %s293, %s294
    %p308 = scmp.eq.s32.totalorder %s24, 1
    %p309 = por %p307, %p308
    %p311 = scmp.ne.s32.totalorder %s294, %s310
    %p312 = scmp.eq.s32.totalorder %s24, 0
    %p313 = por %p311, %p312
    %p314 = scmp.le.s32.totalorder 1, %s18
    %p315 = scmp.lt.s32.totalorder %s18, 3
    %p316 = pnand %p314, %p315
    %p317 = pneg %p316
    // Predicated region
    $region9: #{denoising_cnn_forward.1} parent=5 // pred_check
      _
    $region10: #{denoising_cnn_forward.1} parent=5 // pred_check_branch
      %319 = sbr.rel (%p316) target = $region12
    $region11: #{denoising_cnn_forward.1} parent=5 // pred_region
      %s320 = ssub.s32 %s18, 1
      // Predicated region
      $region13: #{denoising_cnn_forward.1} parent=11 // pred_check
        %p321 = pneg %p91
      $region14: #{denoising_cnn_forward.1} parent=11 // pred_check_branch
        %323 = sbr.rel (%p321) target = $region16
      $region15: #{denoising_cnn_forward.1} parent=11 // pred_region
        _
      $region16: #{denoising_cnn_forward.1} parent=11 // pred_fallthru
        _
      // Predicated region
      $region17: #{denoising_cnn_forward.1} parent=11 // pred_check
        %p324 = pneg %p112
      $region18: #{denoising_cnn_forward.1} parent=11 // pred_check_branch
        %326 = sbr.rel (%p324) target = $region20
      $region19: #{denoising_cnn_forward.1} parent=11 // pred_region
        _
      $region20: #{denoising_cnn_forward.1} parent=11 // pred_fallthru
        _
      // Predicated region
      $region21: #{denoising_cnn_forward.1} parent=11 // pred_check
        %p327 = pneg %p133
      $region22: #{denoising_cnn_forward.1} parent=11 // pred_check_branch
        %329 = sbr.rel (%p327) target = $region24
      $region23: #{denoising_cnn_forward.1} parent=11 // pred_region
        _
      $region24: #{denoising_cnn_forward.1} parent=11 // pred_fallthru
        _
      // Predicated region
      $region25: #{denoising_cnn_forward.1} parent=11 // pred_check
        %p330 = pneg %p154
      $region26: #{denoising_cnn_forward.1} parent=11 // pred_check_branch
        %332 = sbr.rel (%p330) target = $region28
      $region27: #{denoising_cnn_forward.1} parent=11 // pred_region
        _
      $region28: #{denoising_cnn_forward.1} parent=11 // pred_fallthru
        _
      // Predicated region
      $region29: #{denoising_cnn_forward.1} parent=11 // pred_check
        %p333 = pneg %p175
      $region30: #{denoising_cnn_forward.1} parent=11 // pred_check_branch
        %335 = sbr.rel (%p333) target = $region32
      $region31: #{denoising_cnn_forward.1} parent=11 // pred_region
        _
      $region32: #{denoising_cnn_forward.1} parent=11 // pred_fallthru
        _
      // Predicated region
      $region33: #{denoising_cnn_forward.1} parent=11 // pred_check
        %p336 = pneg %p196
      $region34: #{denoising_cnn_forward.1} parent=11 // pred_check_branch
        %338 = sbr.rel (%p336) target = $region36
      $region35: #{denoising_cnn_forward.1} parent=11 // pred_region
        _
      $region36: #{denoising_cnn_forward.1} parent=11 // pred_fallthru
        _
      // Predicated region
      $region37: #{denoising_cnn_forward.1} parent=11 // pred_check
        %p339 = pneg %p217
      $region38: #{denoising_cnn_forward.1} parent=11 // pred_check_branch
        %341 = sbr.rel (%p339) target = $region40
      $region39: #{denoising_cnn_forward.1} parent=11 // pred_region
        _
      $region40: #{denoising_cnn_forward.1} parent=11 // pred_fallthru
        _
      // Predicated region
      $region41: #{denoising_cnn_forward.1} parent=11 // pred_check
        %p342 = pneg %p238
      $region42: #{denoising_cnn_forward.1} parent=11 // pred_check_branch
        %344 = sbr.rel (%p342) target = $region44
      $region43: #{denoising_cnn_forward.1} parent=11 // pred_region
        _
      $region44: #{denoising_cnn_forward.1} parent=11 // pred_fallthru
        _
      // Predicated region
      $region45: #{denoising_cnn_forward.1} parent=11 // pred_check
        %p345 = pneg %p259
      $region46: #{denoising_cnn_forward.1} parent=11 // pred_check_branch
        %347 = sbr.rel (%p345) target = $region48
      $region47: #{denoising_cnn_forward.1} parent=11 // pred_region
        _
      $region48: #{denoising_cnn_forward.1} parent=11 // pred_fallthru
        _
      // Predicated region
      $region49: #{denoising_cnn_forward.1} parent=11 // pred_check
        %p348 = pneg %p280
      $region50: #{denoising_cnn_forward.1} parent=11 // pred_check_branch
        %350 = sbr.rel (%p348) target = $region52
      $region51: #{denoising_cnn_forward.1} parent=11 // pred_region
        _
      $region52: #{denoising_cnn_forward.1} parent=11 // pred_fallthru
        _
    $region12: #{denoising_cnn_forward.1} parent=5 // pred_fallthru
      _
    %p351 = scmp.lt.s32.totalorder %s18, 2
    // Predicated region
    $region53: #{denoising_cnn_forward.1} parent=5 // pred_check
      %p352 = pneg %p351
    $region54: #{denoising_cnn_forward.1} parent=5 // pred_check_branch
      %354 = sbr.rel (%p352) target = $region56
    $region55: #{denoising_cnn_forward.1} parent=5 // pred_region
      // Predicated region
      $region57: #{denoising_cnn_forward.1} parent=55 // pred_check
        %p355 = pneg %p38
      $region58: #{denoising_cnn_forward.1} parent=55 // pred_check_branch
        %357 = sbr.rel (%p355) target = $region60
      $region59: #{denoising_cnn_forward.1} parent=55 // pred_region
        %p358 = scmp.lt.s32.totalorder %s18, 1
        %s359 = scalar_select %p358, %s18, 1
        %s360 = smul.addr %s359, 4
        %s361 = smul.addr %s360, 8
        %s362 = scalar_lea.vmem %s0, %s361
      $region60: #{denoising_cnn_forward.1} parent=55 // pred_fallthru
        _
      // Predicated region
      $region61: #{denoising_cnn_forward.1} parent=55 // pred_check
        %p363 = pneg %p64
      $region62: #{denoising_cnn_forward.1} parent=55 // pred_check_branch
        %365 = sbr.rel (%p363) target = $region64
      $region63: #{denoising_cnn_forward.1} parent=55 // pred_region
        %p366 = scmp.lt.s32.totalorder %s18, 1
        %s367 = scalar_select %p366, %s18, 1
        %s368 = smul.addr %s367, 8
        %s369 = scalar_lea.vmem %s1, %s368
      $region64: #{denoising_cnn_forward.1} parent=55 // pred_fallthru
        _
    $region56: #{denoising_cnn_forward.1} parent=5 // pred_fallthru
      _
    %p370 = scmp.le.s32.totalorder 1, %s18
    %p371 = scmp.lt.s32.totalorder %s18, 3
    %p372 = pnand %p370, %p371
    %p373 = pneg %p372
    // Predicated region
    $region65: #{denoising_cnn_forward.1} parent=5 // pred_check
      _
    $region66: #{denoising_cnn_forward.1} parent=5 // pred_check_branch
      %375 = sbr.rel (%p372) target = $region68
    $region67: #{denoising_cnn_forward.1} parent=5 // pred_region
      %s376 = ssub.s32 %s18, 1
      %p377 = scmp.lt.s32.totalorder %s23, 1
      %s378 = scalar_select %p377, %s23, 1
      %s379 = smul.addr %s378, 4
      %s380 = smul.addr %s379, 8
      %s381 = scalar_lea.vmem %s0, %s380
      %p382 = pneg %p44
      %p383 = pneg %p41
      %p384 = scmp.lt.s32.totalorder %s23, 1
      %s385 = scalar_select %p384, %s23, 1
      %s386 = smul.addr %s385, 8
      %s387 = scalar_lea.vmem %s1, %s386
      %p388 = pneg %p70
      %p389 = pneg %p67
      %p390 = pneg %p91
      %p391 = pneg %p88
      %p392 = pneg %p112
      %p393 = pneg %p109
      %p394 = pneg %p133
      %p395 = pneg %p130
      %p396 = pneg %p154
      %p397 = pneg %p151
      %p398 = pneg %p175
      %p399 = pneg %p172
      %p400 = pneg %p196
      %p401 = pneg %p193
      %p402 = pneg %p217
      %p403 = pneg %p214
      %p404 = pneg %p238
      %p405 = pneg %p235
      %p406 = pneg %p259
      %p407 = pneg %p256
      %p408 = pneg %p280
      %p409 = pneg %p277
      %p410 = pneg %p306
      %p411 = pneg %p303
      %p412 = scmp.lt.s32.totalorder %s23, 1
      %s413 = scalar_select %p412, %s23, 1
      %s414 = smul.addr %s413, 4
      %s415 = smul.addr %s414, 8
      %s416 = scalar_lea.vmem %s12, %s415
      %p417 = scmp.lt.s32.totalorder %s23, 1
      %s418 = scalar_select %p417, %s23, 1
      %s419 = smul.addr %s418, 4
      %s420 = smul.addr %s419, 8
      %s421 = scalar_lea.vmem %s0, %s420
      %p422 = scmp.lt.s32.totalorder %s23, 1
      %s423 = scalar_select %p422, %s23, 1
      %s424 = smul.addr %s423, 8
      %s425 = scalar_lea.vmem %s1, %s424
      %p426 = scmp.lt.s32.totalorder %s23, 1
      %s427 = scalar_select %p426, %s23, 1
      %s428 = smul.addr %s427, 4
      %s429 = smul.addr %s428, 8
      %s430 = scalar_lea.vmem %s12, %s429
      %v432 = vlaneseq
      %v433 = vshrl.u32 %v432, 7
      %v434 = vadd.s32 %v433, 8
      %v435 = vadd.s32 %v433, 16
      %v436 = vadd.s32 %v433, 24
      %v437 = vld [vmem:[%s421] sm:$0xff]
      %v438 = vld [vmem:[%s421 + $0x8] sm:$0xff]
      %v439 = vld [vmem:[%s421 + $0x10] sm:$0xff]
      %v440 = vld [vmem:[%s421 + $0x18] sm:$0xff]
      %v441 = vlaneseq
      %v442 = vand.u32 %v441, 127
      %443 = vset.pattern.permute.xlu0 0
      %444 = vperm.xlu0 %443, %v437
      %v445 = vpop.permute.xlu0 %444
      %446 = vset.pattern.permute.xlu0 0
      %447 = vperm.xlu0 %446, %v438
      %v448 = vpop.permute.xlu0 %447
      %449 = vset.pattern.permute.xlu0 0
      %450 = vperm.xlu0 %449, %v439
      %v451 = vpop.permute.xlu0 %450
      %452 = vset.pattern.permute.xlu0 0
      %453 = vperm.xlu0 %452, %v440
      %v454 = vpop.permute.xlu0 %453
      %vm455 = vcmp.eq.s32.totalorder %v445, %v442
      %vm456 = vcmp.eq.s32.totalorder %v448, %v442
      %vm457 = vcmp.eq.s32.totalorder %v451, %v442
      %vm458 = vcmp.eq.s32.totalorder %v454, %v442
      %v459 = vsel %vm455, 1, 0
      %v460 = vsel %vm456, 1, 0
      %v461 = vsel %vm457, 1, 0
      %v462 = vsel %vm458, 1, 0
      %v463 = vcvt.s32.f32 %v459
      %v464 = vcvt.s32.f32 %v460
      %v465 = vcvt.s32.f32 %v461
      %v466 = vcvt.s32.f32 %v462
      %v467 = vpack.c.bf16 %v464, %v463
      %v468 = vpack.c.bf16 %v466, %v465
      %v469 = vld [vmem:[%s2] sm:$0xf]
      %vm470 = vcmask 64512
      %v472 = vsel %vm470, %v467, 0
      %v475 = vsel %vm470, %v468, 0
      %vm477 = vcmask 1043456
      %v479 = vsel %vm477, %v469, 0
      %481 = vmatprep.subr.bf16.mxu0 0
      %482 = vmatpush1.bf16.msra.mxu0 0
      %483 = vmatprep.subr.bf16.mxu0 0
      %484 = vmatpush1.bf16.msra.mxu0 0
      %485 = vmatprep.subr.bf16.mxu0 0
      %486 = vmatpush1.bf16.msra.mxu0 0
      %487 = vmatprep.subr.bf16.mxu0 0
      %488 = vmatpush1.bf16.msra.mxu0 0
      %489 = vmatprep.subr.bf16.mxu0 0
      %490 = vmatpush1.bf16.msra.mxu0 0
      %491 = vmatprep.subr.bf16.mxu0 0
      %492 = vmatpush1.bf16.msra.mxu0 0
      %493 = vmatprep.subr.bf16.mxu0 0
      %494 = vmatpush1.bf16.msra.mxu0 0
      %495 = vmatprep.subr.bf16.mxu0 0
      %496 = vmatpush1.bf16.msra.mxu0 %v479
      %497 = vmatprep.subr.bf16.mxu0 0
      %498 = vmatpush2.bf16.msra.mxu0 0
      %499 = vmatprep.subr.bf16.mxu0 0
      %500 = vmatpush2.bf16.msra.mxu0 0
      %501 = vmatprep.subr.bf16.mxu0 0
      %502 = vmatpush2.bf16.msra.mxu0 0
      %503 = vmatprep.subr.bf16.mxu0 0
      %504 = vmatpush2.bf16.msra.mxu0 0
      %505 = vmatprep.subr.bf16.mxu0 0
      %506 = vmatpush2.bf16.msra.mxu0 0
      %507 = vmatprep.subr.bf16.mxu0 0
      %508 = vmatpush2.bf16.msra.mxu0 0
      %509 = vmatprep.subr.bf16.mxu0 0
      %510 = vmatpush2.bf16.msra.mxu0 0
      %511 = vmatprep.subr.bf16.mxu0 0
      %512 = vmatpush2.bf16.msra.mxu0 0
      %513 = vmatprep.mubr.bf16.mxu0 0
      %514 = vmatmul.mubr.bf16.gmra.mxu0 %v472
      %v515 = vpop.f32.mrf.mxu0
      %v516 = vadd.f32 0.0, %v515
      %v517 = vpop.f32.mrf.mxu0
      %v518 = vpop.f32.mrf.mxu0
      %v519 = vadd.f32 0.0, %v518
      %v520 = vpop.f32.mrf.mxu0
      %521 = vmatprep.mubr.bf16.mxu0 0
      %522 = vmatmul.mubr.bf16.gmra.mxu0 %v475
      %v523 = vpop.f32.mrf.mxu0
      %v524 = vadd.f32 0.0, %v523
      %v525 = vpop.f32.mrf.mxu0
      %v526 = vpop.f32.mrf.mxu0
      %v527 = vadd.f32 0.0, %v526
      %v528 = vpop.f32.mrf.mxu0
      %529 = vdwg.mxu0
      %v530 = vrot.slane %v516, 4
      %v531 = vrot.slane %v519, 4
      %v532 = vrot.slane %v524, 4
      %v533 = vrot.slane %v527, 4
      %vm534 = vcmp.lt.s32.totalorder %v433, 4
      %v535 = vsel %vm534, %v532, %v533
      %v536 = vsel %vm534, %v531, %v532
      %v537 = vsel %vm534, %v530, %v531
      %v538 = vsel %vm534, %v533, %v530
      %v539 = vadd.s32 %v433, 4294967292
      %v540 = vadd.s32 %v434, 4294967292
      %v541 = vadd.s32 %v435, 4294967292
      %v542 = vadd.s32 %v436, 4294967292
      %vm543 = vcmp.ge.s32.totalorder %v539, 0
      %vm544 = vcmp.ge.s32.totalorder %v540, 0
      %vm545 = vcmp.ge.s32.totalorder %v541, 0
      %vm546 = vcmp.ge.s32.totalorder %v542, 0
      %vm547 = vcmp.lt.s32.totalorder %v539, 32
      %vm548 = vcmp.lt.s32.totalorder %v540, 32
      %vm549 = vcmp.lt.s32.totalorder %v541, 32
      %vm550 = vcmp.lt.s32.totalorder %v542, 32
      %vm551 = vmand %vm543, %vm547
      %vm552 = vmand %vm544, %vm548
      %vm553 = vmand %vm545, %vm549
      %vm554 = vmand %vm546, %vm550
      %v555 = vsel %vm551, 1, 0
      %v556 = vsel %vm552, 1, 0
      %v557 = vsel %vm553, 1, 0
      %v558 = vsel %vm554, 1, 0
      %vm559 = vcmp.eq.s32.totalorder %v555, 1
      %vm560 = vcmp.eq.s32.totalorder %v556, 1
      %vm561 = vcmp.eq.s32.totalorder %v557, 1
      %vm562 = vcmp.eq.s32.totalorder %v558, 1
      %v563 = vsel %vm559, %v538, 0.0
      %v564 = vsel %vm560, %v537, 0.0
      %v565 = vsel %vm561, %v536, 0.0
      %v566 = vsel %vm562, %v535, 0.0
      %s567 = scalar_lea.vmem %s2, 4
      %v568 = vld [vmem:[%s567] sm:$0xf]
      %v570 = vsel %vm477, %v568, 0
      %572 = vmatprep.subr.bf16.mxu0 0
      %573 = vmatpush1.bf16.msra.mxu0 0
      %574 = vmatprep.subr.bf16.mxu0 0
      %575 = vmatpush1.bf16.msra.mxu0 0
      %576 = vmatprep.subr.bf16.mxu0 0
      %577 = vmatpush1.bf16.msra.mxu0 0
      %578 = vmatprep.subr.bf16.mxu0 0
      %579 = vmatpush1.bf16.msra.mxu0 0
      %580 = vmatprep.subr.bf16.mxu0 0
      %581 = vmatpush1.bf16.msra.mxu0 0
      %582 = vmatprep.subr.bf16.mxu0 0
      %583 = vmatpush1.bf16.msra.mxu0 0
      %584 = vmatprep.subr.bf16.mxu0 0
      %585 = vmatpush1.bf16.msra.mxu0 0
      %586 = vmatprep.subr.bf16.mxu0 0
      %587 = vmatpush1.bf16.msra.mxu0 %v570
      %588 = vmatprep.subr.bf16.mxu0 0
      %589 = vmatpush2.bf16.msra.mxu0 0
      %590 = vmatprep.subr.bf16.mxu0 0
      %591 = vmatpush2.bf16.msra.mxu0 0
      %592 = vmatprep.subr.bf16.mxu0 0
      %593 = vmatpush2.bf16.msra.mxu0 0
      %594 = vmatprep.subr.bf16.mxu0 0
      %595 = vmatpush2.bf16.msra.mxu0 0
      %596 = vmatprep.subr.bf16.mxu0 0
      %597 = vmatpush2.bf16.msra.mxu0 0
      %598 = vmatprep.subr.bf16.mxu0 0
      %599 = vmatpush2.bf16.msra.mxu0 0
      %600 = vmatprep.subr.bf16.mxu0 0
      %601 = vmatpush2.bf16.msra.mxu0 0
      %602 = vmatprep.subr.bf16.mxu0 0
      %603 = vmatpush2.bf16.msra.mxu0 0
      %604 = vmatprep.mubr.bf16.mxu0 0
      %605 = vmatmul.mubr.bf16.gmra.mxu0 %v472
      %v606 = vpop.f32.mrf.mxu0
      %v607 = vadd.f32 0.0, %v606
      %v608 = vpop.f32.mrf.mxu0
      %v609 = vpop.f32.mrf.mxu0
      %v610 = vadd.f32 0.0, %v609
      %v611 = vpop.f32.mrf.mxu0
      %612 = vmatprep.mubr.bf16.mxu0 0
      %613 = vmatmul.mubr.bf16.gmra.mxu0 %v475
      %v614 = vpop.f32.mrf.mxu0
      %v615 = vadd.f32 0.0, %v614
      %v616 = vpop.f32.mrf.mxu0
      %v617 = vpop.f32.mrf.mxu0
      %v618 = vadd.f32 0.0, %v617
      %v619 = vpop.f32.mrf.mxu0
      %620 = vdwg.mxu0
      %v621 = vrot.slane %v607, 5
      %v622 = vrot.slane %v610, 5
      %v623 = vrot.slane %v615, 5
      %v624 = vrot.slane %v618, 5
      %vm625 = vcmp.lt.s32.totalorder %v433, 3
      %v626 = vsel %vm625, %v623, %v624
      %v627 = vsel %vm625, %v622, %v623
      %v628 = vsel %vm625, %v621, %v622
      %v629 = vsel %vm625, %v624, %v621
      %v630 = vadd.s32 %v433, 4294967293
      %v631 = vadd.s32 %v434, 4294967293
      %v632 = vadd.s32 %v435, 4294967293
      %v633 = vadd.s32 %v436, 4294967293
      %vm634 = vcmp.ge.s32.totalorder %v630, 0
      %vm635 = vcmp.ge.s32.totalorder %v631, 0
      %vm636 = vcmp.ge.s32.totalorder %v632, 0
      %vm637 = vcmp.ge.s32.totalorder %v633, 0
      %vm638 = vcmp.lt.s32.totalorder %v630, 32
      %vm639 = vcmp.lt.s32.totalorder %v631, 32
      %vm640 = vcmp.lt.s32.totalorder %v632, 32
      %vm641 = vcmp.lt.s32.totalorder %v633, 32
      %vm642 = vmand %vm634, %vm638
      %vm643 = vmand %vm635, %vm639
      %vm644 = vmand %vm636, %vm640
      %vm645 = vmand %vm637, %vm641
      %v646 = vsel %vm642, 1, 0
      %v647 = vsel %vm643, 1, 0
      %v648 = vsel %vm644, 1, 0
      %v649 = vsel %vm645, 1, 0
      %vm650 = vcmp.eq.s32.totalorder %v646, 1
      %vm651 = vcmp.eq.s32.totalorder %v647, 1
      %vm652 = vcmp.eq.s32.totalorder %v648, 1
      %vm653 = vcmp.eq.s32.totalorder %v649, 1
      %v654 = vsel %vm650, %v629, 0.0
      %v655 = vsel %vm651, %v628, 0.0
      %v656 = vsel %vm652, %v627, 0.0
      %v657 = vsel %vm653, %v626, 0.0
      %v658 = vadd.f32 %v563, %v654
      %v659 = vadd.f32 %v564, %v655
      %v660 = vadd.f32 %v565, %v656
      %v661 = vadd.f32 %v566, %v657
      %s662 = scalar_lea.vmem %s2, 8
      %v663 = vld [vmem:[%s662] sm:$0xf]
      %v665 = vsel %vm477, %v663, 0
      %667 = vmatprep.subr.bf16.mxu0 0
      %668 = vmatpush1.bf16.msra.mxu0 0
      %669 = vmatprep.subr.bf16.mxu0 0
      %670 = vmatpush1.bf16.msra.mxu0 0
      %671 = vmatprep.subr.bf16.mxu0 0
      %672 = vmatpush1.bf16.msra.mxu0 0
      %673 = vmatprep.subr.bf16.mxu0 0
      %674 = vmatpush1.bf16.msra.mxu0 0
      %675 = vmatprep.subr.bf16.mxu0 0
      %676 = vmatpush1.bf16.msra.mxu0 0
      %677 = vmatprep.subr.bf16.mxu0 0
      %678 = vmatpush1.bf16.msra.mxu0 0
      %679 = vmatprep.subr.bf16.mxu0 0
      %680 = vmatpush1.bf16.msra.mxu0 0
      %681 = vmatprep.subr.bf16.mxu0 0
      %682 = vmatpush1.bf16.msra.mxu0 %v665
      %683 = vmatprep.subr.bf16.mxu0 0
      %684 = vmatpush2.bf16.msra.mxu0 0
      %685 = vmatprep.subr.bf16.mxu0 0
      %686 = vmatpush2.bf16.msra.mxu0 0
      %687 = vmatprep.subr.bf16.mxu0 0
      %688 = vmatpush2.bf16.msra.mxu0 0
      %689 = vmatprep.subr.bf16.mxu0 0
      %690 = vmatpush2.bf16.msra.mxu0 0
      %691 = vmatprep.subr.bf16.mxu0 0
      %692 = vmatpush2.bf16.msra.mxu0 0
      %693 = vmatprep.subr.bf16.mxu0 0
      %694 = vmatpush2.bf16.msra.mxu0 0
      %695 = vmatprep.subr.bf16.mxu0 0
      %696 = vmatpush2.bf16.msra.mxu0 0
      %697 = vmatprep.subr.bf16.mxu0 0
      %698 = vmatpush2.bf16.msra.mxu0 0
      %699 = vmatprep.mubr.bf16.mxu0 0
      %700 = vmatmul.mubr.bf16.gmra.mxu0 %v472
      %v701 = vpop.f32.mrf.mxu0
      %v702 = vadd.f32 0.0, %v701
      %v703 = vpop.f32.mrf.mxu0
      %v704 = vpop.f32.mrf.mxu0
      %v705 = vadd.f32 0.0, %v704
      %v706 = vpop.f32.mrf.mxu0
      %707 = vmatprep.mubr.bf16.mxu0 0
      %708 = vmatmul.mubr.bf16.gmra.mxu0 %v475
      %v709 = vpop.f32.mrf.mxu0
      %v710 = vadd.f32 0.0, %v709
      %v711 = vpop.f32.mrf.mxu0
      %v712 = vpop.f32.mrf.mxu0
      %v713 = vadd.f32 0.0, %v712
      %v714 = vpop.f32.mrf.mxu0
      %715 = vdwg.mxu0
      %v716 = vrot.slane %v702, 6
      %v717 = vrot.slane %v705, 6
      %v718 = vrot.slane %v710, 6
      %v719 = vrot.slane %v713, 6
      %vm720 = vcmp.lt.s32.totalorder %v433, 2
      %v721 = vsel %vm720, %v718, %v719
      %v722 = vsel %vm720, %v717, %v718
      %v723 = vsel %vm720, %v716, %v717
      %v724 = vsel %vm720, %v719, %v716
      %v725 = vadd.s32 %v433, 4294967294
      %v726 = vadd.s32 %v434, 4294967294
      %v727 = vadd.s32 %v435, 4294967294
      %v728 = vadd.s32 %v436, 4294967294
      %vm729 = vcmp.ge.s32.totalorder %v725, 0
      %vm730 = vcmp.ge.s32.totalorder %v726, 0
      %vm731 = vcmp.ge.s32.totalorder %v727, 0
      %vm732 = vcmp.ge.s32.totalorder %v728, 0
      %vm733 = vcmp.lt.s32.totalorder %v725, 32
      %vm734 = vcmp.lt.s32.totalorder %v726, 32
      %vm735 = vcmp.lt.s32.totalorder %v727, 32
      %vm736 = vcmp.lt.s32.totalorder %v728, 32
      %vm737 = vmand %vm729, %vm733
      %vm738 = vmand %vm730, %vm734
      %vm739 = vmand %vm731, %vm735
      %vm740 = vmand %vm732, %vm736
      %v741 = vsel %vm737, 1, 0
      %v742 = vsel %vm738, 1, 0
      %v743 = vsel %vm739, 1, 0
      %v744 = vsel %vm740, 1, 0
      %vm745 = vcmp.eq.s32.totalorder %v741, 1
      %vm746 = vcmp.eq.s32.totalorder %v742, 1
      %vm747 = vcmp.eq.s32.totalorder %v743, 1
      %vm748 = vcmp.eq.s32.totalorder %v744, 1
      %v749 = vsel %vm745, %v724, 0.0
      %v750 = vsel %vm746, %v723, 0.0
      %v751 = vsel %vm747, %v722, 0.0
      %v752 = vsel %vm748, %v721, 0.0
      %v753 = vadd.f32 %v658, %v749
      %v754 = vadd.f32 %v659, %v750
      %v755 = vadd.f32 %v660, %v751
      %v756 = vadd.f32 %v661, %v752
      %s757 = scalar_lea.vmem %s2, 12
      %v758 = vld [vmem:[%s757] sm:$0xf]
      %v760 = vsel %vm477, %v758, 0
      %762 = vmatprep.subr.bf16.mxu0 0
      %763 = vmatpush1.bf16.msra.mxu0 0
      %764 = vmatprep.subr.bf16.mxu0 0
      %765 = vmatpush1.bf16.msra.mxu0 0
      %766 = vmatprep.subr.bf16.mxu0 0
      %767 = vmatpush1.bf16.msra.mxu0 0
      %768 = vmatprep.subr.bf16.mxu0 0
      %769 = vmatpush1.bf16.msra.mxu0 0
      %770 = vmatprep.subr.bf16.mxu0 0
      %771 = vmatpush1.bf16.msra.mxu0 0
      %772 = vmatprep.subr.bf16.mxu0 0
      %773 = vmatpush1.bf16.msra.mxu0 0
      %774 = vmatprep.subr.bf16.mxu0 0
      %775 = vmatpush1.bf16.msra.mxu0 0
      %776 = vmatprep.subr.bf16.mxu0 0
      %777 = vmatpush1.bf16.msra.mxu0 %v760
      %778 = vmatprep.subr.bf16.mxu0 0
      %779 = vmatpush2.bf16.msra.mxu0 0
      %780 = vmatprep.subr.bf16.mxu0 0
      %781 = vmatpush2.bf16.msra.mxu0 0
      %782 = vmatprep.subr.bf16.mxu0 0
      %783 = vmatpush2.bf16.msra.mxu0 0
      %784 = vmatprep.subr.bf16.mxu0 0
      %785 = vmatpush2.bf16.msra.mxu0 0
      %786 = vmatprep.subr.bf16.mxu0 0
      %787 = vmatpush2.bf16.msra.mxu0 0
      %788 = vmatprep.subr.bf16.mxu0 0
      %789 = vmatpush2.bf16.msra.mxu0 0
      %790 = vmatprep.subr.bf16.mxu0 0
      %791 = vmatpush2.bf16.msra.mxu0 0
      %792 = vmatprep.subr.bf16.mxu0 0
      %793 = vmatpush2.bf16.msra.mxu0 0
      %794 = vmatprep.mubr.bf16.mxu0 0
      %795 = vmatmul.mubr.bf16.gmra.mxu0 %v472
      %v796 = vpop.f32.mrf.mxu0
      %v797 = vadd.f32 0.0, %v796
      %v798 = vpop.f32.mrf.mxu0
      %v799 = vpop.f32.mrf.mxu0
      %v800 = vadd.f32 0.0, %v799
      %v801 = vpop.f32.mrf.mxu0
      %802 = vmatprep.mubr.bf16.mxu0 0
      %803 = vmatmul.mubr.bf16.gmra.mxu0 %v475
      %v804 = vpop.f32.mrf.mxu0
      %v805 = vadd.f32 0.0, %v804
      %v806 = vpop.f32.mrf.mxu0
      %v807 = vpop.f32.mrf.mxu0
      %v808 = vadd.f32 0.0, %v807
      %v809 = vpop.f32.mrf.mxu0
      %810 = vdwg.mxu0
      %v811 = vrot.slane %v797, 7
      %v812 = vrot.slane %v800, 7
      %v813 = vrot.slane %v805, 7
      %v814 = vrot.slane %v808, 7
      %vm815 = vcmp.lt.s32.totalorder %v433, 1
      %v816 = vsel %vm815, %v813, %v814
      %v817 = vsel %vm815, %v812, %v813
      %v818 = vsel %vm815, %v811, %v812
      %v819 = vsel %vm815, %v814, %v811
      %v820 = vadd.s32 %v433, 4294967295
      %v821 = vadd.s32 %v434, 4294967295
      %v822 = vadd.s32 %v435, 4294967295
      %v823 = vadd.s32 %v436, 4294967295
      %vm824 = vcmp.ge.s32.totalorder %v820, 0
      %vm825 = vcmp.ge.s32.totalorder %v821, 0
      %vm826 = vcmp.ge.s32.totalorder %v822, 0
      %vm827 = vcmp.ge.s32.totalorder %v823, 0
      %vm828 = vcmp.lt.s32.totalorder %v820, 32
      %vm829 = vcmp.lt.s32.totalorder %v821, 32
      %vm830 = vcmp.lt.s32.totalorder %v822, 32
      %vm831 = vcmp.lt.s32.totalorder %v823, 32
      %vm832 = vmand %vm824, %vm828
      %vm833 = vmand %vm825, %vm829
      %vm834 = vmand %vm826, %vm830
      %vm835 = vmand %vm827, %vm831
      %v836 = vsel %vm832, 1, 0
      %v837 = vsel %vm833, 1, 0
      %v838 = vsel %vm834, 1, 0
      %v839 = vsel %vm835, 1, 0
      %vm840 = vcmp.eq.s32.totalorder %v836, 1
      %vm841 = vcmp.eq.s32.totalorder %v837, 1
      %vm842 = vcmp.eq.s32.totalorder %v838, 1
      %vm843 = vcmp.eq.s32.totalorder %v839, 1
      %v844 = vsel %vm840, %v819, 0.0
      %v845 = vsel %vm841, %v818, 0.0
      %v846 = vsel %vm842, %v817, 0.0
      %v847 = vsel %vm843, %v816, 0.0
      %v848 = vadd.f32 %v753, %v844
      %v849 = vadd.f32 %v754, %v845
      %v850 = vadd.f32 %v755, %v846
      %v851 = vadd.f32 %v756, %v847
      %s852 = scalar_lea.vmem %s2, 16
      %v853 = vld [vmem:[%s852] sm:$0xf]
      %v855 = vsel %vm477, %v853, 0
      %857 = vmatprep.subr.bf16.mxu0 0
      %858 = vmatpush1.bf16.msra.mxu0 0
      %859 = vmatprep.subr.bf16.mxu0 0
      %860 = vmatpush1.bf16.msra.mxu0 0
      %861 = vmatprep.subr.bf16.mxu0 0
      %862 = vmatpush1.bf16.msra.mxu0 0
      %863 = vmatprep.subr.bf16.mxu0 0
      %864 = vmatpush1.bf16.msra.mxu0 0
      %865 = vmatprep.subr.bf16.mxu0 0
      %866 = vmatpush1.bf16.msra.mxu0 0
      %867 = vmatprep.subr.bf16.mxu0 0
      %868 = vmatpush1.bf16.msra.mxu0 0
      %869 = vmatprep.subr.bf16.mxu0 0
      %870 = vmatpush1.bf16.msra.mxu0 0
      %871 = vmatprep.subr.bf16.mxu0 0
      %872 = vmatpush1.bf16.msra.mxu0 %v855
      %873 = vmatprep.subr.bf16.mxu0 0
      %874 = vmatpush2.bf16.msra.mxu0 0
      %875 = vmatprep.subr.bf16.mxu0 0
      %876 = vmatpush2.bf16.msra.mxu0 0
      %877 = vmatprep.subr.bf16.mxu0 0
      %878 = vmatpush2.bf16.msra.mxu0 0
      %879 = vmatprep.subr.bf16.mxu0 0
      %880 = vmatpush2.bf16.msra.mxu0 0
      %881 = vmatprep.subr.bf16.mxu0 0
      %882 = vmatpush2.bf16.msra.mxu0 0
      %883 = vmatprep.subr.bf16.mxu0 0
      %884 = vmatpush2.bf16.msra.mxu0 0
      %885 = vmatprep.subr.bf16.mxu0 0
      %886 = vmatpush2.bf16.msra.mxu0 0
      %887 = vmatprep.subr.bf16.mxu0 0
      %888 = vmatpush2.bf16.msra.mxu0 0
      %889 = vmatprep.mubr.bf16.mxu0 0
      %890 = vmatmul.mubr.bf16.gmra.mxu0 %v472
      %v891 = vpop.f32.mrf.mxu0
      %v892 = vadd.f32 0.0, %v891
      %v893 = vpop.f32.mrf.mxu0
      %v894 = vpop.f32.mrf.mxu0
      %v895 = vadd.f32 0.0, %v894
      %v896 = vpop.f32.mrf.mxu0
      %897 = vmatprep.mubr.bf16.mxu0 0
      %898 = vmatmul.mubr.bf16.gmra.mxu0 %v475
      %v899 = vpop.f32.mrf.mxu0
      %v900 = vadd.f32 0.0, %v899
      %v901 = vpop.f32.mrf.mxu0
      %v902 = vpop.f32.mrf.mxu0
      %v903 = vadd.f32 0.0, %v902
      %v904 = vpop.f32.mrf.mxu0
      %905 = vdwg.mxu0
      %v906 = vadd.f32 %v848, %v892
      %v907 = vadd.f32 %v849, %v895
      %v908 = vadd.f32 %v850, %v900
      %v909 = vadd.f32 %v851, %v903
      %s910 = scalar_lea.vmem %s2, 20
      %v911 = vld [vmem:[%s910] sm:$0xf]
      %v913 = vsel %vm477, %v911, 0
      %915 = vmatprep.subr.bf16.mxu0 0
      %916 = vmatpush1.bf16.msra.mxu0 0
      %917 = vmatprep.subr.bf16.mxu0 0
      %918 = vmatpush1.bf16.msra.mxu0 0
      %919 = vmatprep.subr.bf16.mxu0 0
      %920 = vmatpush1.bf16.msra.mxu0 0
      %921 = vmatprep.subr.bf16.mxu0 0
      %922 = vmatpush1.bf16.msra.mxu0 0
      %923 = vmatprep.subr.bf16.mxu0 0
      %924 = vmatpush1.bf16.msra.mxu0 0
      %925 = vmatprep.subr.bf16.mxu0 0
      %926 = vmatpush1.bf16.msra.mxu0 0
      %927 = vmatprep.subr.bf16.mxu0 0
      %928 = vmatpush1.bf16.msra.mxu0 0
      %929 = vmatprep.subr.bf16.mxu0 0
      %930 = vmatpush1.bf16.msra.mxu0 %v913
      %931 = vmatprep.subr.bf16.mxu0 0
      %932 = vmatpush2.bf16.msra.mxu0 0
      %933 = vmatprep.subr.bf16.mxu0 0
      %934 = vmatpush2.bf16.msra.mxu0 0
      %935 = vmatprep.subr.bf16.mxu0 0
      %936 = vmatpush2.bf16.msra.mxu0 0
      %937 = vmatprep.subr.bf16.mxu0 0
      %938 = vmatpush2.bf16.msra.mxu0 0
      %939 = vmatprep.subr.bf16.mxu0 0
      %940 = vmatpush2.bf16.msra.mxu0 0
      %941 = vmatprep.subr.bf16.mxu0 0
      %942 = vmatpush2.bf16.msra.mxu0 0
      %943 = vmatprep.subr.bf16.mxu0 0
      %944 = vmatpush2.bf16.msra.mxu0 0
      %945 = vmatprep.subr.bf16.mxu0 0
      %946 = vmatpush2.bf16.msra.mxu0 0
      %947 = vmatprep.mubr.bf16.mxu0 0
      %948 = vmatmul.mubr.bf16.gmra.mxu0 %v472
      %v949 = vpop.f32.mrf.mxu0
      %v950 = vadd.f32 0.0, %v949
      %v951 = vpop.f32.mrf.mxu0
      %v952 = vpop.f32.mrf.mxu0
      %v953 = vadd.f32 0.0, %v952
      %v954 = vpop.f32.mrf.mxu0
      %955 = vmatprep.mubr.bf16.mxu0 0
      %956 = vmatmul.mubr.bf16.gmra.mxu0 %v475
      %v957 = vpop.f32.mrf.mxu0
      %v958 = vadd.f32 0.0, %v957
      %v959 = vpop.f32.mrf.mxu0
      %v960 = vpop.f32.mrf.mxu0
      %v961 = vadd.f32 0.0, %v960
      %v962 = vpop.f32.mrf.mxu0
      %963 = vdwg.mxu0
      %v964 = vrot.slane %v950, 1
      %v965 = vrot.slane %v953, 1
      %v966 = vrot.slane %v958, 1
      %v967 = vrot.slane %v961, 1
      %vm968 = vcmp.lt.s32.totalorder %v433, 7
      %v969 = vsel %vm968, %v966, %v967
      %v970 = vsel %vm968, %v965, %v966
      %v971 = vsel %vm968, %v964, %v965
      %v972 = vsel %vm968, %v967, %v964
      %v973 = vadd.s32 %v433, 1
      %v974 = vadd.s32 %v434, 1
      %v975 = vadd.s32 %v435, 1
      %v976 = vadd.s32 %v436, 1
      %vm977 = vcmp.ge.s32.totalorder %v973, 0
      %vm978 = vcmp.ge.s32.totalorder %v974, 0
      %vm979 = vcmp.ge.s32.totalorder %v975, 0
      %vm980 = vcmp.ge.s32.totalorder %v976, 0
      %vm981 = vcmp.lt.s32.totalorder %v973, 32
      %vm982 = vcmp.lt.s32.totalorder %v974, 32
      %vm983 = vcmp.lt.s32.totalorder %v975, 32
      %vm984 = vcmp.lt.s32.totalorder %v976, 32
      %vm985 = vmand %vm977, %vm981
      %vm986 = vmand %vm978, %vm982
      %vm987 = vmand %vm979, %vm983
      %vm988 = vmand %vm980, %vm984
      %v989 = vsel %vm985, 1, 0
      %v990 = vsel %vm986, 1, 0
      %v991 = vsel %vm987, 1, 0
      %v992 = vsel %vm988, 1, 0
      %vm993 = vcmp.eq.s32.totalorder %v989, 1
      %vm994 = vcmp.eq.s32.totalorder %v990, 1
      %vm995 = vcmp.eq.s32.totalorder %v991, 1
      %vm996 = vcmp.eq.s32.totalorder %v992, 1
      %v997 = vsel %vm993, %v971, 0.0
      %v998 = vsel %vm994, %v970, 0.0
      %v999 = vsel %vm995, %v969, 0.0
      %v1000 = vsel %vm996, %v972, 0.0
      %v1001 = vadd.f32 %v906, %v997
      %v1002 = vadd.f32 %v907, %v998
      %v1003 = vadd.f32 %v908, %v999
      %v1004 = vadd.f32 %v909, %v1000
      %s1005 = scalar_lea.vmem %s2, 24
      %v1006 = vld [vmem:[%s1005] sm:$0xf]
      %v1008 = vsel %vm477, %v1006, 0
      %1010 = vmatprep.subr.bf16.mxu0 0
      %1011 = vmatpush1.bf16.msra.mxu0 0
      %1012 = vmatprep.subr.bf16.mxu0 0
      %1013 = vmatpush1.bf16.msra.mxu0 0
      %1014 = vmatprep.subr.bf16.mxu0 0
      %1015 = vmatpush1.bf16.msra.mxu0 0
      %1016 = vmatprep.subr.bf16.mxu0 0
      %1017 = vmatpush1.bf16.msra.mxu0 0
      %1018 = vmatprep.subr.bf16.mxu0 0
      %1019 = vmatpush1.bf16.msra.mxu0 0
      %1020 = vmatprep.subr.bf16.mxu0 0
      %1021 = vmatpush1.bf16.msra.mxu0 0
      %1022 = vmatprep.subr.bf16.mxu0 0
      %1023 = vmatpush1.bf16.msra.mxu0 0
      %1024 = vmatprep.subr.bf16.mxu0 0
      %1025 = vmatpush1.bf16.msra.mxu0 %v1008
      %1026 = vmatprep.subr.bf16.mxu0 0
      %1027 = vmatpush2.bf16.msra.mxu0 0
      %1028 = vmatprep.subr.bf16.mxu0 0
      %1029 = vmatpush2.bf16.msra.mxu0 0
      %1030 = vmatprep.subr.bf16.mxu0 0
      %1031 = vmatpush2.bf16.msra.mxu0 0
      %1032 = vmatprep.subr.bf16.mxu0 0
      %1033 = vmatpush2.bf16.msra.mxu0 0
      %1034 = vmatprep.subr.bf16.mxu0 0
      %1035 = vmatpush2.bf16.msra.mxu0 0
      %1036 = vmatprep.subr.bf16.mxu0 0
      %1037 = vmatpush2.bf16.msra.mxu0 0
      %1038 = vmatprep.subr.bf16.mxu0 0
      %1039 = vmatpush2.bf16.msra.mxu0 0
      %1040 = vmatprep.subr.bf16.mxu0 0
      %1041 = vmatpush2.bf16.msra.mxu0 0
      %1042 = vmatprep.mubr.bf16.mxu0 0
      %1043 = vmatmul.mubr.bf16.gmra.mxu0 %v472
      %v1044 = vpop.f32.mrf.mxu0
      %v1045 = vadd.f32 0.0, %v1044
      %v1046 = vpop.f32.mrf.mxu0
      %v1047 = vpop.f32.mrf.mxu0
      %v1048 = vadd.f32 0.0, %v1047
      %v1049 = vpop.f32.mrf.mxu0
      %1050 = vmatprep.mubr.bf16.mxu0 0
      %1051 = vmatmul.mubr.bf16.gmra.mxu0 %v475
      %v1052 = vpop.f32.mrf.mxu0
      %v1053 = vadd.f32 0.0, %v1052
      %v1054 = vpop.f32.mrf.mxu0
      %v1055 = vpop.f32.mrf.mxu0
      %v1056 = vadd.f32 0.0, %v1055
      %v1057 = vpop.f32.mrf.mxu0
      %1058 = vdwg.mxu0
      %v1059 = vrot.slane %v1045, 2
      %v1060 = vrot.slane %v1048, 2
      %v1061 = vrot.slane %v1053, 2
      %v1062 = vrot.slane %v1056, 2
      %vm1063 = vcmp.lt.s32.totalorder %v433, 6
      %v1064 = vsel %vm1063, %v1061, %v1062
      %v1065 = vsel %vm1063, %v1060, %v1061
      %v1066 = vsel %vm1063, %v1059, %v1060
      %v1067 = vsel %vm1063, %v1062, %v1059
      %v1068 = vadd.s32 %v433, 2
      %v1069 = vadd.s32 %v434, 2
      %v1070 = vadd.s32 %v435, 2
      %v1071 = vadd.s32 %v436, 2
      %vm1072 = vcmp.ge.s32.totalorder %v1068, 0
      %vm1073 = vcmp.ge.s32.totalorder %v1069, 0
      %vm1074 = vcmp.ge.s32.totalorder %v1070, 0
      %vm1075 = vcmp.ge.s32.totalorder %v1071, 0
      %vm1076 = vcmp.lt.s32.totalorder %v1068, 32
      %vm1077 = vcmp.lt.s32.totalorder %v1069, 32
      %vm1078 = vcmp.lt.s32.totalorder %v1070, 32
      %vm1079 = vcmp.lt.s32.totalorder %v1071, 32
      %vm1080 = vmand %vm1072, %vm1076
      %vm1081 = vmand %vm1073, %vm1077
      %vm1082 = vmand %vm1074, %vm1078
      %vm1083 = vmand %vm1075, %vm1079
      %v1084 = vsel %vm1080, 1, 0
      %v1085 = vsel %vm1081, 1, 0
      %v1086 = vsel %vm1082, 1, 0
      %v1087 = vsel %vm1083, 1, 0
      %vm1088 = vcmp.eq.s32.totalorder %v1084, 1
      %vm1089 = vcmp.eq.s32.totalorder %v1085, 1
      %vm1090 = vcmp.eq.s32.totalorder %v1086, 1
      %vm1091 = vcmp.eq.s32.totalorder %v1087, 1
      %v1092 = vsel %vm1088, %v1066, 0.0
      %v1093 = vsel %vm1089, %v1065, 0.0
      %v1094 = vsel %vm1090, %v1064, 0.0
      %v1095 = vsel %vm1091, %v1067, 0.0
      %v1096 = vadd.f32 %v1001, %v1092
      %v1097 = vadd.f32 %v1002, %v1093
      %v1098 = vadd.f32 %v1003, %v1094
      %v1099 = vadd.f32 %v1004, %v1095
      %s1100 = scalar_lea.vmem %s2, 28
      %v1101 = vld [vmem:[%s1100] sm:$0xf]
      %v1103 = vsel %vm477, %v1101, 0
      %1105 = vmatprep.subr.bf16.mxu0 0
      %1106 = vmatpush1.bf16.msra.mxu0 0
      %1107 = vmatprep.subr.bf16.mxu0 0
      %1108 = vmatpush1.bf16.msra.mxu0 0
      %1109 = vmatprep.subr.bf16.mxu0 0
      %1110 = vmatpush1.bf16.msra.mxu0 0
      %1111 = vmatprep.subr.bf16.mxu0 0
      %1112 = vmatpush1.bf16.msra.mxu0 0
      %1113 = vmatprep.subr.bf16.mxu0 0
      %1114 = vmatpush1.bf16.msra.mxu0 0
      %1115 = vmatprep.subr.bf16.mxu0 0
      %1116 = vmatpush1.bf16.msra.mxu0 0
      %1117 = vmatprep.subr.bf16.mxu0 0
      %1118 = vmatpush1.bf16.msra.mxu0 0
      %1119 = vmatprep.subr.bf16.mxu0 0
      %1120 = vmatpush1.bf16.msra.mxu0 %v1103
      %1121 = vmatprep.subr.bf16.mxu0 0
      %1122 = vmatpush2.bf16.msra.mxu0 0
      %1123 = vmatprep.subr.bf16.mxu0 0
      %1124 = vmatpush2.bf16.msra.mxu0 0
      %1125 = vmatprep.subr.bf16.mxu0 0
      %1126 = vmatpush2.bf16.msra.mxu0 0
      %1127 = vmatprep.subr.bf16.mxu0 0
      %1128 = vmatpush2.bf16.msra.mxu0 0
      %1129 = vmatprep.subr.bf16.mxu0 0
      %1130 = vmatpush2.bf16.msra.mxu0 0
      %1131 = vmatprep.subr.bf16.mxu0 0
      %1132 = vmatpush2.bf16.msra.mxu0 0
      %1133 = vmatprep.subr.bf16.mxu0 0
      %1134 = vmatpush2.bf16.msra.mxu0 0
      %1135 = vmatprep.subr.bf16.mxu0 0
      %1136 = vmatpush2.bf16.msra.mxu0 0
      %1137 = vmatprep.mubr.bf16.mxu0 0
      %1138 = vmatmul.mubr.bf16.gmra.mxu0 %v472
      %v1139 = vpop.f32.mrf.mxu0
      %v1140 = vadd.f32 0.0, %v1139
      %v1141 = vpop.f32.mrf.mxu0
      %v1142 = vpop.f32.mrf.mxu0
      %v1143 = vadd.f32 0.0, %v1142
      %v1144 = vpop.f32.mrf.mxu0
      %1145 = vmatprep.mubr.bf16.mxu0 0
      %1146 = vmatmul.mubr.bf16.gmra.mxu0 %v475
      %v1147 = vpop.f32.mrf.mxu0
      %v1148 = vadd.f32 0.0, %v1147
      %v1149 = vpop.f32.mrf.mxu0
      %v1150 = vpop.f32.mrf.mxu0
      %v1151 = vadd.f32 0.0, %v1150
      %v1152 = vpop.f32.mrf.mxu0
      %1153 = vdwg.mxu0
      %v1154 = vrot.slane %v1140, 3
      %v1155 = vrot.slane %v1143, 3
      %v1156 = vrot.slane %v1148, 3
      %v1157 = vrot.slane %v1151, 3
      %vm1158 = vcmp.lt.s32.totalorder %v433, 5
      %v1159 = vsel %vm1158, %v1156, %v1157
      %v1160 = vsel %vm1158, %v1155, %v1156
      %v1161 = vsel %vm1158, %v1154, %v1155
      %v1162 = vsel %vm1158, %v1157, %v1154
      %v1163 = vadd.s32 %v433, 3
      %v1164 = vadd.s32 %v434, 3
      %v1165 = vadd.s32 %v435, 3
      %v1166 = vadd.s32 %v436, 3
      %vm1167 = vcmp.ge.s32.totalorder %v1163, 0
      %vm1168 = vcmp.ge.s32.totalorder %v1164, 0
      %vm1169 = vcmp.ge.s32.totalorder %v1165, 0
      %vm1170 = vcmp.ge.s32.totalorder %v1166, 0
      %vm1171 = vcmp.lt.s32.totalorder %v1163, 32
      %vm1172 = vcmp.lt.s32.totalorder %v1164, 32
      %vm1173 = vcmp.lt.s32.totalorder %v1165, 32
      %vm1174 = vcmp.lt.s32.totalorder %v1166, 32
      %vm1175 = vmand %vm1167, %vm1171
      %vm1176 = vmand %vm1168, %vm1172
      %vm1177 = vmand %vm1169, %vm1173
      %vm1178 = vmand %vm1170, %vm1174
      %v1179 = vsel %vm1175, 1, 0
      %v1180 = vsel %vm1176, 1, 0
      %v1181 = vsel %vm1177, 1, 0
      %v1182 = vsel %vm1178, 1, 0
      %vm1183 = vcmp.eq.s32.totalorder %v1179, 1
      %vm1184 = vcmp.eq.s32.totalorder %v1180, 1
      %vm1185 = vcmp.eq.s32.totalorder %v1181, 1
      %vm1186 = vcmp.eq.s32.totalorder %v1182, 1
      %v1187 = vsel %vm1183, %v1161, 0.0
      %v1188 = vsel %vm1184, %v1160, 0.0
      %v1189 = vsel %vm1185, %v1159, 0.0
      %v1190 = vsel %vm1186, %v1162, 0.0
      %v1191 = vadd.f32 %v1096, %v1187
      %v1192 = vadd.f32 %v1097, %v1188
      %v1193 = vadd.f32 %v1098, %v1189
      %v1194 = vadd.f32 %v1099, %v1190
      %s1195 = scalar_lea.vmem %s2, 32
      %v1196 = vld [vmem:[%s1195] sm:$0xf]
      %v1198 = vsel %vm477, %v1196, 0
      %1200 = vmatprep.subr.bf16.mxu0 0
      %1201 = vmatpush1.bf16.msra.mxu0 0
      %1202 = vmatprep.subr.bf16.mxu0 0
      %1203 = vmatpush1.bf16.msra.mxu0 0
      %1204 = vmatprep.subr.bf16.mxu0 0
      %1205 = vmatpush1.bf16.msra.mxu0 0
      %1206 = vmatprep.subr.bf16.mxu0 0
      %1207 = vmatpush1.bf16.msra.mxu0 0
      %1208 = vmatprep.subr.bf16.mxu0 0
      %1209 = vmatpush1.bf16.msra.mxu0 0
      %1210 = vmatprep.subr.bf16.mxu0 0
      %1211 = vmatpush1.bf16.msra.mxu0 0
      %1212 = vmatprep.subr.bf16.mxu0 0
      %1213 = vmatpush1.bf16.msra.mxu0 0
      %1214 = vmatprep.subr.bf16.mxu0 0
      %1215 = vmatpush1.bf16.msra.mxu0 %v1198
      %1216 = vmatprep.subr.bf16.mxu0 0
      %1217 = vmatpush2.bf16.msra.mxu0 0
      %1218 = vmatprep.subr.bf16.mxu0 0
      %1219 = vmatpush2.bf16.msra.mxu0 0
      %1220 = vmatprep.subr.bf16.mxu0 0
      %1221 = vmatpush2.bf16.msra.mxu0 0
      %1222 = vmatprep.subr.bf16.mxu0 0
      %1223 = vmatpush2.bf16.msra.mxu0 0
      %1224 = vmatprep.subr.bf16.mxu0 0
      %1225 = vmatpush2.bf16.msra.mxu0 0
      %1226 = vmatprep.subr.bf16.mxu0 0
      %1227 = vmatpush2.bf16.msra.mxu0 0
      %1228 = vmatprep.subr.bf16.mxu0 0
      %1229 = vmatpush2.bf16.msra.mxu0 0
      %1230 = vmatprep.subr.bf16.mxu0 0
      %1231 = vmatpush2.bf16.msra.mxu0 0
      %1232 = vmatprep.mubr.bf16.mxu0 0
      %1233 = vmatmul.mubr.bf16.gmra.mxu0 %v472
      %v1234 = vpop.f32.mrf.mxu0
      %v1235 = vadd.f32 0.0, %v1234
      %v1236 = vpop.f32.mrf.mxu0
      %v1237 = vpop.f32.mrf.mxu0
      %v1238 = vadd.f32 0.0, %v1237
      %v1239 = vpop.f32.mrf.mxu0
      %1240 = vmatprep.mubr.bf16.mxu0 0
      %1241 = vmatmul.mubr.bf16.gmra.mxu0 %v475
      %v1242 = vpop.f32.mrf.mxu0
      %v1243 = vadd.f32 0.0, %v1242
      %v1244 = vpop.f32.mrf.mxu0
      %v1245 = vpop.f32.mrf.mxu0
      %v1246 = vadd.f32 0.0, %v1245
      %v1247 = vpop.f32.mrf.mxu0
      %1248 = vdwg.mxu0
      %v1249 = vrot.slane %v1235, 4
      %v1250 = vrot.slane %v1238, 4
      %v1251 = vrot.slane %v1243, 4
      %v1252 = vrot.slane %v1246, 4
      %v1253 = vsel %vm534, %v1251, %v1252
      %v1254 = vsel %vm534, %v1250, %v1251
      %v1255 = vsel %vm534, %v1249, %v1250
      %v1256 = vsel %vm534, %v1252, %v1249
      %v1257 = vadd.s32 %v433, 4
      %v1258 = vadd.s32 %v434, 4
      %v1259 = vadd.s32 %v435, 4
      %v1260 = vadd.s32 %v436, 4
      %vm1261 = vcmp.ge.s32.totalorder %v1257, 0
      %vm1262 = vcmp.ge.s32.totalorder %v1258, 0
      %vm1263 = vcmp.ge.s32.totalorder %v1259, 0
      %vm1264 = vcmp.ge.s32.totalorder %v1260, 0
      %vm1265 = vcmp.lt.s32.totalorder %v1257, 32
      %vm1266 = vcmp.lt.s32.totalorder %v1258, 32
      %vm1267 = vcmp.lt.s32.totalorder %v1259, 32
      %vm1268 = vcmp.lt.s32.totalorder %v1260, 32
      %vm1269 = vmand %vm1261, %vm1265
      %vm1270 = vmand %vm1262, %vm1266
      %vm1271 = vmand %vm1263, %vm1267
      %vm1272 = vmand %vm1264, %vm1268
      %v1273 = vsel %vm1269, 1, 0
      %v1274 = vsel %vm1270, 1, 0
      %v1275 = vsel %vm1271, 1, 0
      %v1276 = vsel %vm1272, 1, 0
      %vm1277 = vcmp.eq.s32.totalorder %v1273, 1
      %vm1278 = vcmp.eq.s32.totalorder %v1274, 1
      %vm1279 = vcmp.eq.s32.totalorder %v1275, 1
      %vm1280 = vcmp.eq.s32.totalorder %v1276, 1
      %v1281 = vsel %vm1277, %v1255, 0.0
      %v1282 = vsel %vm1278, %v1254, 0.0
      %v1283 = vsel %vm1279, %v1253, 0.0
      %v1284 = vsel %vm1280, %v1256, 0.0
      %v1285 = vadd.f32 %v1191, %v1281
      %v1286 = vadd.f32 %v1192, %v1282
      %v1287 = vadd.f32 %v1193, %v1283
      %v1288 = vadd.f32 %v1194, %v1284
      %v1289 = vld [vmem:[%s3] sm:$0x1]
      %v1291 = vlaneseq
      %v1292 = vshrl.u32 %v1291, 7
      %v1293 = vsub.s32 0, %v1292
      %v1294 = vrot.slane %v1289, %v1293
      %v1296 = vadd.f32 %v1285, %v1294
      %v1297 = vadd.f32 %v1286, %v1294
      %v1298 = vadd.f32 %v1287, %v1294
      %v1299 = vadd.f32 %v1288, %v1294
      %v1300 = vmax.f32 %v1296, 0.0
      %v1301 = vmax.f32 %v1297, 0.0
      %v1302 = vmax.f32 %v1298, 0.0
      %v1303 = vmax.f32 %v1299, 0.0
      %v1304 = vld [vmem:[%s425] sm:$0x1f]
      %v1305 = vlaneseq
      %v1306 = vshrl.u32 %v1305, 7
      %v1307 = vsub.s32 0, %v1306
      %v1308 = vrot.slane %v1304, %v1307
      %v1309 = vadd.f32 %v1300, %v1308
      %v1310 = vadd.f32 %v1301, %v1308
      %v1311 = vadd.f32 %v1302, %v1308
      %v1312 = vadd.f32 %v1303, %v1308
      %vm1313 = vcmask 261120
      %v1314 = vsel %vm1313, %v1309, 0.0
      %1315 = vadd.xlane.f32.xlu0 %v1314
      %v1316 = vpop.xlane.xlu0 %1315
      %v1317 = vsel %vm1313, %v1310, 0.0
      %1318 = vadd.xlane.f32.xlu0 %v1317
      %v1319 = vpop.xlane.xlu0 %1318
      %v1320 = vsel %vm1313, %v1311, 0.0
      %1321 = vadd.xlane.f32.xlu0 %v1320
      %v1322 = vpop.xlane.xlu0 %1321
      %v1323 = vsel %vm1313, %v1312, 0.0
      %1324 = vadd.xlane.f32.xlu0 %v1323
      %v1325 = vpop.xlane.xlu0 %1324
      %v1326 = vrcp.pop 32.0
      %v1327 = vmul.f32 %v1316, %v1326
      %v1328 = vmul.f32 %v1319, %v1326
      %v1329 = vmul.f32 %v1322, %v1326
      %v1330 = vmul.f32 %v1325, %v1326
      %v1331 = vmul.f32 %v1309, %v1309
      %v1332 = vmul.f32 %v1310, %v1310
      %v1333 = vmul.f32 %v1311, %v1311
      %v1334 = vmul.f32 %v1312, %v1312
      %v1335 = vsel %vm1313, %v1331, 0.0
      %1336 = vadd.xlane.f32.xlu0 %v1335
      %v1337 = vpop.xlane.xlu0 %1336
      %v1338 = vsel %vm1313, %v1332, 0.0
      %1339 = vadd.xlane.f32.xlu0 %v1338
      %v1340 = vpop.xlane.xlu0 %1339
      %v1341 = vsel %vm1313, %v1333, 0.0
      %1342 = vadd.xlane.f32.xlu0 %v1341
      %v1343 = vpop.xlane.xlu0 %1342
      %v1344 = vsel %vm1313, %v1334, 0.0
      %1345 = vadd.xlane.f32.xlu0 %v1344
      %v1346 = vpop.xlane.xlu0 %1345
      %v1347 = vmul.f32 %v1337, %v1326
      %v1348 = vmul.f32 %v1340, %v1326
      %v1349 = vmul.f32 %v1343, %v1326
      %v1350 = vmul.f32 %v1346, %v1326
      %v1351 = vmul.f32 %v1327, %v1327
      %v1352 = vmul.f32 %v1328, %v1328
      %v1353 = vmul.f32 %v1329, %v1329
      %v1354 = vmul.f32 %v1330, %v1330
      %v1355 = vsub.f32 %v1347, %v1351
      %v1356 = vsub.f32 %v1348, %v1352
      %v1357 = vsub.f32 %v1349, %v1353
      %v1358 = vsub.f32 %v1350, %v1354
      %v1359 = vmax.f32 %v1355, 0.0
      %v1360 = vmax.f32 %v1356, 0.0
      %v1361 = vmax.f32 %v1357, 0.0
      %v1362 = vmax.f32 %v1358, 0.0
      %v1363 = vadd.f32 %v1359, 1e-05
      %v1364 = vadd.f32 %v1360, 1e-05
      %v1365 = vadd.f32 %v1361, 1e-05
      %v1366 = vadd.f32 %v1362, 1e-05
      %v1367 = vrsqrt.pop %v1363
      %v1368 = vrsqrt.pop %v1364
      %v1369 = vrsqrt.pop %v1365
      %v1370 = vrsqrt.pop %v1366
      %v1371 = vld [vmem:[%s4] sm:$0x1]
      %v1372 = vlaneseq
      %v1373 = vshrl.u32 %v1372, 7
      %v1374 = vsub.s32 0, %v1373
      %v1375 = vrot.slane %v1371, %v1374
      %v1376 = vmul.f32 %v1367, %v1375
      %v1377 = vmul.f32 %v1368, %v1375
      %v1378 = vmul.f32 %v1369, %v1375
      %v1379 = vmul.f32 %v1370, %v1375
      %v1380 = vsub.f32 %v1309, %v1327
      %v1381 = vsub.f32 %v1310, %v1328
      %v1382 = vsub.f32 %v1311, %v1329
      %v1383 = vsub.f32 %v1312, %v1330
      %v1384 = vmul.f32 %v1380, %v1376
      %v1385 = vmul.f32 %v1381, %v1377
      %v1386 = vmul.f32 %v1382, %v1378
      %v1387 = vmul.f32 %v1383, %v1379
      %v1388 = vld [vmem:[%s5] sm:$0x1]
      %v1389 = vlaneseq
      %v1390 = vshrl.u32 %v1389, 7
      %v1391 = vsub.s32 0, %v1390
      %v1392 = vrot.slane %v1388, %v1391
      %v1393 = vadd.f32 %v1384, %v1392
      %v1394 = vadd.f32 %v1385, %v1392
      %v1395 = vadd.f32 %v1386, %v1392
      %v1396 = vadd.f32 %v1387, %v1392
      %v1397 = vpack.c.bf16 %v1394, %v1393
      %v1398 = vpack.c.bf16 %v1396, %v1395
      %v1399 = vld [vmem:[%s7] sm:$0xf]
      %v1400 = vld [vmem:[%s7 + $0x4] sm:$0xf]
      %v1401 = vld [vmem:[%s7 + $0x8] sm:$0xf]
      %v1402 = vld [vmem:[%s7 + $0xc] sm:$0xf]
      %v1407 = vunpack.c.l.b16 %v1399
      %v1408 = vunpack.c.l.b16 %v1400
      %v1409 = vunpack.c.l.b16 %v1401
      %v1410 = vunpack.c.l.b16 %v1402
      %v1411 = vpack.c.b16 %v1408, %v1407
      %v1412 = vpack.c.b16 %v1410, %v1409
      %v1416 = vsel %vm1313, %v1397, 0
      %v1419 = vsel %vm1313, %v1398, 0
      %1421 = vmatprep.subr.bf16.mxu0 0
      %1422 = vmatpush1.bf16.msra.mxu0 0
      %1423 = vmatprep.subr.bf16.mxu0 0
      %1424 = vmatpush1.bf16.msra.mxu0 0
      %1425 = vmatprep.subr.bf16.mxu0 0
      %1426 = vmatpush1.bf16.msra.mxu0 0
      %1427 = vmatprep.subr.bf16.mxu0 0
      %1428 = vmatpush1.bf16.msra.mxu0 0
      %1429 = vmatprep.subr.bf16.mxu0 0
      %1430 = vmatpush1.bf16.msra.mxu0 0
      %1431 = vmatprep.subr.bf16.mxu0 0
      %1432 = vmatpush1.bf16.msra.mxu0 0
      %1433 = vmatprep.subr.bf16.mxu0 0
      %1434 = vmatpush1.bf16.msra.mxu0 %v1412
      %1435 = vmatprep.subr.bf16.mxu0 0
      %1436 = vmatpush1.bf16.msra.mxu0 %v1411
      %1437 = vmatprep.subr.bf16.mxu0 0
      %1438 = vmatpush2.bf16.msra.mxu0 0
      %1439 = vmatprep.subr.bf16.mxu0 0
      %1440 = vmatpush2.bf16.msra.mxu0 0
      %1441 = vmatprep.subr.bf16.mxu0 0
      %1442 = vmatpush2.bf16.msra.mxu0 0
      %1443 = vmatprep.subr.bf16.mxu0 0
      %1444 = vmatpush2.bf16.msra.mxu0 0
      %1445 = vmatprep.subr.bf16.mxu0 0
      %1446 = vmatpush2.bf16.msra.mxu0 0
      %1447 = vmatprep.subr.bf16.mxu0 0
      %1448 = vmatpush2.bf16.msra.mxu0 0
      %1449 = vmatprep.subr.bf16.mxu0 0
      %1450 = vmatpush2.bf16.msra.mxu0 0
      %1451 = vmatprep.subr.bf16.mxu0 0
      %1452 = vmatpush2.bf16.msra.mxu0 0
      %1453 = vmatprep.mubr.bf16.mxu0 0
      %1454 = vmatmul.mubr.bf16.gmra.mxu0 %v1416
      %v1455 = vpop.f32.mrf.mxu0
      %v1456 = vadd.f32 0.0, %v1455
      %v1457 = vpop.f32.mrf.mxu0
      %v1458 = vpop.f32.mrf.mxu0
      %v1459 = vadd.f32 0.0, %v1458
      %v1460 = vpop.f32.mrf.mxu0
      %1461 = vmatprep.mubr.bf16.mxu0 0
      %1462 = vmatmul.mubr.bf16.gmra.mxu0 %v1419
      %v1463 = vpop.f32.mrf.mxu0
      %v1464 = vadd.f32 0.0, %v1463
      %v1465 = vpop.f32.mrf.mxu0
      %v1466 = vpop.f32.mrf.mxu0
      %v1467 = vadd.f32 0.0, %v1466
      %v1468 = vpop.f32.mrf.mxu0
      %1469 = vdwg.mxu0
      %v1470 = vrot.slane %v1456, 4
      %v1471 = vrot.slane %v1459, 4
      %v1472 = vrot.slane %v1464, 4
      %v1473 = vrot.slane %v1467, 4
      %v1474 = vsel %vm534, %v1472, %v1473
      %v1475 = vsel %vm534, %v1471, %v1472
      %v1476 = vsel %vm534, %v1470, %v1471
      %v1477 = vsel %vm534, %v1473, %v1470
      %v1478 = vsel %vm559, %v1477, 0.0
      %v1479 = vsel %vm560, %v1476, 0.0
      %v1480 = vsel %vm561, %v1475, 0.0
      %v1481 = vsel %vm562, %v1474, 0.0
      %s1482 = scalar_lea.vmem %s7, 16
      %v1483 = vld [vmem:[%s1482] sm:$0xf]
      %v1484 = vld [vmem:[%s1482 + $0x4] sm:$0xf]
      %v1485 = vld [vmem:[%s1482 + $0x8] sm:$0xf]
      %v1486 = vld [vmem:[%s1482 + $0xc] sm:$0xf]
      %v1491 = vunpack.c.l.b16 %v1483
      %v1492 = vunpack.c.l.b16 %v1484
      %v1493 = vunpack.c.l.b16 %v1485
      %v1494 = vunpack.c.l.b16 %v1486
      %v1495 = vpack.c.b16 %v1492, %v1491
      %v1496 = vpack.c.b16 %v1494, %v1493
      %1499 = vmatprep.subr.bf16.mxu0 0
      %1500 = vmatpush1.bf16.msra.mxu0 0
      %1501 = vmatprep.subr.bf16.mxu0 0
      %1502 = vmatpush1.bf16.msra.mxu0 0
      %1503 = vmatprep.subr.bf16.mxu0 0
      %1504 = vmatpush1.bf16.msra.mxu0 0
      %1505 = vmatprep.subr.bf16.mxu0 0
      %1506 = vmatpush1.bf16.msra.mxu0 0
      %1507 = vmatprep.subr.bf16.mxu0 0
      %1508 = vmatpush1.bf16.msra.mxu0 0
      %1509 = vmatprep.subr.bf16.mxu0 0
      %1510 = vmatpush1.bf16.msra.mxu0 0
      %1511 = vmatprep.subr.bf16.mxu0 0
      %1512 = vmatpush1.bf16.msra.mxu0 %v1496
      %1513 = vmatprep.subr.bf16.mxu0 0
      %1514 = vmatpush1.bf16.msra.mxu0 %v1495
      %1515 = vmatprep.subr.bf16.mxu0 0
      %1516 = vmatpush2.bf16.msra.mxu0 0
      %1517 = vmatprep.subr.bf16.mxu0 0
      %1518 = vmatpush2.bf16.msra.mxu0 0
      %1519 = vmatprep.subr.bf16.mxu0 0
      %1520 = vmatpush2.bf16.msra.mxu0 0
      %1521 = vmatprep.subr.bf16.mxu0 0
      %1522 = vmatpush2.bf16.msra.mxu0 0
      %1523 = vmatprep.subr.bf16.mxu0 0
      %1524 = vmatpush2.bf16.msra.mxu0 0
      %1525 = vmatprep.subr.bf16.mxu0 0
      %1526 = vmatpush2.bf16.msra.mxu0 0
      %1527 = vmatprep.subr.bf16.mxu0 0
      %1528 = vmatpush2.bf16.msra.mxu0 0
      %1529 = vmatprep.subr.bf16.mxu0 0
      %1530 = vmatpush2.bf16.msra.mxu0 0
      %1531 = vmatprep.mubr.bf16.mxu0 0
      %1532 = vmatmul.mubr.bf16.gmra.mxu0 %v1416
      %v1533 = vpop.f32.mrf.mxu0
      %v1534 = vadd.f32 0.0, %v1533
      %v1535 = vpop.f32.mrf.mxu0
      %v1536 = vpop.f32.mrf.mxu0
      %v1537 = vadd.f32 0.0, %v1536
      %v1538 = vpop.f32.mrf.mxu0
      %1539 = vmatprep.mubr.bf16.mxu0 0
      %1540 = vmatmul.mubr.bf16.gmra.mxu0 %v1419
      %v1541 = vpop.f32.mrf.mxu0
      %v1542 = vadd.f32 0.0, %v1541
      %v1543 = vpop.f32.mrf.mxu0
      %v1544 = vpop.f32.mrf.mxu0
      %v1545 = vadd.f32 0.0, %v1544
      %v1546 = vpop.f32.mrf.mxu0
      %1547 = vdwg.mxu0
      %v1548 = vrot.slane %v1534, 5
      %v1549 = vrot.slane %v1537, 5
      %v1550 = vrot.slane %v1542, 5
      %v1551 = vrot.slane %v1545, 5
      %v1552 = vsel %vm625, %v1550, %v1551
      %v1553 = vsel %vm625, %v1549, %v1550
      %v1554 = vsel %vm625, %v1548, %v1549
      %v1555 = vsel %vm625, %v1551, %v1548
      %v1556 = vsel %vm650, %v1555, 0.0
      %v1557 = vsel %vm651, %v1554, 0.0
      %v1558 = vsel %vm652, %v1553, 0.0
      %v1559 = vsel %vm653, %v1552, 0.0
      %v1560 = vadd.f32 %v1478, %v1556
      %v1561 = vadd.f32 %v1479, %v1557
      %v1562 = vadd.f32 %v1480, %v1558
      %v1563 = vadd.f32 %v1481, %v1559
      %s1564 = scalar_lea.vmem %s7, 32
      %v1565 = vld [vmem:[%s1564] sm:$0xf]
      %v1566 = vld [vmem:[%s1564 + $0x4] sm:$0xf]
      %v1567 = vld [vmem:[%s1564 + $0x8] sm:$0xf]
      %v1568 = vld [vmem:[%s1564 + $0xc] sm:$0xf]
      %v1573 = vunpack.c.l.b16 %v1565
      %v1574 = vunpack.c.l.b16 %v1566
      %v1575 = vunpack.c.l.b16 %v1567
      %v1576 = vunpack.c.l.b16 %v1568
      %v1577 = vpack.c.b16 %v1574, %v1573
      %v1578 = vpack.c.b16 %v1576, %v1575
      %1581 = vmatprep.subr.bf16.mxu0 0
      %1582 = vmatpush1.bf16.msra.mxu0 0
      %1583 = vmatprep.subr.bf16.mxu0 0
      %1584 = vmatpush1.bf16.msra.mxu0 0
      %1585 = vmatprep.subr.bf16.mxu0 0
      %1586 = vmatpush1.bf16.msra.mxu0 0
      %1587 = vmatprep.subr.bf16.mxu0 0
      %1588 = vmatpush1.bf16.msra.mxu0 0
      %1589 = vmatprep.subr.bf16.mxu0 0
      %1590 = vmatpush1.bf16.msra.mxu0 0
      %1591 = vmatprep.subr.bf16.mxu0 0
      %1592 = vmatpush1.bf16.msra.mxu0 0
      %1593 = vmatprep.subr.bf16.mxu0 0
      %1594 = vmatpush1.bf16.msra.mxu0 %v1578
      %1595 = vmatprep.subr.bf16.mxu0 0
      %1596 = vmatpush1.bf16.msra.mxu0 %v1577
      %1597 = vmatprep.subr.bf16.mxu0 0
      %1598 = vmatpush2.bf16.msra.mxu0 0
      %1599 = vmatprep.subr.bf16.mxu0 0
      %1600 = vmatpush2.bf16.msra.mxu0 0
      %1601 = vmatprep.subr.bf16.mxu0 0
      %1602 = vmatpush2.bf16.msra.mxu0 0
      %1603 = vmatprep.subr.bf16.mxu0 0
      %1604 = vmatpush2.bf16.msra.mxu0 0
      %1605 = vmatprep.subr.bf16.mxu0 0
      %1606 = vmatpush2.bf16.msra.mxu0 0
      %1607 = vmatprep.subr.bf16.mxu0 0
      %1608 = vmatpush2.bf16.msra.mxu0 0
      %1609 = vmatprep.subr.bf16.mxu0 0
      %1610 = vmatpush2.bf16.msra.mxu0 0
      %1611 = vmatprep.subr.bf16.mxu0 0
      %1612 = vmatpush2.bf16.msra.mxu0 0
      %1613 = vmatprep.mubr.bf16.mxu0 0
      %1614 = vmatmul.mubr.bf16.gmra.mxu0 %v1416
      %v1615 = vpop.f32.mrf.mxu0
      %v1616 = vadd.f32 0.0, %v1615
      %v1617 = vpop.f32.mrf.mxu0
      %v1618 = vpop.f32.mrf.mxu0
      %v1619 = vadd.f32 0.0, %v1618
      %v1620 = vpop.f32.mrf.mxu0
      %1621 = vmatprep.mubr.bf16.mxu0 0
      %1622 = vmatmul.mubr.bf16.gmra.mxu0 %v1419
      %v1623 = vpop.f32.mrf.mxu0
      %v1624 = vadd.f32 0.0, %v1623
      %v1625 = vpop.f32.mrf.mxu0
      %v1626 = vpop.f32.mrf.mxu0
      %v1627 = vadd.f32 0.0, %v1626
      %v1628 = vpop.f32.mrf.mxu0
      %1629 = vdwg.mxu0
      %v1630 = vrot.slane %v1616, 6
      %v1631 = vrot.slane %v1619, 6
      %v1632 = vrot.slane %v1624, 6
      %v1633 = vrot.slane %v1627, 6
      %v1634 = vsel %vm720, %v1632, %v1633
      %v1635 = vsel %vm720, %v1631, %v1632
      %v1636 = vsel %vm720, %v1630, %v1631
      %v1637 = vsel %vm720, %v1633, %v1630
      %v1638 = vsel %vm745, %v1637, 0.0
      %v1639 = vsel %vm746, %v1636, 0.0
      %v1640 = vsel %vm747, %v1635, 0.0
      %v1641 = vsel %vm748, %v1634, 0.0
      %v1642 = vadd.f32 %v1560, %v1638
      %v1643 = vadd.f32 %v1561, %v1639
      %v1644 = vadd.f32 %v1562, %v1640
      %v1645 = vadd.f32 %v1563, %v1641
      %s1646 = scalar_lea.vmem %s7, 48
      %v1647 = vld [vmem:[%s1646] sm:$0xf]
      %v1648 = vld [vmem:[%s1646 + $0x4] sm:$0xf]
      %v1649 = vld [vmem:[%s1646 + $0x8] sm:$0xf]
      %v1650 = vld [vmem:[%s1646 + $0xc] sm:$0xf]
      %v1655 = vunpack.c.l.b16 %v1647
      %v1656 = vunpack.c.l.b16 %v1648
      %v1657 = vunpack.c.l.b16 %v1649
      %v1658 = vunpack.c.l.b16 %v1650
      %v1659 = vpack.c.b16 %v1656, %v1655
      %v1660 = vpack.c.b16 %v1658, %v1657
      %1663 = vmatprep.subr.bf16.mxu0 0
      %1664 = vmatpush1.bf16.msra.mxu0 0
      %1665 = vmatprep.subr.bf16.mxu0 0
      %1666 = vmatpush1.bf16.msra.mxu0 0
      %1667 = vmatprep.subr.bf16.mxu0 0
      %1668 = vmatpush1.bf16.msra.mxu0 0
      %1669 = vmatprep.subr.bf16.mxu0 0
      %1670 = vmatpush1.bf16.msra.mxu0 0
      %1671 = vmatprep.subr.bf16.mxu0 0
      %1672 = vmatpush1.bf16.msra.mxu0 0
      %1673 = vmatprep.subr.bf16.mxu0 0
      %1674 = vmatpush1.bf16.msra.mxu0 0
      %1675 = vmatprep.subr.bf16.mxu0 0
      %1676 = vmatpush1.bf16.msra.mxu0 %v1660
      %1677 = vmatprep.subr.bf16.mxu0 0
      %1678 = vmatpush1.bf16.msra.mxu0 %v1659
      %1679 = vmatprep.subr.bf16.mxu0 0
      %1680 = vmatpush2.bf16.msra.mxu0 0
      %1681 = vmatprep.subr.bf16.mxu0 0
      %1682 = vmatpush2.bf16.msra.mxu0 0
      %1683 = vmatprep.subr.bf16.mxu0 0
      %1684 = vmatpush2.bf16.msra.mxu0 0
      %1685 = vmatprep.subr.bf16.mxu0 0
      %1686 = vmatpush2.bf16.msra.mxu0 0
      %1687 = vmatprep.subr.bf16.mxu0 0
      %1688 = vmatpush2.bf16.msra.mxu0 0
      %1689 = vmatprep.subr.bf16.mxu0 0
      %1690 = vmatpush2.bf16.msra.mxu0 0
      %1691 = vmatprep.subr.bf16.mxu0 0
      %1692 = vmatpush2.bf16.msra.mxu0 0
      %1693 = vmatprep.subr.bf16.mxu0 0
      %1694 = vmatpush2.bf16.msra.mxu0 0
      %1695 = vmatprep.mubr.bf16.mxu0 0
      %1696 = vmatmul.mubr.bf16.gmra.mxu0 %v1416
      %v1697 = vpop.f32.mrf.mxu0
      %v1698 = vadd.f32 0.0, %v1697
      %v1699 = vpop.f32.mrf.mxu0
      %v1700 = vpop.f32.mrf.mxu0
      %v1701 = vadd.f32 0.0, %v1700
      %v1702 = vpop.f32.mrf.mxu0
      %1703 = vmatprep.mubr.bf16.mxu0 0
      %1704 = vmatmul.mubr.bf16.gmra.mxu0 %v1419
      %v1705 = vpop.f32.mrf.mxu0
      %v1706 = vadd.f32 0.0, %v1705
      %v1707 = vpop.f32.mrf.mxu0
      %v1708 = vpop.f32.mrf.mxu0
      %v1709 = vadd.f32 0.0, %v1708
      %v1710 = vpop.f32.mrf.mxu0
      %1711 = vdwg.mxu0
      %v1712 = vrot.slane %v1698, 7
      %v1713 = vrot.slane %v1701, 7
      %v1714 = vrot.slane %v1706, 7
      %v1715 = vrot.slane %v1709, 7
      %v1716 = vsel %vm815, %v1714, %v1715
      %v1717 = vsel %vm815, %v1713, %v1714
      %v1718 = vsel %vm815, %v1712, %v1713
      %v1719 = vsel %vm815, %v1715, %v1712
      %v1720 = vsel %vm840, %v1719, 0.0
      %v1721 = vsel %vm841, %v1718, 0.0
      %v1722 = vsel %vm842, %v1717, 0.0
      %v1723 = vsel %vm843, %v1716, 0.0
      %v1724 = vadd.f32 %v1642, %v1720
      %v1725 = vadd.f32 %v1643, %v1721
      %v1726 = vadd.f32 %v1644, %v1722
      %v1727 = vadd.f32 %v1645, %v1723
      %s1728 = scalar_lea.vmem %s7, 64
      %v1729 = vld [vmem:[%s1728] sm:$0xf]
      %v1730 = vld [vmem:[%s1728 + $0x4] sm:$0xf]
      %v1731 = vld [vmem:[%s1728 + $0x8] sm:$0xf]
      %v1732 = vld [vmem:[%s1728 + $0xc] sm:$0xf]
      %v1737 = vunpack.c.l.b16 %v1729
      %v1738 = vunpack.c.l.b16 %v1730
      %v1739 = vunpack.c.l.b16 %v1731
      %v1740 = vunpack.c.l.b16 %v1732
      %v1741 = vpack.c.b16 %v1738, %v1737
      %v1742 = vpack.c.b16 %v1740, %v1739
      %1745 = vmatprep.subr.bf16.mxu0 0
      %1746 = vmatpush1.bf16.msra.mxu0 0
      %1747 = vmatprep.subr.bf16.mxu0 0
      %1748 = vmatpush1.bf16.msra.mxu0 0
      %1749 = vmatprep.subr.bf16.mxu0 0
      %1750 = vmatpush1.bf16.msra.mxu0 0
      %1751 = vmatprep.subr.bf16.mxu0 0
      %1752 = vmatpush1.bf16.msra.mxu0 0
      %1753 = vmatprep.subr.bf16.mxu0 0
      %1754 = vmatpush1.bf16.msra.mxu0 0
      %1755 = vmatprep.subr.bf16.mxu0 0
      %1756 = vmatpush1.bf16.msra.mxu0 0
      %1757 = vmatprep.subr.bf16.mxu0 0
      %1758 = vmatpush1.bf16.msra.mxu0 %v1742
      %1759 = vmatprep.subr.bf16.mxu0 0
      %1760 = vmatpush1.bf16.msra.mxu0 %v1741
      %1761 = vmatprep.subr.bf16.mxu0 0
      %1762 = vmatpush2.bf16.msra.mxu0 0
      %1763 = vmatprep.subr.bf16.mxu0 0
      %1764 = vmatpush2.bf16.msra.mxu0 0
      %1765 = vmatprep.subr.bf16.mxu0 0
      %1766 = vmatpush2.bf16.msra.mxu0 0
      %1767 = vmatprep.subr.bf16.mxu0 0
      %1768 = vmatpush2.bf16.msra.mxu0 0
      %1769 = vmatprep.subr.bf16.mxu0 0
      %1770 = vmatpush2.bf16.msra.mxu0 0
      %1771 = vmatprep.subr.bf16.mxu0 0
      %1772 = vmatpush2.bf16.msra.mxu0 0
      %1773 = vmatprep.subr.bf16.mxu0 0
      %1774 = vmatpush2.bf16.msra.mxu0 0
      %1775 = vmatprep.subr.bf16.mxu0 0
      %1776 = vmatpush2.bf16.msra.mxu0 0
      %1777 = vmatprep.mubr.bf16.mxu0 0
      %1778 = vmatmul.mubr.bf16.gmra.mxu0 %v1416
      %v1779 = vpop.f32.mrf.mxu0
      %v1780 = vadd.f32 0.0, %v1779
      %v1781 = vpop.f32.mrf.mxu0
      %v1782 = vpop.f32.mrf.mxu0
      %v1783 = vadd.f32 0.0, %v1782
      %v1784 = vpop.f32.mrf.mxu0
      %1785 = vmatprep.mubr.bf16.mxu0 0
      %1786 = vmatmul.mubr.bf16.gmra.mxu0 %v1419
      %v1787 = vpop.f32.mrf.mxu0
      %v1788 = vadd.f32 0.0, %v1787
      %v1789 = vpop.f32.mrf.mxu0
      %v1790 = vpop.f32.mrf.mxu0
      %v1791 = vadd.f32 0.0, %v1790
      %v1792 = vpop.f32.mrf.mxu0
      %1793 = vdwg.mxu0
      %v1794 = vadd.f32 %v1724, %v1780
      %v1795 = vadd.f32 %v1725, %v1783
      %v1796 = vadd.f32 %v1726, %v1788
      %v1797 = vadd.f32 %v1727, %v1791
      %s1798 = scalar_lea.vmem %s7, 80
      %v1799 = vld [vmem:[%s1798] sm:$0xf]
      %v1800 = vld [vmem:[%s1798 + $0x4] sm:$0xf]
      %v1801 = vld [vmem:[%s1798 + $0x8] sm:$0xf]
      %v1802 = vld [vmem:[%s1798 + $0xc] sm:$0xf]
      %v1807 = vunpack.c.l.b16 %v1799
      %v1808 = vunpack.c.l.b16 %v1800
      %v1809 = vunpack.c.l.b16 %v1801
      %v1810 = vunpack.c.l.b16 %v1802
      %v1811 = vpack.c.b16 %v1808, %v1807
      %v1812 = vpack.c.b16 %v1810, %v1809
      %1815 = vmatprep.subr.bf16.mxu0 0
      %1816 = vmatpush1.bf16.msra.mxu0 0
      %1817 = vmatprep.subr.bf16.mxu0 0
      %1818 = vmatpush1.bf16.msra.mxu0 0
      %1819 = vmatprep.subr.bf16.mxu0 0
      %1820 = vmatpush1.bf16.msra.mxu0 0
      %1821 = vmatprep.subr.bf16.mxu0 0
      %1822 = vmatpush1.bf16.msra.mxu0 0
      %1823 = vmatprep.subr.bf16.mxu0 0
      %1824 = vmatpush1.bf16.msra.mxu0 0
      %1825 = vmatprep.subr.bf16.mxu0 0
      %1826 = vmatpush1.bf16.msra.mxu0 0
      %1827 = vmatprep.subr.bf16.mxu0 0
      %1828 = vmatpush1.bf16.msra.mxu0 %v1812
      %1829 = vmatprep.subr.bf16.mxu0 0
      %1830 = vmatpush1.bf16.msra.mxu0 %v1811
      %1831 = vmatprep.subr.bf16.mxu0 0
      %1832 = vmatpush2.bf16.msra.mxu0 0
      %1833 = vmatprep.subr.bf16.mxu0 0
      %1834 = vmatpush2.bf16.msra.mxu0 0
      %1835 = vmatprep.subr.bf16.mxu0 0
      %1836 = vmatpush2.bf16.msra.mxu0 0
      %1837 = vmatprep.subr.bf16.mxu0 0
      %1838 = vmatpush2.bf16.msra.mxu0 0
      %1839 = vmatprep.subr.bf16.mxu0 0
      %1840 = vmatpush2.bf16.msra.mxu0 0
      %1841 = vmatprep.subr.bf16.mxu0 0
      %1842 = vmatpush2.bf16.msra.mxu0 0
      %1843 = vmatprep.subr.bf16.mxu0 0
      %1844 = vmatpush2.bf16.msra.mxu0 0
      %1845 = vmatprep.subr.bf16.mxu0 0
      %1846 = vmatpush2.bf16.msra.mxu0 0
      %1847 = vmatprep.mubr.bf16.mxu0 0
      %1848 = vmatmul.mubr.bf16.gmra.mxu0 %v1416
      %v1849 = vpop.f32.mrf.mxu0
      %v1850 = vadd.f32 0.0, %v1849
      %v1851 = vpop.f32.mrf.mxu0
      %v1852 = vpop.f32.mrf.mxu0
      %v1853 = vadd.f32 0.0, %v1852
      %v1854 = vpop.f32.mrf.mxu0
      %1855 = vmatprep.mubr.bf16.mxu0 0
      %1856 = vmatmul.mubr.bf16.gmra.mxu0 %v1419
      %v1857 = vpop.f32.mrf.mxu0
      %v1858 = vadd.f32 0.0, %v1857
      %v1859 = vpop.f32.mrf.mxu0
      %v1860 = vpop.f32.mrf.mxu0
      %v1861 = vadd.f32 0.0, %v1860
      %v1862 = vpop.f32.mrf.mxu0
      %1863 = vdwg.mxu0
      %v1864 = vrot.slane %v1850, 1
      %v1865 = vrot.slane %v1853, 1
      %v1866 = vrot.slane %v1858, 1
      %v1867 = vrot.slane %v1861, 1
      %v1868 = vsel %vm968, %v1866, %v1867
      %v1869 = vsel %vm968, %v1865, %v1866
      %v1870 = vsel %vm968, %v1864, %v1865
      %v1871 = vsel %vm968, %v1867, %v1864
      %v1872 = vsel %vm993, %v1870, 0.0
      %v1873 = vsel %vm994, %v1869, 0.0
      %v1874 = vsel %vm995, %v1868, 0.0
      %v1875 = vsel %vm996, %v1871, 0.0
      %v1876 = vadd.f32 %v1794, %v1872
      %v1877 = vadd.f32 %v1795, %v1873
      %v1878 = vadd.f32 %v1796, %v1874
      %v1879 = vadd.f32 %v1797, %v1875
      %s1880 = scalar_lea.vmem %s7, 96
      %v1881 = vld [vmem:[%s1880] sm:$0xf]
      %v1882 = vld [vmem:[%s1880 + $0x4] sm:$0xf]
      %v1883 = vld [vmem:[%s1880 + $0x8] sm:$0xf]
      %v1884 = vld [vmem:[%s1880 + $0xc] sm:$0xf]
      %v1889 = vunpack.c.l.b16 %v1881
      %v1890 = vunpack.c.l.b16 %v1882
      %v1891 = vunpack.c.l.b16 %v1883
      %v1892 = vunpack.c.l.b16 %v1884
      %v1893 = vpack.c.b16 %v1890, %v1889
      %v1894 = vpack.c.b16 %v1892, %v1891
      %1897 = vmatprep.subr.bf16.mxu0 0
      %1898 = vmatpush1.bf16.msra.mxu0 0
      %1899 = vmatprep.subr.bf16.mxu0 0
      %1900 = vmatpush1.bf16.msra.mxu0 0
      %1901 = vmatprep.subr.bf16.mxu0 0
      %1902 = vmatpush1.bf16.msra.mxu0 0
      %1903 = vmatprep.subr.bf16.mxu0 0
      %1904 = vmatpush1.bf16.msra.mxu0 0
      %1905 = vmatprep.subr.bf16.mxu0 0
      %1906 = vmatpush1.bf16.msra.mxu0 0
      %1907 = vmatprep.subr.bf16.mxu0 0
      %1908 = vmatpush1.bf16.msra.mxu0 0
      %1909 = vmatprep.subr.bf16.mxu0 0
      %1910 = vmatpush1.bf16.msra.mxu0 %v1894
      %1911 = vmatprep.subr.bf16.mxu0 0
      %1912 = vmatpush1.bf16.msra.mxu0 %v1893
      %1913 = vmatprep.subr.bf16.mxu0 0
      %1914 = vmatpush2.bf16.msra.mxu0 0
      %1915 = vmatprep.subr.bf16.mxu0 0
      %1916 = vmatpush2.bf16.msra.mxu0 0
      %1917 = vmatprep.subr.bf16.mxu0 0
      %1918 = vmatpush2.bf16.msra.mxu0 0
      %1919 = vmatprep.subr.bf16.mxu0 0
      %1920 = vmatpush2.bf16.msra.mxu0 0
      %1921 = vmatprep.subr.bf16.mxu0 0
      %1922 = vmatpush2.bf16.msra.mxu0 0
      %1923 = vmatprep.subr.bf16.mxu0 0
      %1924 = vmatpush2.bf16.msra.mxu0 0
      %1925 = vmatprep.subr.bf16.mxu0 0
      %1926 = vmatpush2.bf16.msra.mxu0 0
      %1927 = vmatprep.subr.bf16.mxu0 0
      %1928 = vmatpush2.bf16.msra.mxu0 0
      %1929 = vmatprep.mubr.bf16.mxu0 0
      %1930 = vmatmul.mubr.bf16.gmra.mxu0 %v1416
      %v1931 = vpop.f32.mrf.mxu0
      %v1932 = vadd.f32 0.0, %v1931
      %v1933 = vpop.f32.mrf.mxu0
      %v1934 = vpop.f32.mrf.mxu0
      %v1935 = vadd.f32 0.0, %v1934
      %v1936 = vpop.f32.mrf.mxu0
      %1937 = vmatprep.mubr.bf16.mxu0 0
      %1938 = vmatmul.mubr.bf16.gmra.mxu0 %v1419
      %v1939 = vpop.f32.mrf.mxu0
      %v1940 = vadd.f32 0.0, %v1939
      %v1941 = vpop.f32.mrf.mxu0
      %v1942 = vpop.f32.mrf.mxu0
      %v1943 = vadd.f32 0.0, %v1942
      %v1944 = vpop.f32.mrf.mxu0
      %1945 = vdwg.mxu0
      %v1946 = vrot.slane %v1932, 2
      %v1947 = vrot.slane %v1935, 2
      %v1948 = vrot.slane %v1940, 2
      %v1949 = vrot.slane %v1943, 2
      %v1950 = vsel %vm1063, %v1948, %v1949
      %v1951 = vsel %vm1063, %v1947, %v1948
      %v1952 = vsel %vm1063, %v1946, %v1947
      %v1953 = vsel %vm1063, %v1949, %v1946
      %v1954 = vsel %vm1088, %v1952, 0.0
      %v1955 = vsel %vm1089, %v1951, 0.0
      %v1956 = vsel %vm1090, %v1950, 0.0
      %v1957 = vsel %vm1091, %v1953, 0.0
      %v1958 = vadd.f32 %v1876, %v1954
      %v1959 = vadd.f32 %v1877, %v1955
      %v1960 = vadd.f32 %v1878, %v1956
      %v1961 = vadd.f32 %v1879, %v1957
      %s1962 = scalar_lea.vmem %s7, 112
      %v1963 = vld [vmem:[%s1962] sm:$0xf]
      %v1964 = vld [vmem:[%s1962 + $0x4] sm:$0xf]
      %v1965 = vld [vmem:[%s1962 + $0x8] sm:$0xf]
      %v1966 = vld [vmem:[%s1962 + $0xc] sm:$0xf]
      %v1971 = vunpack.c.l.b16 %v1963
      %v1972 = vunpack.c.l.b16 %v1964
      %v1973 = vunpack.c.l.b16 %v1965
      %v1974 = vunpack.c.l.b16 %v1966
      %v1975 = vpack.c.b16 %v1972, %v1971
      %v1976 = vpack.c.b16 %v1974, %v1973
      %1979 = vmatprep.subr.bf16.mxu0 0
      %1980 = vmatpush1.bf16.msra.mxu0 0
      %1981 = vmatprep.subr.bf16.mxu0 0
      %1982 = vmatpush1.bf16.msra.mxu0 0
      %1983 = vmatprep.subr.bf16.mxu0 0
      %1984 = vmatpush1.bf16.msra.mxu0 0
      %1985 = vmatprep.subr.bf16.mxu0 0
      %1986 = vmatpush1.bf16.msra.mxu0 0
      %1987 = vmatprep.subr.bf16.mxu0 0
      %1988 = vmatpush1.bf16.msra.mxu0 0
      %1989 = vmatprep.subr.bf16.mxu0 0
      %1990 = vmatpush1.bf16.msra.mxu0 0
      %1991 = vmatprep.subr.bf16.mxu0 0
      %1992 = vmatpush1.bf16.msra.mxu0 %v1976
      %1993 = vmatprep.subr.bf16.mxu0 0
      %1994 = vmatpush1.bf16.msra.mxu0 %v1975
      %1995 = vmatprep.subr.bf16.mxu0 0
      %1996 = vmatpush2.bf16.msra.mxu0 0
      %1997 = vmatprep.subr.bf16.mxu0 0
      %1998 = vmatpush2.bf16.msra.mxu0 0
      %1999 = vmatprep.subr.bf16.mxu0 0
      %2000 = vmatpush2.bf16.msra.mxu0 0
      %2001 = vmatprep.subr.bf16.mxu0 0
      %2002 = vmatpush2.bf16.msra.mxu0 0
      %2003 = vmatprep.subr.bf16.mxu0 0
      %2004 = vmatpush2.bf16.msra.mxu0 0
      %2005 = vmatprep.subr.bf16.mxu0 0
      %2006 = vmatpush2.bf16.msra.mxu0 0
      %2007 = vmatprep.subr.bf16.mxu0 0
      %2008 = vmatpush2.bf16.msra.mxu0 0
      %2009 = vmatprep.subr.bf16.mxu0 0
      %2010 = vmatpush2.bf16.msra.mxu0 0
      %2011 = vmatprep.mubr.bf16.mxu0 0
      %2012 = vmatmul.mubr.bf16.gmra.mxu0 %v1416
      %v2013 = vpop.f32.mrf.mxu0
      %v2014 = vadd.f32 0.0, %v2013
      %v2015 = vpop.f32.mrf.mxu0
      %v2016 = vpop.f32.mrf.mxu0
      %v2017 = vadd.f32 0.0, %v2016
      %v2018 = vpop.f32.mrf.mxu0
      %2019 = vmatprep.mubr.bf16.mxu0 0
      %2020 = vmatmul.mubr.bf16.gmra.mxu0 %v1419
      %v2021 = vpop.f32.mrf.mxu0
      %v2022 = vadd.f32 0.0, %v2021
      %v2023 = vpop.f32.mrf.mxu0
      %v2024 = vpop.f32.mrf.mxu0
      %v2025 = vadd.f32 0.0, %v2024
      %v2026 = vpop.f32.mrf.mxu0
      %2027 = vdwg.mxu0
      %v2028 = vrot.slane %v2014, 3
      %v2029 = vrot.slane %v2017, 3
      %v2030 = vrot.slane %v2022, 3
      %v2031 = vrot.slane %v2025, 3
      %v2032 = vsel %vm1158, %v2030, %v2031
      %v2033 = vsel %vm1158, %v2029, %v2030
      %v2034 = vsel %vm1158, %v2028, %v2029
      %v2035 = vsel %vm1158, %v2031, %v2028
      %v2036 = vsel %vm1183, %v2034, 0.0
      %v2037 = vsel %vm1184, %v2033, 0.0
      %v2038 = vsel %vm1185, %v2032, 0.0
      %v2039 = vsel %vm1186, %v2035, 0.0
      %v2040 = vadd.f32 %v1958, %v2036
      %v2041 = vadd.f32 %v1959, %v2037
      %v2042 = vadd.f32 %v1960, %v2038
      %v2043 = vadd.f32 %v1961, %v2039
      %s2044 = scalar_lea.vmem %s7, 128
      %v2045 = vld [vmem:[%s2044] sm:$0xf]
      %v2046 = vld [vmem:[%s2044 + $0x4] sm:$0xf]
      %v2047 = vld [vmem:[%s2044 + $0x8] sm:$0xf]
      %v2048 = vld [vmem:[%s2044 + $0xc] sm:$0xf]
      %v2053 = vunpack.c.l.b16 %v2045
      %v2054 = vunpack.c.l.b16 %v2046
      %v2055 = vunpack.c.l.b16 %v2047
      %v2056 = vunpack.c.l.b16 %v2048
      %v2057 = vpack.c.b16 %v2054, %v2053
      %v2058 = vpack.c.b16 %v2056, %v2055
      %2061 = vmatprep.subr.bf16.mxu0 0
      %2062 = vmatpush1.bf16.msra.mxu0 0
      %2063 = vmatprep.subr.bf16.mxu0 0
      %2064 = vmatpush1.bf16.msra.mxu0 0
      %2065 = vmatprep.subr.bf16.mxu0 0
      %2066 = vmatpush1.bf16.msra.mxu0 0
      %2067 = vmatprep.subr.bf16.mxu0 0
      %2068 = vmatpush1.bf16.msra.mxu0 0
      %2069 = vmatprep.subr.bf16.mxu0 0
      %2070 = vmatpush1.bf16.msra.mxu0 0
      %2071 = vmatprep.subr.bf16.mxu0 0
      %2072 = vmatpush1.bf16.msra.mxu0 0
      %2073 = vmatprep.subr.bf16.mxu0 0
      %2074 = vmatpush1.bf16.msra.mxu0 %v2058
      %2075 = vmatprep.subr.bf16.mxu0 0
      %2076 = vmatpush1.bf16.msra.mxu0 %v2057
      %2077 = vmatprep.subr.bf16.mxu0 0
      %2078 = vmatpush2.bf16.msra.mxu0 0
      %2079 = vmatprep.subr.bf16.mxu0 0
      %2080 = vmatpush2.bf16.msra.mxu0 0
      %2081 = vmatprep.subr.bf16.mxu0 0
      %2082 = vmatpush2.bf16.msra.mxu0 0
      %2083 = vmatprep.subr.bf16.mxu0 0
      %2084 = vmatpush2.bf16.msra.mxu0 0
      %2085 = vmatprep.subr.bf16.mxu0 0
      %2086 = vmatpush2.bf16.msra.mxu0 0
      %2087 = vmatprep.subr.bf16.mxu0 0
      %2088 = vmatpush2.bf16.msra.mxu0 0
      %2089 = vmatprep.subr.bf16.mxu0 0
      %2090 = vmatpush2.bf16.msra.mxu0 0
      %2091 = vmatprep.subr.bf16.mxu0 0
      %2092 = vmatpush2.bf16.msra.mxu0 0
      %2093 = vmatprep.mubr.bf16.mxu0 0
      %2094 = vmatmul.mubr.bf16.gmra.mxu0 %v1416
      %v2095 = vpop.f32.mrf.mxu0
      %v2096 = vadd.f32 0.0, %v2095
      %v2097 = vpop.f32.mrf.mxu0
      %v2098 = vpop.f32.mrf.mxu0
      %v2099 = vadd.f32 0.0, %v2098
      %v2100 = vpop.f32.mrf.mxu0
      %2101 = vmatprep.mubr.bf16.mxu0 0
      %2102 = vmatmul.mubr.bf16.gmra.mxu0 %v1419
      %v2103 = vpop.f32.mrf.mxu0
      %v2104 = vadd.f32 0.0, %v2103
      %v2105 = vpop.f32.mrf.mxu0
      %v2106 = vpop.f32.mrf.mxu0
      %v2107 = vadd.f32 0.0, %v2106
      %v2108 = vpop.f32.mrf.mxu0
      %2109 = vdwg.mxu0
      %v2110 = vrot.slane %v2096, 4
      %v2111 = vrot.slane %v2099, 4
      %v2112 = vrot.slane %v2104, 4
      %v2113 = vrot.slane %v2107, 4
      %v2114 = vsel %vm534, %v2112, %v2113
      %v2115 = vsel %vm534, %v2111, %v2112
      %v2116 = vsel %vm534, %v2110, %v2111
      %v2117 = vsel %vm534, %v2113, %v2110
      %v2118 = vsel %vm1277, %v2116, 0.0
      %v2119 = vsel %vm1278, %v2115, 0.0
      %v2120 = vsel %vm1279, %v2114, 0.0
      %v2121 = vsel %vm1280, %v2117, 0.0
      %v2122 = vadd.f32 %v2040, %v2118
      %v2123 = vadd.f32 %v2041, %v2119
      %v2124 = vadd.f32 %v2042, %v2120
      %v2125 = vadd.f32 %v2043, %v2121
      %v2126 = vld [vmem:[%s6] sm:$0x1]
      %v2127 = vlaneseq
      %v2128 = vshrl.u32 %v2127, 7
      %v2129 = vsub.s32 0, %v2128
      %v2130 = vrot.slane %v2126, %v2129
      %v2131 = vadd.f32 %v2122, %v2130
      %v2132 = vadd.f32 %v2123, %v2130
      %v2133 = vadd.f32 %v2124, %v2130
      %v2134 = vadd.f32 %v2125, %v2130
      %v2135 = vmax.f32 %v2131, 0.0
      %v2136 = vmax.f32 %v2132, 0.0
      %v2137 = vmax.f32 %v2133, 0.0
      %v2138 = vmax.f32 %v2134, 0.0
      %v2139 = vadd.f32 %v2135, %v1300
      %v2140 = vadd.f32 %v2136, %v1301
      %v2141 = vadd.f32 %v2137, %v1302
      %v2142 = vadd.f32 %v2138, %v1303
      %v2143 = vlaneseq
      %v2144 = vshrl.u32 %v2143, 7
      %v2145 = vsub.s32 1, %v2144
      %v2146 = vrot.slane %v1304, %v2145
      %v2147 = vadd.f32 %v2139, %v2146
      %v2148 = vadd.f32 %v2140, %v2146
      %v2149 = vadd.f32 %v2141, %v2146
      %v2150 = vadd.f32 %v2142, %v2146
      %v2151 = vsel %vm1313, %v2147, 0.0
      %2152 = vadd.xlane.f32.xlu0 %v2151
      %v2153 = vpop.xlane.xlu0 %2152
      %v2154 = vsel %vm1313, %v2148, 0.0
      %2155 = vadd.xlane.f32.xlu0 %v2154
      %v2156 = vpop.xlane.xlu0 %2155
      %v2157 = vsel %vm1313, %v2149, 0.0
      %2158 = vadd.xlane.f32.xlu0 %v2157
      %v2159 = vpop.xlane.xlu0 %2158
      %v2160 = vsel %vm1313, %v2150, 0.0
      %2161 = vadd.xlane.f32.xlu0 %v2160
      %v2162 = vpop.xlane.xlu0 %2161
      %v2163 = vmul.f32 %v2153, %v1326
      %v2164 = vmul.f32 %v2156, %v1326
      %v2165 = vmul.f32 %v2159, %v1326
      %v2166 = vmul.f32 %v2162, %v1326
      %v2167 = vmul.f32 %v2147, %v2147
      %v2168 = vmul.f32 %v2148, %v2148
      %v2169 = vmul.f32 %v2149, %v2149
      %v2170 = vmul.f32 %v2150, %v2150
      %v2171 = vsel %vm1313, %v2167, 0.0
      %2172 = vadd.xlane.f32.xlu0 %v2171
      %v2173 = vpop.xlane.xlu0 %2172
      %v2174 = vsel %vm1313, %v2168, 0.0
      %2175 = vadd.xlane.f32.xlu0 %v2174
      %v2176 = vpop.xlane.xlu0 %2175
      %v2177 = vsel %vm1313, %v2169, 0.0
      %2178 = vadd.xlane.f32.xlu0 %v2177
      %v2179 = vpop.xlane.xlu0 %2178
      %v2180 = vsel %vm1313, %v2170, 0.0
      %2181 = vadd.xlane.f32.xlu0 %v2180
      %v2182 = vpop.xlane.xlu0 %2181
      %v2183 = vmul.f32 %v2173, %v1326
      %v2184 = vmul.f32 %v2176, %v1326
      %v2185 = vmul.f32 %v2179, %v1326
      %v2186 = vmul.f32 %v2182, %v1326
      %v2187 = vmul.f32 %v2163, %v2163
      %v2188 = vmul.f32 %v2164, %v2164
      %v2189 = vmul.f32 %v2165, %v2165
      %v2190 = vmul.f32 %v2166, %v2166
      %v2191 = vsub.f32 %v2183, %v2187
      %v2192 = vsub.f32 %v2184, %v2188
      %v2193 = vsub.f32 %v2185, %v2189
      %v2194 = vsub.f32 %v2186, %v2190
      %v2195 = vmax.f32 %v2191, 0.0
      %v2196 = vmax.f32 %v2192, 0.0
      %v2197 = vmax.f32 %v2193, 0.0
      %v2198 = vmax.f32 %v2194, 0.0
      %v2199 = vadd.f32 %v2195, 1e-05
      %v2200 = vadd.f32 %v2196, 1e-05
      %v2201 = vadd.f32 %v2197, 1e-05
      %v2202 = vadd.f32 %v2198, 1e-05
      %v2203 = vrsqrt.pop %v2199
      %v2204 = vrsqrt.pop %v2200
      %v2205 = vrsqrt.pop %v2201
      %v2206 = vrsqrt.pop %v2202
      %v2207 = vld [vmem:[%s4 + $0x1] sm:$0x1]
      %v2208 = vlaneseq
      %v2209 = vshrl.u32 %v2208, 7
      %v2210 = vsub.s32 0, %v2209
      %v2211 = vrot.slane %v2207, %v2210
      %v2212 = vmul.f32 %v2203, %v2211
      %v2213 = vmul.f32 %v2204, %v2211
      %v2214 = vmul.f32 %v2205, %v2211
      %v2215 = vmul.f32 %v2206, %v2211
      %v2216 = vsub.f32 %v2147, %v2163
      %v2217 = vsub.f32 %v2148, %v2164
      %v2218 = vsub.f32 %v2149, %v2165
      %v2219 = vsub.f32 %v2150, %v2166
      %v2220 = vmul.f32 %v2216, %v2212
      %v2221 = vmul.f32 %v2217, %v2213
      %v2222 = vmul.f32 %v2218, %v2214
      %v2223 = vmul.f32 %v2219, %v2215
      %v2224 = vld [vmem:[%s5 + $0x1] sm:$0x1]
      %v2225 = vlaneseq
      %v2226 = vshrl.u32 %v2225, 7
      %v2227 = vsub.s32 0, %v2226
      %v2228 = vrot.slane %v2224, %v2227
      %v2229 = vadd.f32 %v2220, %v2228
      %v2230 = vadd.f32 %v2221, %v2228
      %v2231 = vadd.f32 %v2222, %v2228
      %v2232 = vadd.f32 %v2223, %v2228
      %v2233 = vpack.c.bf16 %v2230, %v2229
      %v2234 = vpack.c.bf16 %v2232, %v2231
      %s2235 = scalar_lea.vmem %s7, 144
      %v2236 = vld [vmem:[%s2235] sm:$0xf]
      %v2237 = vld [vmem:[%s2235 + $0x4] sm:$0xf]
      %v2238 = vld [vmem:[%s2235 + $0x8] sm:$0xf]
      %v2239 = vld [vmem:[%s2235 + $0xc] sm:$0xf]
      %v2244 = vunpack.c.l.b16 %v2236
      %v2245 = vunpack.c.l.b16 %v2237
      %v2246 = vunpack.c.l.b16 %v2238
      %v2247 = vunpack.c.l.b16 %v2239
      %v2248 = vpack.c.b16 %v2245, %v2244
      %v2249 = vpack.c.b16 %v2247, %v2246
      %v2253 = vsel %vm1313, %v2233, 0
      %v2256 = vsel %vm1313, %v2234, 0
      %2258 = vmatprep.subr.bf16.mxu0 0
      %2259 = vmatpush1.bf16.msra.mxu0 0
      %2260 = vmatprep.subr.bf16.mxu0 0
      %2261 = vmatpush1.bf16.msra.mxu0 0
      %2262 = vmatprep.subr.bf16.mxu0 0
      %2263 = vmatpush1.bf16.msra.mxu0 0
      %2264 = vmatprep.subr.bf16.mxu0 0
      %2265 = vmatpush1.bf16.msra.mxu0 0
      %2266 = vmatprep.subr.bf16.mxu0 0
      %2267 = vmatpush1.bf16.msra.mxu0 0
      %2268 = vmatprep.subr.bf16.mxu0 0
      %2269 = vmatpush1.bf16.msra.mxu0 0
      %2270 = vmatprep.subr.bf16.mxu0 0
      %2271 = vmatpush1.bf16.msra.mxu0 %v2249
      %2272 = vmatprep.subr.bf16.mxu0 0
      %2273 = vmatpush1.bf16.msra.mxu0 %v2248
      %2274 = vmatprep.subr.bf16.mxu0 0
      %2275 = vmatpush2.bf16.msra.mxu0 0
      %2276 = vmatprep.subr.bf16.mxu0 0
      %2277 = vmatpush2.bf16.msra.mxu0 0
      %2278 = vmatprep.subr.bf16.mxu0 0
      %2279 = vmatpush2.bf16.msra.mxu0 0
      %2280 = vmatprep.subr.bf16.mxu0 0
      %2281 = vmatpush2.bf16.msra.mxu0 0
      %2282 = vmatprep.subr.bf16.mxu0 0
      %2283 = vmatpush2.bf16.msra.mxu0 0
      %2284 = vmatprep.subr.bf16.mxu0 0
      %2285 = vmatpush2.bf16.msra.mxu0 0
      %2286 = vmatprep.subr.bf16.mxu0 0
      %2287 = vmatpush2.bf16.msra.mxu0 0
      %2288 = vmatprep.subr.bf16.mxu0 0
      %2289 = vmatpush2.bf16.msra.mxu0 0
      %2290 = vmatprep.mubr.bf16.mxu0 0
      %2291 = vmatmul.mubr.bf16.gmra.mxu0 %v2253
      %v2292 = vpop.f32.mrf.mxu0
      %v2293 = vadd.f32 0.0, %v2292
      %v2294 = vpop.f32.mrf.mxu0
      %v2295 = vpop.f32.mrf.mxu0
      %v2296 = vadd.f32 0.0, %v2295
      %v2297 = vpop.f32.mrf.mxu0
      %2298 = vmatprep.mubr.bf16.mxu0 0
      %2299 = vmatmul.mubr.bf16.gmra.mxu0 %v2256
      %v2300 = vpop.f32.mrf.mxu0
      %v2301 = vadd.f32 0.0, %v2300
      %v2302 = vpop.f32.mrf.mxu0
      %v2303 = vpop.f32.mrf.mxu0
      %v2304 = vadd.f32 0.0, %v2303
      %v2305 = vpop.f32.mrf.mxu0
      %2306 = vdwg.mxu0
      %v2307 = vrot.slane %v2293, 4
      %v2308 = vrot.slane %v2296, 4
      %v2309 = vrot.slane %v2301, 4
      %v2310 = vrot.slane %v2304, 4
      %v2311 = vsel %vm534, %v2309, %v2310
      %v2312 = vsel %vm534, %v2308, %v2309
      %v2313 = vsel %vm534, %v2307, %v2308
      %v2314 = vsel %vm534, %v2310, %v2307
      %v2315 = vsel %vm559, %v2314, 0.0
      %v2316 = vsel %vm560, %v2313, 0.0
      %v2317 = vsel %vm561, %v2312, 0.0
      %v2318 = vsel %vm562, %v2311, 0.0
      %s2319 = scalar_lea.vmem %s7, 160
      %v2320 = vld [vmem:[%s2319] sm:$0xf]
      %v2321 = vld [vmem:[%s2319 + $0x4] sm:$0xf]
      %v2322 = vld [vmem:[%s2319 + $0x8] sm:$0xf]
      %v2323 = vld [vmem:[%s2319 + $0xc] sm:$0xf]
      %v2328 = vunpack.c.l.b16 %v2320
      %v2329 = vunpack.c.l.b16 %v2321
      %v2330 = vunpack.c.l.b16 %v2322
      %v2331 = vunpack.c.l.b16 %v2323
      %v2332 = vpack.c.b16 %v2329, %v2328
      %v2333 = vpack.c.b16 %v2331, %v2330
      %2336 = vmatprep.subr.bf16.mxu0 0
      %2337 = vmatpush1.bf16.msra.mxu0 0
      %2338 = vmatprep.subr.bf16.mxu0 0
      %2339 = vmatpush1.bf16.msra.mxu0 0
      %2340 = vmatprep.subr.bf16.mxu0 0
      %2341 = vmatpush1.bf16.msra.mxu0 0
      %2342 = vmatprep.subr.bf16.mxu0 0
      %2343 = vmatpush1.bf16.msra.mxu0 0
      %2344 = vmatprep.subr.bf16.mxu0 0
      %2345 = vmatpush1.bf16.msra.mxu0 0
      %2346 = vmatprep.subr.bf16.mxu0 0
      %2347 = vmatpush1.bf16.msra.mxu0 0
      %2348 = vmatprep.subr.bf16.mxu0 0
      %2349 = vmatpush1.bf16.msra.mxu0 %v2333
      %2350 = vmatprep.subr.bf16.mxu0 0
      %2351 = vmatpush1.bf16.msra.mxu0 %v2332
      %2352 = vmatprep.subr.bf16.mxu0 0
      %2353 = vmatpush2.bf16.msra.mxu0 0
      %2354 = vmatprep.subr.bf16.mxu0 0
      %2355 = vmatpush2.bf16.msra.mxu0 0
      %2356 = vmatprep.subr.bf16.mxu0 0
      %2357 = vmatpush2.bf16.msra.mxu0 0
      %2358 = vmatprep.subr.bf16.mxu0 0
      %2359 = vmatpush2.bf16.msra.mxu0 0
      %2360 = vmatprep.subr.bf16.mxu0 0
      %2361 = vmatpush2.bf16.msra.mxu0 0
      %2362 = vmatprep.subr.bf16.mxu0 0
      %2363 = vmatpush2.bf16.msra.mxu0 0
      %2364 = vmatprep.subr.bf16.mxu0 0
      %2365 = vmatpush2.bf16.msra.mxu0 0
      %2366 = vmatprep.subr.bf16.mxu0 0
      %2367 = vmatpush2.bf16.msra.mxu0 0
      %2368 = vmatprep.mubr.bf16.mxu0 0
      %2369 = vmatmul.mubr.bf16.gmra.mxu0 %v2253
      %v2370 = vpop.f32.mrf.mxu0
      %v2371 = vadd.f32 0.0, %v2370
      %v2372 = vpop.f32.mrf.mxu0
      %v2373 = vpop.f32.mrf.mxu0
      %v2374 = vadd.f32 0.0, %v2373
      %v2375 = vpop.f32.mrf.mxu0
      %2376 = vmatprep.mubr.bf16.mxu0 0
      %2377 = vmatmul.mubr.bf16.gmra.mxu0 %v2256
      %v2378 = vpop.f32.mrf.mxu0
      %v2379 = vadd.f32 0.0, %v2378
      %v2380 = vpop.f32.mrf.mxu0
      %v2381 = vpop.f32.mrf.mxu0
      %v2382 = vadd.f32 0.0, %v2381
      %v2383 = vpop.f32.mrf.mxu0
      %2384 = vdwg.mxu0
      %v2385 = vrot.slane %v2371, 5
      %v2386 = vrot.slane %v2374, 5
      %v2387 = vrot.slane %v2379, 5
      %v2388 = vrot.slane %v2382, 5
      %v2389 = vsel %vm625, %v2387, %v2388
      %v2390 = vsel %vm625, %v2386, %v2387
      %v2391 = vsel %vm625, %v2385, %v2386
      %v2392 = vsel %vm625, %v2388, %v2385
      %v2393 = vsel %vm650, %v2392, 0.0
      %v2394 = vsel %vm651, %v2391, 0.0
      %v2395 = vsel %vm652, %v2390, 0.0
      %v2396 = vsel %vm653, %v2389, 0.0
      %v2397 = vadd.f32 %v2315, %v2393
      %v2398 = vadd.f32 %v2316, %v2394
      %v2399 = vadd.f32 %v2317, %v2395
      %v2400 = vadd.f32 %v2318, %v2396
      %s2401 = scalar_lea.vmem %s7, 176
      %v2402 = vld [vmem:[%s2401] sm:$0xf]
      %v2403 = vld [vmem:[%s2401 + $0x4] sm:$0xf]
      %v2404 = vld [vmem:[%s2401 + $0x8] sm:$0xf]
      %v2405 = vld [vmem:[%s2401 + $0xc] sm:$0xf]
      %v2410 = vunpack.c.l.b16 %v2402
      %v2411 = vunpack.c.l.b16 %v2403
      %v2412 = vunpack.c.l.b16 %v2404
      %v2413 = vunpack.c.l.b16 %v2405
      %v2414 = vpack.c.b16 %v2411, %v2410
      %v2415 = vpack.c.b16 %v2413, %v2412
      %2418 = vmatprep.subr.bf16.mxu0 0
      %2419 = vmatpush1.bf16.msra.mxu0 0
      %2420 = vmatprep.subr.bf16.mxu0 0
      %2421 = vmatpush1.bf16.msra.mxu0 0
      %2422 = vmatprep.subr.bf16.mxu0 0
      %2423 = vmatpush1.bf16.msra.mxu0 0
      %2424 = vmatprep.subr.bf16.mxu0 0
      %2425 = vmatpush1.bf16.msra.mxu0 0
      %2426 = vmatprep.subr.bf16.mxu0 0
      %2427 = vmatpush1.bf16.msra.mxu0 0
      %2428 = vmatprep.subr.bf16.mxu0 0
      %2429 = vmatpush1.bf16.msra.mxu0 0
      %2430 = vmatprep.subr.bf16.mxu0 0
      %2431 = vmatpush1.bf16.msra.mxu0 %v2415
      %2432 = vmatprep.subr.bf16.mxu0 0
      %2433 = vmatpush1.bf16.msra.mxu0 %v2414
      %2434 = vmatprep.subr.bf16.mxu0 0
      %2435 = vmatpush2.bf16.msra.mxu0 0
      %2436 = vmatprep.subr.bf16.mxu0 0
      %2437 = vmatpush2.bf16.msra.mxu0 0
      %2438 = vmatprep.subr.bf16.mxu0 0
      %2439 = vmatpush2.bf16.msra.mxu0 0
      %2440 = vmatprep.subr.bf16.mxu0 0
      %2441 = vmatpush2.bf16.msra.mxu0 0
      %2442 = vmatprep.subr.bf16.mxu0 0
      %2443 = vmatpush2.bf16.msra.mxu0 0
      %2444 = vmatprep.subr.bf16.mxu0 0
      %2445 = vmatpush2.bf16.msra.mxu0 0
      %2446 = vmatprep.subr.bf16.mxu0 0
      %2447 = vmatpush2.bf16.msra.mxu0 0
      %2448 = vmatprep.subr.bf16.mxu0 0
      %2449 = vmatpush2.bf16.msra.mxu0 0
      %2450 = vmatprep.mubr.bf16.mxu0 0
      %2451 = vmatmul.mubr.bf16.gmra.mxu0 %v2253
      %v2452 = vpop.f32.mrf.mxu0
      %v2453 = vadd.f32 0.0, %v2452
      %v2454 = vpop.f32.mrf.mxu0
      %v2455 = vpop.f32.mrf.mxu0
      %v2456 = vadd.f32 0.0, %v2455
      %v2457 = vpop.f32.mrf.mxu0
      %2458 = vmatprep.mubr.bf16.mxu0 0
      %2459 = vmatmul.mubr.bf16.gmra.mxu0 %v2256
      %v2460 = vpop.f32.mrf.mxu0
      %v2461 = vadd.f32 0.0, %v2460
      %v2462 = vpop.f32.mrf.mxu0
      %v2463 = vpop.f32.mrf.mxu0
      %v2464 = vadd.f32 0.0, %v2463
      %v2465 = vpop.f32.mrf.mxu0
      %2466 = vdwg.mxu0
      %v2467 = vrot.slane %v2453, 6
      %v2468 = vrot.slane %v2456, 6
      %v2469 = vrot.slane %v2461, 6
      %v2470 = vrot.slane %v2464, 6
      %v2471 = vsel %vm720, %v2469, %v2470
      %v2472 = vsel %vm720, %v2468, %v2469
      %v2473 = vsel %vm720, %v2467, %v2468
      %v2474 = vsel %vm720, %v2470, %v2467
      %v2475 = vsel %vm745, %v2474, 0.0
      %v2476 = vsel %vm746, %v2473, 0.0
      %v2477 = vsel %vm747, %v2472, 0.0
      %v2478 = vsel %vm748, %v2471, 0.0
      %v2479 = vadd.f32 %v2397, %v2475
      %v2480 = vadd.f32 %v2398, %v2476
      %v2481 = vadd.f32 %v2399, %v2477
      %v2482 = vadd.f32 %v2400, %v2478
      %s2483 = scalar_lea.vmem %s7, 192
      %v2484 = vld [vmem:[%s2483] sm:$0xf]
      %v2485 = vld [vmem:[%s2483 + $0x4] sm:$0xf]
      %v2486 = vld [vmem:[%s2483 + $0x8] sm:$0xf]
      %v2487 = vld [vmem:[%s2483 + $0xc] sm:$0xf]
      %v2492 = vunpack.c.l.b16 %v2484
      %v2493 = vunpack.c.l.b16 %v2485
      %v2494 = vunpack.c.l.b16 %v2486
      %v2495 = vunpack.c.l.b16 %v2487
      %v2496 = vpack.c.b16 %v2493, %v2492
      %v2497 = vpack.c.b16 %v2495, %v2494
      %2500 = vmatprep.subr.bf16.mxu0 0
      %2501 = vmatpush1.bf16.msra.mxu0 0
      %2502 = vmatprep.subr.bf16.mxu0 0
      %2503 = vmatpush1.bf16.msra.mxu0 0
      %2504 = vmatprep.subr.bf16.mxu0 0
      %2505 = vmatpush1.bf16.msra.mxu0 0
      %2506 = vmatprep.subr.bf16.mxu0 0
      %2507 = vmatpush1.bf16.msra.mxu0 0
      %2508 = vmatprep.subr.bf16.mxu0 0
      %2509 = vmatpush1.bf16.msra.mxu0 0
      %2510 = vmatprep.subr.bf16.mxu0 0
      %2511 = vmatpush1.bf16.msra.mxu0 0
      %2512 = vmatprep.subr.bf16.mxu0 0
      %2513 = vmatpush1.bf16.msra.mxu0 %v2497
      %2514 = vmatprep.subr.bf16.mxu0 0
      %2515 = vmatpush1.bf16.msra.mxu0 %v2496
      %2516 = vmatprep.subr.bf16.mxu0 0
      %2517 = vmatpush2.bf16.msra.mxu0 0
      %2518 = vmatprep.subr.bf16.mxu0 0
      %2519 = vmatpush2.bf16.msra.mxu0 0
      %2520 = vmatprep.subr.bf16.mxu0 0
      %2521 = vmatpush2.bf16.msra.mxu0 0
      %2522 = vmatprep.subr.bf16.mxu0 0
      %2523 = vmatpush2.bf16.msra.mxu0 0
      %2524 = vmatprep.subr.bf16.mxu0 0
      %2525 = vmatpush2.bf16.msra.mxu0 0
      %2526 = vmatprep.subr.bf16.mxu0 0
      %2527 = vmatpush2.bf16.msra.mxu0 0
      %2528 = vmatprep.subr.bf16.mxu0 0
      %2529 = vmatpush2.bf16.msra.mxu0 0
      %2530 = vmatprep.subr.bf16.mxu0 0
      %2531 = vmatpush2.bf16.msra.mxu0 0
      %2532 = vmatprep.mubr.bf16.mxu0 0
      %2533 = vmatmul.mubr.bf16.gmra.mxu0 %v2253
      %v2534 = vpop.f32.mrf.mxu0
      %v2535 = vadd.f32 0.0, %v2534
      %v2536 = vpop.f32.mrf.mxu0
      %v2537 = vpop.f32.mrf.mxu0
      %v2538 = vadd.f32 0.0, %v2537
      %v2539 = vpop.f32.mrf.mxu0
      %2540 = vmatprep.mubr.bf16.mxu0 0
      %2541 = vmatmul.mubr.bf16.gmra.mxu0 %v2256
      %v2542 = vpop.f32.mrf.mxu0
      %v2543 = vadd.f32 0.0, %v2542
      %v2544 = vpop.f32.mrf.mxu0
      %v2545 = vpop.f32.mrf.mxu0
      %v2546 = vadd.f32 0.0, %v2545
      %v2547 = vpop.f32.mrf.mxu0
      %2548 = vdwg.mxu0
      %v2549 = vrot.slane %v2535, 7
      %v2550 = vrot.slane %v2538, 7
      %v2551 = vrot.slane %v2543, 7
      %v2552 = vrot.slane %v2546, 7
      %v2553 = vsel %vm815, %v2551, %v2552
      %v2554 = vsel %vm815, %v2550, %v2551
      %v2555 = vsel %vm815, %v2549, %v2550
      %v2556 = vsel %vm815, %v2552, %v2549
      %v2557 = vsel %vm840, %v2556, 0.0
      %v2558 = vsel %vm841, %v2555, 0.0
      %v2559 = vsel %vm842, %v2554, 0.0
      %v2560 = vsel %vm843, %v2553, 0.0
      %v2561 = vadd.f32 %v2479, %v2557
      %v2562 = vadd.f32 %v2480, %v2558
      %v2563 = vadd.f32 %v2481, %v2559
      %v2564 = vadd.f32 %v2482, %v2560
      %s2565 = scalar_lea.vmem %s7, 208
      %v2566 = vld [vmem:[%s2565] sm:$0xf]
      %v2567 = vld [vmem:[%s2565 + $0x4] sm:$0xf]
      %v2568 = vld [vmem:[%s2565 + $0x8] sm:$0xf]
      %v2569 = vld [vmem:[%s2565 + $0xc] sm:$0xf]
      %v2574 = vunpack.c.l.b16 %v2566
      %v2575 = vunpack.c.l.b16 %v2567
      %v2576 = vunpack.c.l.b16 %v2568
      %v2577 = vunpack.c.l.b16 %v2569
      %v2578 = vpack.c.b16 %v2575, %v2574
      %v2579 = vpack.c.b16 %v2577, %v2576
      %2582 = vmatprep.subr.bf16.mxu0 0
      %2583 = vmatpush1.bf16.msra.mxu0 0
      %2584 = vmatprep.subr.bf16.mxu0 0
      %2585 = vmatpush1.bf16.msra.mxu0 0
      %2586 = vmatprep.subr.bf16.mxu0 0
      %2587 = vmatpush1.bf16.msra.mxu0 0
      %2588 = vmatprep.subr.bf16.mxu0 0
      %2589 = vmatpush1.bf16.msra.mxu0 0
      %2590 = vmatprep.subr.bf16.mxu0 0
      %2591 = vmatpush1.bf16.msra.mxu0 0
      %2592 = vmatprep.subr.bf16.mxu0 0
      %2593 = vmatpush1.bf16.msra.mxu0 0
      %2594 = vmatprep.subr.bf16.mxu0 0
      %2595 = vmatpush1.bf16.msra.mxu0 %v2579
      %2596 = vmatprep.subr.bf16.mxu0 0
      %2597 = vmatpush1.bf16.msra.mxu0 %v2578
      %2598 = vmatprep.subr.bf16.mxu0 0
      %2599 = vmatpush2.bf16.msra.mxu0 0
      %2600 = vmatprep.subr.bf16.mxu0 0
      %2601 = vmatpush2.bf16.msra.mxu0 0
      %2602 = vmatprep.subr.bf16.mxu0 0
      %2603 = vmatpush2.bf16.msra.mxu0 0
      %2604 = vmatprep.subr.bf16.mxu0 0
      %2605 = vmatpush2.bf16.msra.mxu0 0
      %2606 = vmatprep.subr.bf16.mxu0 0
      %2607 = vmatpush2.bf16.msra.mxu0 0
      %2608 = vmatprep.subr.bf16.mxu0 0
      %2609 = vmatpush2.bf16.msra.mxu0 0
      %2610 = vmatprep.subr.bf16.mxu0 0
      %2611 = vmatpush2.bf16.msra.mxu0 0
      %2612 = vmatprep.subr.bf16.mxu0 0
      %2613 = vmatpush2.bf16.msra.mxu0 0
      %2614 = vmatprep.mubr.bf16.mxu0 0
      %2615 = vmatmul.mubr.bf16.gmra.mxu0 %v2253
      %v2616 = vpop.f32.mrf.mxu0
      %v2617 = vadd.f32 0.0, %v2616
      %v2618 = vpop.f32.mrf.mxu0
      %v2619 = vpop.f32.mrf.mxu0
      %v2620 = vadd.f32 0.0, %v2619
      %v2621 = vpop.f32.mrf.mxu0
      %2622 = vmatprep.mubr.bf16.mxu0 0
      %2623 = vmatmul.mubr.bf16.gmra.mxu0 %v2256
      %v2624 = vpop.f32.mrf.mxu0
      %v2625 = vadd.f32 0.0, %v2624
      %v2626 = vpop.f32.mrf.mxu0
      %v2627 = vpop.f32.mrf.mxu0
      %v2628 = vadd.f32 0.0, %v2627
      %v2629 = vpop.f32.mrf.mxu0
      %2630 = vdwg.mxu0
      %v2631 = vadd.f32 %v2561, %v2617
      %v2632 = vadd.f32 %v2562, %v2620
      %v2633 = vadd.f32 %v2563, %v2625
      %v2634 = vadd.f32 %v2564, %v2628
      %s2635 = scalar_lea.vmem %s7, 224
      %v2636 = vld [vmem:[%s2635] sm:$0xf]
      %v2637 = vld [vmem:[%s2635 + $0x4] sm:$0xf]
      %v2638 = vld [vmem:[%s2635 + $0x8] sm:$0xf]
      %v2639 = vld [vmem:[%s2635 + $0xc] sm:$0xf]
      %v2644 = vunpack.c.l.b16 %v2636
      %v2645 = vunpack.c.l.b16 %v2637
      %v2646 = vunpack.c.l.b16 %v2638
      %v2647 = vunpack.c.l.b16 %v2639
      %v2648 = vpack.c.b16 %v2645, %v2644
      %v2649 = vpack.c.b16 %v2647, %v2646
      %2652 = vmatprep.subr.bf16.mxu0 0
      %2653 = vmatpush1.bf16.msra.mxu0 0
      %2654 = vmatprep.subr.bf16.mxu0 0
      %2655 = vmatpush1.bf16.msra.mxu0 0
      %2656 = vmatprep.subr.bf16.mxu0 0
      %2657 = vmatpush1.bf16.msra.mxu0 0
      %2658 = vmatprep.subr.bf16.mxu0 0
      %2659 = vmatpush1.bf16.msra.mxu0 0
      %2660 = vmatprep.subr.bf16.mxu0 0
      %2661 = vmatpush1.bf16.msra.mxu0 0
      %2662 = vmatprep.subr.bf16.mxu0 0
      %2663 = vmatpush1.bf16.msra.mxu0 0
      %2664 = vmatprep.subr.bf16.mxu0 0
      %2665 = vmatpush1.bf16.msra.mxu0 %v2649
      %2666 = vmatprep.subr.bf16.mxu0 0
      %2667 = vmatpush1.bf16.msra.mxu0 %v2648
      %2668 = vmatprep.subr.bf16.mxu0 0
      %2669 = vmatpush2.bf16.msra.mxu0 0
      %2670 = vmatprep.subr.bf16.mxu0 0
      %2671 = vmatpush2.bf16.msra.mxu0 0
      %2672 = vmatprep.subr.bf16.mxu0 0
      %2673 = vmatpush2.bf16.msra.mxu0 0
      %2674 = vmatprep.subr.bf16.mxu0 0
      %2675 = vmatpush2.bf16.msra.mxu0 0
      %2676 = vmatprep.subr.bf16.mxu0 0
      %2677 = vmatpush2.bf16.msra.mxu0 0
      %2678 = vmatprep.subr.bf16.mxu0 0
      %2679 = vmatpush2.bf16.msra.mxu0 0
      %2680 = vmatprep.subr.bf16.mxu0 0
      %2681 = vmatpush2.bf16.msra.mxu0 0
      %2682 = vmatprep.subr.bf16.mxu0 0
      %2683 = vmatpush2.bf16.msra.mxu0 0
      %2684 = vmatprep.mubr.bf16.mxu0 0
      %2685 = vmatmul.mubr.bf16.gmra.mxu0 %v2253
      %v2686 = vpop.f32.mrf.mxu0
      %v2687 = vadd.f32 0.0, %v2686
      %v2688 = vpop.f32.mrf.mxu0
      %v2689 = vpop.f32.mrf.mxu0
      %v2690 = vadd.f32 0.0, %v2689
      %v2691 = vpop.f32.mrf.mxu0
      %2692 = vmatprep.mubr.bf16.mxu0 0
      %2693 = vmatmul.mubr.bf16.gmra.mxu0 %v2256
      %v2694 = vpop.f32.mrf.mxu0
      %v2695 = vadd.f32 0.0, %v2694
      %v2696 = vpop.f32.mrf.mxu0
      %v2697 = vpop.f32.mrf.mxu0
      %v2698 = vadd.f32 0.0, %v2697
      %v2699 = vpop.f32.mrf.mxu0
      %2700 = vdwg.mxu0
      %v2701 = vrot.slane %v2687, 1
      %v2702 = vrot.slane %v2690, 1
      %v2703 = vrot.slane %v2695, 1
      %v2704 = vrot.slane %v2698, 1
      %v2705 = vsel %vm968, %v2703, %v2704
      %v2706 = vsel %vm968, %v2702, %v2703
      %v2707 = vsel %vm968, %v2701, %v2702
      %v2708 = vsel %vm968, %v2704, %v2701
      %v2709 = vsel %vm993, %v2707, 0.0
      %v2710 = vsel %vm994, %v2706, 0.0
      %v2711 = vsel %vm995, %v2705, 0.0
      %v2712 = vsel %vm996, %v2708, 0.0
      %v2713 = vadd.f32 %v2631, %v2709
      %v2714 = vadd.f32 %v2632, %v2710
      %v2715 = vadd.f32 %v2633, %v2711
      %v2716 = vadd.f32 %v2634, %v2712
      %s2717 = scalar_lea.vmem %s7, 240
      %v2718 = vld [vmem:[%s2717] sm:$0xf]
      %v2719 = vld [vmem:[%s2717 + $0x4] sm:$0xf]
      %v2720 = vld [vmem:[%s2717 + $0x8] sm:$0xf]
      %v2721 = vld [vmem:[%s2717 + $0xc] sm:$0xf]
      %v2726 = vunpack.c.l.b16 %v2718
      %v2727 = vunpack.c.l.b16 %v2719
      %v2728 = vunpack.c.l.b16 %v2720
      %v2729 = vunpack.c.l.b16 %v2721
      %v2730 = vpack.c.b16 %v2727, %v2726
      %v2731 = vpack.c.b16 %v2729, %v2728
      %2734 = vmatprep.subr.bf16.mxu0 0
      %2735 = vmatpush1.bf16.msra.mxu0 0
      %2736 = vmatprep.subr.bf16.mxu0 0
      %2737 = vmatpush1.bf16.msra.mxu0 0
      %2738 = vmatprep.subr.bf16.mxu0 0
      %2739 = vmatpush1.bf16.msra.mxu0 0
      %2740 = vmatprep.subr.bf16.mxu0 0
      %2741 = vmatpush1.bf16.msra.mxu0 0
      %2742 = vmatprep.subr.bf16.mxu0 0
      %2743 = vmatpush1.bf16.msra.mxu0 0
      %2744 = vmatprep.subr.bf16.mxu0 0
      %2745 = vmatpush1.bf16.msra.mxu0 0
      %2746 = vmatprep.subr.bf16.mxu0 0
      %2747 = vmatpush1.bf16.msra.mxu0 %v2731
      %2748 = vmatprep.subr.bf16.mxu0 0
      %2749 = vmatpush1.bf16.msra.mxu0 %v2730
      %2750 = vmatprep.subr.bf16.mxu0 0
      %2751 = vmatpush2.bf16.msra.mxu0 0
      %2752 = vmatprep.subr.bf16.mxu0 0
      %2753 = vmatpush2.bf16.msra.mxu0 0
      %2754 = vmatprep.subr.bf16.mxu0 0
      %2755 = vmatpush2.bf16.msra.mxu0 0
      %2756 = vmatprep.subr.bf16.mxu0 0
      %2757 = vmatpush2.bf16.msra.mxu0 0
      %2758 = vmatprep.subr.bf16.mxu0 0
      %2759 = vmatpush2.bf16.msra.mxu0 0
      %2760 = vmatprep.subr.bf16.mxu0 0
      %2761 = vmatpush2.bf16.msra.mxu0 0
      %2762 = vmatprep.subr.bf16.mxu0 0
      %2763 = vmatpush2.bf16.msra.mxu0 0
      %2764 = vmatprep.subr.bf16.mxu0 0
      %2765 = vmatpush2.bf16.msra.mxu0 0
      %2766 = vmatprep.mubr.bf16.mxu0 0
      %2767 = vmatmul.mubr.bf16.gmra.mxu0 %v2253
      %v2768 = vpop.f32.mrf.mxu0
      %v2769 = vadd.f32 0.0, %v2768
      %v2770 = vpop.f32.mrf.mxu0
      %v2771 = vpop.f32.mrf.mxu0
      %v2772 = vadd.f32 0.0, %v2771
      %v2773 = vpop.f32.mrf.mxu0
      %2774 = vmatprep.mubr.bf16.mxu0 0
      %2775 = vmatmul.mubr.bf16.gmra.mxu0 %v2256
      %v2776 = vpop.f32.mrf.mxu0
      %v2777 = vadd.f32 0.0, %v2776
      %v2778 = vpop.f32.mrf.mxu0
      %v2779 = vpop.f32.mrf.mxu0
      %v2780 = vadd.f32 0.0, %v2779
      %v2781 = vpop.f32.mrf.mxu0
      %2782 = vdwg.mxu0
      %v2783 = vrot.slane %v2769, 2
      %v2784 = vrot.slane %v2772, 2
      %v2785 = vrot.slane %v2777, 2
      %v2786 = vrot.slane %v2780, 2
      %v2787 = vsel %vm1063, %v2785, %v2786
      %v2788 = vsel %vm1063, %v2784, %v2785
      %v2789 = vsel %vm1063, %v2783, %v2784
      %v2790 = vsel %vm1063, %v2786, %v2783
      %v2791 = vsel %vm1088, %v2789, 0.0
      %v2792 = vsel %vm1089, %v2788, 0.0
      %v2793 = vsel %vm1090, %v2787, 0.0
      %v2794 = vsel %vm1091, %v2790, 0.0
      %v2795 = vadd.f32 %v2713, %v2791
      %v2796 = vadd.f32 %v2714, %v2792
      %v2797 = vadd.f32 %v2715, %v2793
      %v2798 = vadd.f32 %v2716, %v2794
      %s2799 = scalar_lea.vmem %s7, 256
      %v2800 = vld [vmem:[%s2799] sm:$0xf]
      %v2801 = vld [vmem:[%s2799 + $0x4] sm:$0xf]
      %v2802 = vld [vmem:[%s2799 + $0x8] sm:$0xf]
      %v2803 = vld [vmem:[%s2799 + $0xc] sm:$0xf]
      %v2808 = vunpack.c.l.b16 %v2800
      %v2809 = vunpack.c.l.b16 %v2801
      %v2810 = vunpack.c.l.b16 %v2802
      %v2811 = vunpack.c.l.b16 %v2803
      %v2812 = vpack.c.b16 %v2809, %v2808
      %v2813 = vpack.c.b16 %v2811, %v2810
      %2816 = vmatprep.subr.bf16.mxu0 0
      %2817 = vmatpush1.bf16.msra.mxu0 0
      %2818 = vmatprep.subr.bf16.mxu0 0
      %2819 = vmatpush1.bf16.msra.mxu0 0
      %2820 = vmatprep.subr.bf16.mxu0 0
      %2821 = vmatpush1.bf16.msra.mxu0 0
      %2822 = vmatprep.subr.bf16.mxu0 0
      %2823 = vmatpush1.bf16.msra.mxu0 0
      %2824 = vmatprep.subr.bf16.mxu0 0
      %2825 = vmatpush1.bf16.msra.mxu0 0
      %2826 = vmatprep.subr.bf16.mxu0 0
      %2827 = vmatpush1.bf16.msra.mxu0 0
      %2828 = vmatprep.subr.bf16.mxu0 0
      %2829 = vmatpush1.bf16.msra.mxu0 %v2813
      %2830 = vmatprep.subr.bf16.mxu0 0
      %2831 = vmatpush1.bf16.msra.mxu0 %v2812
      %2832 = vmatprep.subr.bf16.mxu0 0
      %2833 = vmatpush2.bf16.msra.mxu0 0
      %2834 = vmatprep.subr.bf16.mxu0 0
      %2835 = vmatpush2.bf16.msra.mxu0 0
      %2836 = vmatprep.subr.bf16.mxu0 0
      %2837 = vmatpush2.bf16.msra.mxu0 0
      %2838 = vmatprep.subr.bf16.mxu0 0
      %2839 = vmatpush2.bf16.msra.mxu0 0
      %2840 = vmatprep.subr.bf16.mxu0 0
      %2841 = vmatpush2.bf16.msra.mxu0 0
      %2842 = vmatprep.subr.bf16.mxu0 0
      %2843 = vmatpush2.bf16.msra.mxu0 0
      %2844 = vmatprep.subr.bf16.mxu0 0
      %2845 = vmatpush2.bf16.msra.mxu0 0
      %2846 = vmatprep.subr.bf16.mxu0 0
      %2847 = vmatpush2.bf16.msra.mxu0 0
      %2848 = vmatprep.mubr.bf16.mxu0 0
      %2849 = vmatmul.mubr.bf16.gmra.mxu0 %v2253
      %v2850 = vpop.f32.mrf.mxu0
      %v2851 = vadd.f32 0.0, %v2850
      %v2852 = vpop.f32.mrf.mxu0
      %v2853 = vpop.f32.mrf.mxu0
      %v2854 = vadd.f32 0.0, %v2853
      %v2855 = vpop.f32.mrf.mxu0
      %2856 = vmatprep.mubr.bf16.mxu0 0
      %2857 = vmatmul.mubr.bf16.gmra.mxu0 %v2256
      %v2858 = vpop.f32.mrf.mxu0
      %v2859 = vadd.f32 0.0, %v2858
      %v2860 = vpop.f32.mrf.mxu0
      %v2861 = vpop.f32.mrf.mxu0
      %v2862 = vadd.f32 0.0, %v2861
      %v2863 = vpop.f32.mrf.mxu0
      %2864 = vdwg.mxu0
      %v2865 = vrot.slane %v2851, 3
      %v2866 = vrot.slane %v2854, 3
      %v2867 = vrot.slane %v2859, 3
      %v2868 = vrot.slane %v2862, 3
      %v2869 = vsel %vm1158, %v2867, %v2868
      %v2870 = vsel %vm1158, %v2866, %v2867
      %v2871 = vsel %vm1158, %v2865, %v2866
      %v2872 = vsel %vm1158, %v2868, %v2865
      %v2873 = vsel %vm1183, %v2871, 0.0
      %v2874 = vsel %vm1184, %v2870, 0.0
      %v2875 = vsel %vm1185, %v2869, 0.0
      %v2876 = vsel %vm1186, %v2872, 0.0
      %v2877 = vadd.f32 %v2795, %v2873
      %v2878 = vadd.f32 %v2796, %v2874
      %v2879 = vadd.f32 %v2797, %v2875
      %v2880 = vadd.f32 %v2798, %v2876
      %s2881 = scalar_lea.vmem %s7, 272
      %v2882 = vld [vmem:[%s2881] sm:$0xf]
      %v2883 = vld [vmem:[%s2881 + $0x4] sm:$0xf]
      %v2884 = vld [vmem:[%s2881 + $0x8] sm:$0xf]
      %v2885 = vld [vmem:[%s2881 + $0xc] sm:$0xf]
      %v2890 = vunpack.c.l.b16 %v2882
      %v2891 = vunpack.c.l.b16 %v2883
      %v2892 = vunpack.c.l.b16 %v2884
      %v2893 = vunpack.c.l.b16 %v2885
      %v2894 = vpack.c.b16 %v2891, %v2890
      %v2895 = vpack.c.b16 %v2893, %v2892
      %2898 = vmatprep.subr.bf16.mxu0 0
      %2899 = vmatpush1.bf16.msra.mxu0 0
      %2900 = vmatprep.subr.bf16.mxu0 0
      %2901 = vmatpush1.bf16.msra.mxu0 0
      %2902 = vmatprep.subr.bf16.mxu0 0
      %2903 = vmatpush1.bf16.msra.mxu0 0
      %2904 = vmatprep.subr.bf16.mxu0 0
      %2905 = vmatpush1.bf16.msra.mxu0 0
      %2906 = vmatprep.subr.bf16.mxu0 0
      %2907 = vmatpush1.bf16.msra.mxu0 0
      %2908 = vmatprep.subr.bf16.mxu0 0
      %2909 = vmatpush1.bf16.msra.mxu0 0
      %2910 = vmatprep.subr.bf16.mxu0 0
      %2911 = vmatpush1.bf16.msra.mxu0 %v2895
      %2912 = vmatprep.subr.bf16.mxu0 0
      %2913 = vmatpush1.bf16.msra.mxu0 %v2894
      %2914 = vmatprep.subr.bf16.mxu0 0
      %2915 = vmatpush2.bf16.msra.mxu0 0
      %2916 = vmatprep.subr.bf16.mxu0 0
      %2917 = vmatpush2.bf16.msra.mxu0 0
      %2918 = vmatprep.subr.bf16.mxu0 0
      %2919 = vmatpush2.bf16.msra.mxu0 0
      %2920 = vmatprep.subr.bf16.mxu0 0
      %2921 = vmatpush2.bf16.msra.mxu0 0
      %2922 = vmatprep.subr.bf16.mxu0 0
      %2923 = vmatpush2.bf16.msra.mxu0 0
      %2924 = vmatprep.subr.bf16.mxu0 0
      %2925 = vmatpush2.bf16.msra.mxu0 0
      %2926 = vmatprep.subr.bf16.mxu0 0
      %2927 = vmatpush2.bf16.msra.mxu0 0
      %2928 = vmatprep.subr.bf16.mxu0 0
      %2929 = vmatpush2.bf16.msra.mxu0 0
      %2930 = vmatprep.mubr.bf16.mxu0 0
      %2931 = vmatmul.mubr.bf16.gmra.mxu0 %v2253
      %v2932 = vpop.f32.mrf.mxu0
      %v2933 = vadd.f32 0.0, %v2932
      %v2934 = vpop.f32.mrf.mxu0
      %v2935 = vpop.f32.mrf.mxu0
      %v2936 = vadd.f32 0.0, %v2935
      %v2937 = vpop.f32.mrf.mxu0
      %2938 = vmatprep.mubr.bf16.mxu0 0
      %2939 = vmatmul.mubr.bf16.gmra.mxu0 %v2256
      %v2940 = vpop.f32.mrf.mxu0
      %v2941 = vadd.f32 0.0, %v2940
      %v2942 = vpop.f32.mrf.mxu0
      %v2943 = vpop.f32.mrf.mxu0
      %v2944 = vadd.f32 0.0, %v2943
      %v2945 = vpop.f32.mrf.mxu0
      %2946 = vdwg.mxu0
      %v2947 = vrot.slane %v2933, 4
      %v2948 = vrot.slane %v2936, 4
      %v2949 = vrot.slane %v2941, 4
      %v2950 = vrot.slane %v2944, 4
      %v2951 = vsel %vm534, %v2949, %v2950
      %v2952 = vsel %vm534, %v2948, %v2949
      %v2953 = vsel %vm534, %v2947, %v2948
      %v2954 = vsel %vm534, %v2950, %v2947
      %v2955 = vsel %vm1277, %v2953, 0.0
      %v2956 = vsel %vm1278, %v2952, 0.0
      %v2957 = vsel %vm1279, %v2951, 0.0
      %v2958 = vsel %vm1280, %v2954, 0.0
      %v2959 = vadd.f32 %v2877, %v2955
      %v2960 = vadd.f32 %v2878, %v2956
      %v2961 = vadd.f32 %v2879, %v2957
      %v2962 = vadd.f32 %v2880, %v2958
      %v2963 = vld [vmem:[%s6 + $0x1] sm:$0x1]
      %v2964 = vlaneseq
      %v2965 = vshrl.u32 %v2964, 7
      %v2966 = vsub.s32 0, %v2965
      %v2967 = vrot.slane %v2963, %v2966
      %v2968 = vadd.f32 %v2959, %v2967
      %v2969 = vadd.f32 %v2960, %v2967
      %v2970 = vadd.f32 %v2961, %v2967
      %v2971 = vadd.f32 %v2962, %v2967
      %v2972 = vmax.f32 %v2968, 0.0
      %v2973 = vmax.f32 %v2969, 0.0
      %v2974 = vmax.f32 %v2970, 0.0
      %v2975 = vmax.f32 %v2971, 0.0
      %v2976 = vadd.f32 %v2972, %v2139
      %v2977 = vadd.f32 %v2973, %v2140
      %v2978 = vadd.f32 %v2974, %v2141
      %v2979 = vadd.f32 %v2975, %v2142
      %v2980 = vlaneseq
      %v2981 = vshrl.u32 %v2980, 7
      %v2982 = vsub.s32 2, %v2981
      %v2983 = vrot.slane %v1304, %v2982
      %v2984 = vadd.f32 %v2976, %v2983
      %v2985 = vadd.f32 %v2977, %v2983
      %v2986 = vadd.f32 %v2978, %v2983
      %v2987 = vadd.f32 %v2979, %v2983
      %v2988 = vsel %vm1313, %v2984, 0.0
      %2989 = vadd.xlane.f32.xlu0 %v2988
      %v2990 = vpop.xlane.xlu0 %2989
      %v2991 = vsel %vm1313, %v2985, 0.0
      %2992 = vadd.xlane.f32.xlu0 %v2991
      %v2993 = vpop.xlane.xlu0 %2992
      %v2994 = vsel %vm1313, %v2986, 0.0
      %2995 = vadd.xlane.f32.xlu0 %v2994
      %v2996 = vpop.xlane.xlu0 %2995
      %v2997 = vsel %vm1313, %v2987, 0.0
      %2998 = vadd.xlane.f32.xlu0 %v2997
      %v2999 = vpop.xlane.xlu0 %2998
      %v3000 = vmul.f32 %v2990, %v1326
      %v3001 = vmul.f32 %v2993, %v1326
      %v3002 = vmul.f32 %v2996, %v1326
      %v3003 = vmul.f32 %v2999, %v1326
      %v3004 = vmul.f32 %v2984, %v2984
      %v3005 = vmul.f32 %v2985, %v2985
      %v3006 = vmul.f32 %v2986, %v2986
      %v3007 = vmul.f32 %v2987, %v2987
      %v3008 = vsel %vm1313, %v3004, 0.0
      %3009 = vadd.xlane.f32.xlu0 %v3008
      %v3010 = vpop.xlane.xlu0 %3009
      %v3011 = vsel %vm1313, %v3005, 0.0
      %3012 = vadd.xlane.f32.xlu0 %v3011
      %v3013 = vpop.xlane.xlu0 %3012
      %v3014 = vsel %vm1313, %v3006, 0.0
      %3015 = vadd.xlane.f32.xlu0 %v3014
      %v3016 = vpop.xlane.xlu0 %3015
      %v3017 = vsel %vm1313, %v3007, 0.0
      %3018 = vadd.xlane.f32.xlu0 %v3017
      %v3019 = vpop.xlane.xlu0 %3018
      %v3020 = vmul.f32 %v3010, %v1326
      %v3021 = vmul.f32 %v3013, %v1326
      %v3022 = vmul.f32 %v3016, %v1326
      %v3023 = vmul.f32 %v3019, %v1326
      %v3024 = vmul.f32 %v3000, %v3000
      %v3025 = vmul.f32 %v3001, %v3001
      %v3026 = vmul.f32 %v3002, %v3002
      %v3027 = vmul.f32 %v3003, %v3003
      %v3028 = vsub.f32 %v3020, %v3024
      %v3029 = vsub.f32 %v3021, %v3025
      %v3030 = vsub.f32 %v3022, %v3026
      %v3031 = vsub.f32 %v3023, %v3027
      %v3032 = vmax.f32 %v3028, 0.0
      %v3033 = vmax.f32 %v3029, 0.0
      %v3034 = vmax.f32 %v3030, 0.0
      %v3035 = vmax.f32 %v3031, 0.0
      %v3036 = vadd.f32 %v3032, 1e-05
      %v3037 = vadd.f32 %v3033, 1e-05
      %v3038 = vadd.f32 %v3034, 1e-05
      %v3039 = vadd.f32 %v3035, 1e-05
      %v3040 = vrsqrt.pop %v3036
      %v3041 = vrsqrt.pop %v3037
      %v3042 = vrsqrt.pop %v3038
      %v3043 = vrsqrt.pop %v3039
      %v3044 = vld [vmem:[%s4 + $0x2] sm:$0x1]
      %v3045 = vlaneseq
      %v3046 = vshrl.u32 %v3045, 7
      %v3047 = vsub.s32 0, %v3046
      %v3048 = vrot.slane %v3044, %v3047
      %v3049 = vmul.f32 %v3040, %v3048
      %v3050 = vmul.f32 %v3041, %v3048
      %v3051 = vmul.f32 %v3042, %v3048
      %v3052 = vmul.f32 %v3043, %v3048
      %v3053 = vsub.f32 %v2984, %v3000
      %v3054 = vsub.f32 %v2985, %v3001
      %v3055 = vsub.f32 %v2986, %v3002
      %v3056 = vsub.f32 %v2987, %v3003
      %v3057 = vmul.f32 %v3053, %v3049
      %v3058 = vmul.f32 %v3054, %v3050
      %v3059 = vmul.f32 %v3055, %v3051
      %v3060 = vmul.f32 %v3056, %v3052
      %v3061 = vld [vmem:[%s5 + $0x2] sm:$0x1]
      %v3062 = vlaneseq
      %v3063 = vshrl.u32 %v3062, 7
      %v3064 = vsub.s32 0, %v3063
      %v3065 = vrot.slane %v3061, %v3064
      %v3066 = vadd.f32 %v3057, %v3065
      %v3067 = vadd.f32 %v3058, %v3065
      %v3068 = vadd.f32 %v3059, %v3065
      %v3069 = vadd.f32 %v3060, %v3065
      %v3070 = vpack.c.bf16 %v3067, %v3066
      %v3071 = vpack.c.bf16 %v3069, %v3068
      %s3072 = scalar_lea.vmem %s7, 288
      %v3073 = vld [vmem:[%s3072] sm:$0xf]
      %v3074 = vld [vmem:[%s3072 + $0x4] sm:$0xf]
      %v3075 = vld [vmem:[%s3072 + $0x8] sm:$0xf]
      %v3076 = vld [vmem:[%s3072 + $0xc] sm:$0xf]
      %v3081 = vunpack.c.l.b16 %v3073
      %v3082 = vunpack.c.l.b16 %v3074
      %v3083 = vunpack.c.l.b16 %v3075
      %v3084 = vunpack.c.l.b16 %v3076
      %v3085 = vpack.c.b16 %v3082, %v3081
      %v3086 = vpack.c.b16 %v3084, %v3083
      %v3090 = vsel %vm1313, %v3070, 0
      %v3093 = vsel %vm1313, %v3071, 0
      %3095 = vmatprep.subr.bf16.mxu0 0
      %3096 = vmatpush1.bf16.msra.mxu0 0
      %3097 = vmatprep.subr.bf16.mxu0 0
      %3098 = vmatpush1.bf16.msra.mxu0 0
      %3099 = vmatprep.subr.bf16.mxu0 0
      %3100 = vmatpush1.bf16.msra.mxu0 0
      %3101 = vmatprep.subr.bf16.mxu0 0
      %3102 = vmatpush1.bf16.msra.mxu0 0
      %3103 = vmatprep.subr.bf16.mxu0 0
      %3104 = vmatpush1.bf16.msra.mxu0 0
      %3105 = vmatprep.subr.bf16.mxu0 0
      %3106 = vmatpush1.bf16.msra.mxu0 0
      %3107 = vmatprep.subr.bf16.mxu0 0
      %3108 = vmatpush1.bf16.msra.mxu0 %v3086
      %3109 = vmatprep.subr.bf16.mxu0 0
      %3110 = vmatpush1.bf16.msra.mxu0 %v3085
      %3111 = vmatprep.subr.bf16.mxu0 0
      %3112 = vmatpush2.bf16.msra.mxu0 0
      %3113 = vmatprep.subr.bf16.mxu0 0
      %3114 = vmatpush2.bf16.msra.mxu0 0
      %3115 = vmatprep.subr.bf16.mxu0 0
      %3116 = vmatpush2.bf16.msra.mxu0 0
      %3117 = vmatprep.subr.bf16.mxu0 0
      %3118 = vmatpush2.bf16.msra.mxu0 0
      %3119 = vmatprep.subr.bf16.mxu0 0
      %3120 = vmatpush2.bf16.msra.mxu0 0
      %3121 = vmatprep.subr.bf16.mxu0 0
      %3122 = vmatpush2.bf16.msra.mxu0 0
      %3123 = vmatprep.subr.bf16.mxu0 0
      %3124 = vmatpush2.bf16.msra.mxu0 0
      %3125 = vmatprep.subr.bf16.mxu0 0
      %3126 = vmatpush2.bf16.msra.mxu0 0
      %3127 = vmatprep.mubr.bf16.mxu0 0
      %3128 = vmatmul.mubr.bf16.gmra.mxu0 %v3090
      %v3129 = vpop.f32.mrf.mxu0
      %v3130 = vadd.f32 0.0, %v3129
      %v3131 = vpop.f32.mrf.mxu0
      %v3132 = vpop.f32.mrf.mxu0
      %v3133 = vadd.f32 0.0, %v3132
      %v3134 = vpop.f32.mrf.mxu0
      %3135 = vmatprep.mubr.bf16.mxu0 0
      %3136 = vmatmul.mubr.bf16.gmra.mxu0 %v3093
      %v3137 = vpop.f32.mrf.mxu0
      %v3138 = vadd.f32 0.0, %v3137
      %v3139 = vpop.f32.mrf.mxu0
      %v3140 = vpop.f32.mrf.mxu0
      %v3141 = vadd.f32 0.0, %v3140
      %v3142 = vpop.f32.mrf.mxu0
      %3143 = vdwg.mxu0
      %v3144 = vadd.s32 %v433, 4294967280
      %v3145 = vadd.s32 %v434, 4294967280
      %v3146 = vadd.s32 %v435, 4294967280
      %v3147 = vadd.s32 %v436, 4294967280
      %vm3148 = vcmp.ge.s32.totalorder %v3144, 0
      %vm3149 = vcmp.ge.s32.totalorder %v3145, 0
      %vm3150 = vcmp.ge.s32.totalorder %v3146, 0
      %vm3151 = vcmp.ge.s32.totalorder %v3147, 0
      %vm3152 = vcmp.lt.s32.totalorder %v3144, 32
      %vm3153 = vcmp.lt.s32.totalorder %v3145, 32
      %vm3154 = vcmp.lt.s32.totalorder %v3146, 32
      %vm3155 = vcmp.lt.s32.totalorder %v3147, 32
      %vm3156 = vmand %vm3148, %vm3152
      %vm3157 = vmand %vm3149, %vm3153
      %vm3158 = vmand %vm3150, %vm3154
      %vm3159 = vmand %vm3151, %vm3155
      %v3160 = vsel %vm3156, 1, 0
      %v3161 = vsel %vm3157, 1, 0
      %v3162 = vsel %vm3158, 1, 0
      %v3163 = vsel %vm3159, 1, 0
      %vm3164 = vcmp.eq.s32.totalorder %v3160, 1
      %vm3165 = vcmp.eq.s32.totalorder %v3161, 1
      %vm3166 = vcmp.eq.s32.totalorder %v3162, 1
      %vm3167 = vcmp.eq.s32.totalorder %v3163, 1
      %v3168 = vsel %vm3164, %v3138, 0.0
      %v3169 = vsel %vm3165, %v3141, 0.0
      %v3170 = vsel %vm3166, %v3130, 0.0
      %v3171 = vsel %vm3167, %v3133, 0.0
      %s3172 = scalar_lea.vmem %s7, 304
      %v3173 = vld [vmem:[%s3172] sm:$0xf]
      %v3174 = vld [vmem:[%s3172 + $0x4] sm:$0xf]
      %v3175 = vld [vmem:[%s3172 + $0x8] sm:$0xf]
      %v3176 = vld [vmem:[%s3172 + $0xc] sm:$0xf]
      %v3181 = vunpack.c.l.b16 %v3173
      %v3182 = vunpack.c.l.b16 %v3174
      %v3183 = vunpack.c.l.b16 %v3175
      %v3184 = vunpack.c.l.b16 %v3176
      %v3185 = vpack.c.b16 %v3182, %v3181
      %v3186 = vpack.c.b16 %v3184, %v3183
      %3189 = vmatprep.subr.bf16.mxu0 0
      %3190 = vmatpush1.bf16.msra.mxu0 0
      %3191 = vmatprep.subr.bf16.mxu0 0
      %3192 = vmatpush1.bf16.msra.mxu0 0
      %3193 = vmatprep.subr.bf16.mxu0 0
      %3194 = vmatpush1.bf16.msra.mxu0 0
      %3195 = vmatprep.subr.bf16.mxu0 0
      %3196 = vmatpush1.bf16.msra.mxu0 0
      %3197 = vmatprep.subr.bf16.mxu0 0
      %3198 = vmatpush1.bf16.msra.mxu0 0
      %3199 = vmatprep.subr.bf16.mxu0 0
      %3200 = vmatpush1.bf16.msra.mxu0 0
      %3201 = vmatprep.subr.bf16.mxu0 0
      %3202 = vmatpush1.bf16.msra.mxu0 %v3186
      %3203 = vmatprep.subr.bf16.mxu0 0
      %3204 = vmatpush1.bf16.msra.mxu0 %v3185
      %3205 = vmatprep.subr.bf16.mxu0 0
      %3206 = vmatpush2.bf16.msra.mxu0 0
      %3207 = vmatprep.subr.bf16.mxu0 0
      %3208 = vmatpush2.bf16.msra.mxu0 0
      %3209 = vmatprep.subr.bf16.mxu0 0
      %3210 = vmatpush2.bf16.msra.mxu0 0
      %3211 = vmatprep.subr.bf16.mxu0 0
      %3212 = vmatpush2.bf16.msra.mxu0 0
      %3213 = vmatprep.subr.bf16.mxu0 0
      %3214 = vmatpush2.bf16.msra.mxu0 0
      %3215 = vmatprep.subr.bf16.mxu0 0
      %3216 = vmatpush2.bf16.msra.mxu0 0
      %3217 = vmatprep.subr.bf16.mxu0 0
      %3218 = vmatpush2.bf16.msra.mxu0 0
      %3219 = vmatprep.subr.bf16.mxu0 0
      %3220 = vmatpush2.bf16.msra.mxu0 0
      %3221 = vmatprep.mubr.bf16.mxu0 0
      %3222 = vmatmul.mubr.bf16.gmra.mxu0 %v3090
      %v3223 = vpop.f32.mrf.mxu0
      %v3224 = vadd.f32 0.0, %v3223
      %v3225 = vpop.f32.mrf.mxu0
      %v3226 = vpop.f32.mrf.mxu0
      %v3227 = vadd.f32 0.0, %v3226
      %v3228 = vpop.f32.mrf.mxu0
      %3229 = vmatprep.mubr.bf16.mxu0 0
      %3230 = vmatmul.mubr.bf16.gmra.mxu0 %v3093
      %v3231 = vpop.f32.mrf.mxu0
      %v3232 = vadd.f32 0.0, %v3231
      %v3233 = vpop.f32.mrf.mxu0
      %v3234 = vpop.f32.mrf.mxu0
      %v3235 = vadd.f32 0.0, %v3234
      %v3236 = vpop.f32.mrf.mxu0
      %3237 = vdwg.mxu0
      %v3238 = vrot.slane %v3224, 4
      %v3239 = vrot.slane %v3227, 4
      %v3240 = vrot.slane %v3232, 4
      %v3241 = vrot.slane %v3235, 4
      %v3242 = vsel %vm534, %v3240, %v3241
      %v3243 = vsel %vm534, %v3239, %v3240
      %v3244 = vsel %vm534, %v3238, %v3239
      %v3245 = vsel %vm534, %v3241, %v3238
      %v3246 = vadd.s32 %v433, 4294967284
      %v3247 = vadd.s32 %v434, 4294967284
      %v3248 = vadd.s32 %v435, 4294967284
      %v3249 = vadd.s32 %v436, 4294967284
      %vm3250 = vcmp.ge.s32.totalorder %v3246, 0
      %vm3251 = vcmp.ge.s32.totalorder %v3247, 0
      %vm3252 = vcmp.ge.s32.totalorder %v3248, 0
      %vm3253 = vcmp.ge.s32.totalorder %v3249, 0
      %vm3254 = vcmp.lt.s32.totalorder %v3246, 32
      %vm3255 = vcmp.lt.s32.totalorder %v3247, 32
      %vm3256 = vcmp.lt.s32.totalorder %v3248, 32
      %vm3257 = vcmp.lt.s32.totalorder %v3249, 32
      %vm3258 = vmand %vm3250, %vm3254
      %vm3259 = vmand %vm3251, %vm3255
      %vm3260 = vmand %vm3252, %vm3256
      %vm3261 = vmand %vm3253, %vm3257
      %v3262 = vsel %vm3258, 1, 0
      %v3263 = vsel %vm3259, 1, 0
      %v3264 = vsel %vm3260, 1, 0
      %v3265 = vsel %vm3261, 1, 0
      %vm3266 = vcmp.eq.s32.totalorder %v3262, 1
      %vm3267 = vcmp.eq.s32.totalorder %v3263, 1
      %vm3268 = vcmp.eq.s32.totalorder %v3264, 1
      %vm3269 = vcmp.eq.s32.totalorder %v3265, 1
      %v3270 = vsel %vm3266, %v3242, 0.0
      %v3271 = vsel %vm3267, %v3245, 0.0
      %v3272 = vsel %vm3268, %v3244, 0.0
      %v3273 = vsel %vm3269, %v3243, 0.0
      %v3274 = vadd.f32 %v3168, %v3270
      %v3275 = vadd.f32 %v3169, %v3271
      %v3276 = vadd.f32 %v3170, %v3272
      %v3277 = vadd.f32 %v3171, %v3273
      %s3278 = scalar_lea.vmem %s7, 320
      %v3279 = vld [vmem:[%s3278] sm:$0xf]
      %v3280 = vld [vmem:[%s3278 + $0x4] sm:$0xf]
      %v3281 = vld [vmem:[%s3278 + $0x8] sm:$0xf]
      %v3282 = vld [vmem:[%s3278 + $0xc] sm:$0xf]
      %v3287 = vunpack.c.l.b16 %v3279
      %v3288 = vunpack.c.l.b16 %v3280
      %v3289 = vunpack.c.l.b16 %v3281
      %v3290 = vunpack.c.l.b16 %v3282
      %v3291 = vpack.c.b16 %v3288, %v3287
      %v3292 = vpack.c.b16 %v3290, %v3289
      %3295 = vmatprep.subr.bf16.mxu0 0
      %3296 = vmatpush1.bf16.msra.mxu0 0
      %3297 = vmatprep.subr.bf16.mxu0 0
      %3298 = vmatpush1.bf16.msra.mxu0 0
      %3299 = vmatprep.subr.bf16.mxu0 0
      %3300 = vmatpush1.bf16.msra.mxu0 0
      %3301 = vmatprep.subr.bf16.mxu0 0
      %3302 = vmatpush1.bf16.msra.mxu0 0
      %3303 = vmatprep.subr.bf16.mxu0 0
      %3304 = vmatpush1.bf16.msra.mxu0 0
      %3305 = vmatprep.subr.bf16.mxu0 0
      %3306 = vmatpush1.bf16.msra.mxu0 0
      %3307 = vmatprep.subr.bf16.mxu0 0
      %3308 = vmatpush1.bf16.msra.mxu0 %v3292
      %3309 = vmatprep.subr.bf16.mxu0 0
      %3310 = vmatpush1.bf16.msra.mxu0 %v3291
      %3311 = vmatprep.subr.bf16.mxu0 0
      %3312 = vmatpush2.bf16.msra.mxu0 0
      %3313 = vmatprep.subr.bf16.mxu0 0
      %3314 = vmatpush2.bf16.msra.mxu0 0
      %3315 = vmatprep.subr.bf16.mxu0 0
      %3316 = vmatpush2.bf16.msra.mxu0 0
      %3317 = vmatprep.subr.bf16.mxu0 0
      %3318 = vmatpush2.bf16.msra.mxu0 0
      %3319 = vmatprep.subr.bf16.mxu0 0
      %3320 = vmatpush2.bf16.msra.mxu0 0
      %3321 = vmatprep.subr.bf16.mxu0 0
      %3322 = vmatpush2.bf16.msra.mxu0 0
      %3323 = vmatprep.subr.bf16.mxu0 0
      %3324 = vmatpush2.bf16.msra.mxu0 0
      %3325 = vmatprep.subr.bf16.mxu0 0
      %3326 = vmatpush2.bf16.msra.mxu0 0
      %3327 = vmatprep.mubr.bf16.mxu0 0
      %3328 = vmatmul.mubr.bf16.gmra.mxu0 %v3090
      %v3329 = vpop.f32.mrf.mxu0
      %v3330 = vadd.f32 0.0, %v3329
      %v3331 = vpop.f32.mrf.mxu0
      %v3332 = vpop.f32.mrf.mxu0
      %v3333 = vadd.f32 0.0, %v3332
      %v3334 = vpop.f32.mrf.mxu0
      %3335 = vmatprep.mubr.bf16.mxu0 0
      %3336 = vmatmul.mubr.bf16.gmra.mxu0 %v3093
      %v3337 = vpop.f32.mrf.mxu0
      %v3338 = vadd.f32 0.0, %v3337
      %v3339 = vpop.f32.mrf.mxu0
      %v3340 = vpop.f32.mrf.mxu0
      %v3341 = vadd.f32 0.0, %v3340
      %v3342 = vpop.f32.mrf.mxu0
      %3343 = vdwg.mxu0
      %v3344 = vadd.s32 %v433, 4294967288
      %v3345 = vadd.s32 %v434, 4294967288
      %v3346 = vadd.s32 %v435, 4294967288
      %v3347 = vadd.s32 %v436, 4294967288
      %vm3348 = vcmp.ge.s32.totalorder %v3344, 0
      %vm3349 = vcmp.ge.s32.totalorder %v3345, 0
      %vm3350 = vcmp.ge.s32.totalorder %v3346, 0
      %vm3351 = vcmp.ge.s32.totalorder %v3347, 0
      %vm3352 = vcmp.lt.s32.totalorder %v3344, 32
      %vm3353 = vcmp.lt.s32.totalorder %v3345, 32
      %vm3354 = vcmp.lt.s32.totalorder %v3346, 32
      %vm3355 = vcmp.lt.s32.totalorder %v3347, 32
      %vm3356 = vmand %vm3348, %vm3352
      %vm3357 = vmand %vm3349, %vm3353
      %vm3358 = vmand %vm3350, %vm3354
      %vm3359 = vmand %vm3351, %vm3355
      %v3360 = vsel %vm3356, 1, 0
      %v3361 = vsel %vm3357, 1, 0
      %v3362 = vsel %vm3358, 1, 0
      %v3363 = vsel %vm3359, 1, 0
      %vm3364 = vcmp.eq.s32.totalorder %v3360, 1
      %vm3365 = vcmp.eq.s32.totalorder %v3361, 1
      %vm3366 = vcmp.eq.s32.totalorder %v3362, 1
      %vm3367 = vcmp.eq.s32.totalorder %v3363, 1
      %v3368 = vsel %vm3364, %v3341, 0.0
      %v3369 = vsel %vm3365, %v3330, 0.0
      %v3370 = vsel %vm3366, %v3333, 0.0
      %v3371 = vsel %vm3367, %v3338, 0.0
      %v3372 = vadd.f32 %v3274, %v3368
      %v3373 = vadd.f32 %v3275, %v3369
      %v3374 = vadd.f32 %v3276, %v3370
      %v3375 = vadd.f32 %v3277, %v3371
      %s3376 = scalar_lea.vmem %s7, 336
      %v3377 = vld [vmem:[%s3376] sm:$0xf]
      %v3378 = vld [vmem:[%s3376 + $0x4] sm:$0xf]
      %v3379 = vld [vmem:[%s3376 + $0x8] sm:$0xf]
      %v3380 = vld [vmem:[%s3376 + $0xc] sm:$0xf]
      %v3385 = vunpack.c.l.b16 %v3377
      %v3386 = vunpack.c.l.b16 %v3378
      %v3387 = vunpack.c.l.b16 %v3379
      %v3388 = vunpack.c.l.b16 %v3380
      %v3389 = vpack.c.b16 %v3386, %v3385
      %v3390 = vpack.c.b16 %v3388, %v3387
      %3393 = vmatprep.subr.bf16.mxu0 0
      %3394 = vmatpush1.bf16.msra.mxu0 0
      %3395 = vmatprep.subr.bf16.mxu0 0
      %3396 = vmatpush1.bf16.msra.mxu0 0
      %3397 = vmatprep.subr.bf16.mxu0 0
      %3398 = vmatpush1.bf16.msra.mxu0 0
      %3399 = vmatprep.subr.bf16.mxu0 0
      %3400 = vmatpush1.bf16.msra.mxu0 0
      %3401 = vmatprep.subr.bf16.mxu0 0
      %3402 = vmatpush1.bf16.msra.mxu0 0
      %3403 = vmatprep.subr.bf16.mxu0 0
      %3404 = vmatpush1.bf16.msra.mxu0 0
      %3405 = vmatprep.subr.bf16.mxu0 0
      %3406 = vmatpush1.bf16.msra.mxu0 %v3390
      %3407 = vmatprep.subr.bf16.mxu0 0
      %3408 = vmatpush1.bf16.msra.mxu0 %v3389
      %3409 = vmatprep.subr.bf16.mxu0 0
      %3410 = vmatpush2.bf16.msra.mxu0 0
      %3411 = vmatprep.subr.bf16.mxu0 0
      %3412 = vmatpush2.bf16.msra.mxu0 0
      %3413 = vmatprep.subr.bf16.mxu0 0
      %3414 = vmatpush2.bf16.msra.mxu0 0
      %3415 = vmatprep.subr.bf16.mxu0 0
      %3416 = vmatpush2.bf16.msra.mxu0 0
      %3417 = vmatprep.subr.bf16.mxu0 0
      %3418 = vmatpush2.bf16.msra.mxu0 0
      %3419 = vmatprep.subr.bf16.mxu0 0
      %3420 = vmatpush2.bf16.msra.mxu0 0
      %3421 = vmatprep.subr.bf16.mxu0 0
      %3422 = vmatpush2.bf16.msra.mxu0 0
      %3423 = vmatprep.subr.bf16.mxu0 0
      %3424 = vmatpush2.bf16.msra.mxu0 0
      %3425 = vmatprep.mubr.bf16.mxu0 0
      %3426 = vmatmul.mubr.bf16.gmra.mxu0 %v3090
      %v3427 = vpop.f32.mrf.mxu0
      %v3428 = vadd.f32 0.0, %v3427
      %v3429 = vpop.f32.mrf.mxu0
      %v3430 = vpop.f32.mrf.mxu0
      %v3431 = vadd.f32 0.0, %v3430
      %v3432 = vpop.f32.mrf.mxu0
      %3433 = vmatprep.mubr.bf16.mxu0 0
      %3434 = vmatmul.mubr.bf16.gmra.mxu0 %v3093
      %v3435 = vpop.f32.mrf.mxu0
      %v3436 = vadd.f32 0.0, %v3435
      %v3437 = vpop.f32.mrf.mxu0
      %v3438 = vpop.f32.mrf.mxu0
      %v3439 = vadd.f32 0.0, %v3438
      %v3440 = vpop.f32.mrf.mxu0
      %3441 = vdwg.mxu0
      %v3442 = vrot.slane %v3428, 4
      %v3443 = vrot.slane %v3431, 4
      %v3444 = vrot.slane %v3436, 4
      %v3445 = vrot.slane %v3439, 4
      %v3446 = vsel %vm534, %v3444, %v3445
      %v3447 = vsel %vm534, %v3443, %v3444
      %v3448 = vsel %vm534, %v3442, %v3443
      %v3449 = vsel %vm534, %v3445, %v3442
      %v3450 = vsel %vm559, %v3449, 0.0
      %v3451 = vsel %vm560, %v3448, 0.0
      %v3452 = vsel %vm561, %v3447, 0.0
      %v3453 = vsel %vm562, %v3446, 0.0
      %v3454 = vadd.f32 %v3372, %v3450
      %v3455 = vadd.f32 %v3373, %v3451
      %v3456 = vadd.f32 %v3374, %v3452
      %v3457 = vadd.f32 %v3375, %v3453
      %s3458 = scalar_lea.vmem %s7, 352
      %v3459 = vld [vmem:[%s3458] sm:$0xf]
      %v3460 = vld [vmem:[%s3458 + $0x4] sm:$0xf]
      %v3461 = vld [vmem:[%s3458 + $0x8] sm:$0xf]
      %v3462 = vld [vmem:[%s3458 + $0xc] sm:$0xf]
      %v3467 = vunpack.c.l.b16 %v3459
      %v3468 = vunpack.c.l.b16 %v3460
      %v3469 = vunpack.c.l.b16 %v3461
      %v3470 = vunpack.c.l.b16 %v3462
      %v3471 = vpack.c.b16 %v3468, %v3467
      %v3472 = vpack.c.b16 %v3470, %v3469
      %3475 = vmatprep.subr.bf16.mxu0 0
      %3476 = vmatpush1.bf16.msra.mxu0 0
      %3477 = vmatprep.subr.bf16.mxu0 0
      %3478 = vmatpush1.bf16.msra.mxu0 0
      %3479 = vmatprep.subr.bf16.mxu0 0
      %3480 = vmatpush1.bf16.msra.mxu0 0
      %3481 = vmatprep.subr.bf16.mxu0 0
      %3482 = vmatpush1.bf16.msra.mxu0 0
      %3483 = vmatprep.subr.bf16.mxu0 0
      %3484 = vmatpush1.bf16.msra.mxu0 0
      %3485 = vmatprep.subr.bf16.mxu0 0
      %3486 = vmatpush1.bf16.msra.mxu0 0
      %3487 = vmatprep.subr.bf16.mxu0 0
      %3488 = vmatpush1.bf16.msra.mxu0 %v3472
      %3489 = vmatprep.subr.bf16.mxu0 0
      %3490 = vmatpush1.bf16.msra.mxu0 %v3471
      %3491 = vmatprep.subr.bf16.mxu0 0
      %3492 = vmatpush2.bf16.msra.mxu0 0
      %3493 = vmatprep.subr.bf16.mxu0 0
      %3494 = vmatpush2.bf16.msra.mxu0 0
      %3495 = vmatprep.subr.bf16.mxu0 0
      %3496 = vmatpush2.bf16.msra.mxu0 0
      %3497 = vmatprep.subr.bf16.mxu0 0
      %3498 = vmatpush2.bf16.msra.mxu0 0
      %3499 = vmatprep.subr.bf16.mxu0 0
      %3500 = vmatpush2.bf16.msra.mxu0 0
      %3501 = vmatprep.subr.bf16.mxu0 0
      %3502 = vmatpush2.bf16.msra.mxu0 0
      %3503 = vmatprep.subr.bf16.mxu0 0
      %3504 = vmatpush2.bf16.msra.mxu0 0
      %3505 = vmatprep.subr.bf16.mxu0 0
      %3506 = vmatpush2.bf16.msra.mxu0 0
      %3507 = vmatprep.mubr.bf16.mxu0 0
      %3508 = vmatmul.mubr.bf16.gmra.mxu0 %v3090
      %v3509 = vpop.f32.mrf.mxu0
      %v3510 = vadd.f32 0.0, %v3509
      %v3511 = vpop.f32.mrf.mxu0
      %v3512 = vpop.f32.mrf.mxu0
      %v3513 = vadd.f32 0.0, %v3512
      %v3514 = vpop.f32.mrf.mxu0
      %3515 = vmatprep.mubr.bf16.mxu0 0
      %3516 = vmatmul.mubr.bf16.gmra.mxu0 %v3093
      %v3517 = vpop.f32.mrf.mxu0
      %v3518 = vadd.f32 0.0, %v3517
      %v3519 = vpop.f32.mrf.mxu0
      %v3520 = vpop.f32.mrf.mxu0
      %v3521 = vadd.f32 0.0, %v3520
      %v3522 = vpop.f32.mrf.mxu0
      %3523 = vdwg.mxu0
      %v3524 = vadd.f32 %v3454, %v3510
      %v3525 = vadd.f32 %v3455, %v3513
      %v3526 = vadd.f32 %v3456, %v3518
      %v3527 = vadd.f32 %v3457, %v3521
      %s3528 = scalar_lea.vmem %s7, 368
      %v3529 = vld [vmem:[%s3528] sm:$0xf]
      %v3530 = vld [vmem:[%s3528 + $0x4] sm:$0xf]
      %v3531 = vld [vmem:[%s3528 + $0x8] sm:$0xf]
      %v3532 = vld [vmem:[%s3528 + $0xc] sm:$0xf]
      %v3537 = vunpack.c.l.b16 %v3529
      %v3538 = vunpack.c.l.b16 %v3530
      %v3539 = vunpack.c.l.b16 %v3531
      %v3540 = vunpack.c.l.b16 %v3532
      %v3541 = vpack.c.b16 %v3538, %v3537
      %v3542 = vpack.c.b16 %v3540, %v3539
      %3545 = vmatprep.subr.bf16.mxu0 0
      %3546 = vmatpush1.bf16.msra.mxu0 0
      %3547 = vmatprep.subr.bf16.mxu0 0
      %3548 = vmatpush1.bf16.msra.mxu0 0
      %3549 = vmatprep.subr.bf16.mxu0 0
      %3550 = vmatpush1.bf16.msra.mxu0 0
      %3551 = vmatprep.subr.bf16.mxu0 0
      %3552 = vmatpush1.bf16.msra.mxu0 0
      %3553 = vmatprep.subr.bf16.mxu0 0
      %3554 = vmatpush1.bf16.msra.mxu0 0
      %3555 = vmatprep.subr.bf16.mxu0 0
      %3556 = vmatpush1.bf16.msra.mxu0 0
      %3557 = vmatprep.subr.bf16.mxu0 0
      %3558 = vmatpush1.bf16.msra.mxu0 %v3542
      %3559 = vmatprep.subr.bf16.mxu0 0
      %3560 = vmatpush1.bf16.msra.mxu0 %v3541
      %3561 = vmatprep.subr.bf16.mxu0 0
      %3562 = vmatpush2.bf16.msra.mxu0 0
      %3563 = vmatprep.subr.bf16.mxu0 0
      %3564 = vmatpush2.bf16.msra.mxu0 0
      %3565 = vmatprep.subr.bf16.mxu0 0
      %3566 = vmatpush2.bf16.msra.mxu0 0
      %3567 = vmatprep.subr.bf16.mxu0 0
      %3568 = vmatpush2.bf16.msra.mxu0 0
      %3569 = vmatprep.subr.bf16.mxu0 0
      %3570 = vmatpush2.bf16.msra.mxu0 0
      %3571 = vmatprep.subr.bf16.mxu0 0
      %3572 = vmatpush2.bf16.msra.mxu0 0
      %3573 = vmatprep.subr.bf16.mxu0 0
      %3574 = vmatpush2.bf16.msra.mxu0 0
      %3575 = vmatprep.subr.bf16.mxu0 0
      %3576 = vmatpush2.bf16.msra.mxu0 0
      %3577 = vmatprep.mubr.bf16.mxu0 0
      %3578 = vmatmul.mubr.bf16.gmra.mxu0 %v3090
      %v3579 = vpop.f32.mrf.mxu0
      %v3580 = vadd.f32 0.0, %v3579
      %v3581 = vpop.f32.mrf.mxu0
      %v3582 = vpop.f32.mrf.mxu0
      %v3583 = vadd.f32 0.0, %v3582
      %v3584 = vpop.f32.mrf.mxu0
      %3585 = vmatprep.mubr.bf16.mxu0 0
      %3586 = vmatmul.mubr.bf16.gmra.mxu0 %v3093
      %v3587 = vpop.f32.mrf.mxu0
      %v3588 = vadd.f32 0.0, %v3587
      %v3589 = vpop.f32.mrf.mxu0
      %v3590 = vpop.f32.mrf.mxu0
      %v3591 = vadd.f32 0.0, %v3590
      %v3592 = vpop.f32.mrf.mxu0
      %3593 = vdwg.mxu0
      %v3594 = vrot.slane %v3580, 4
      %v3595 = vrot.slane %v3583, 4
      %v3596 = vrot.slane %v3588, 4
      %v3597 = vrot.slane %v3591, 4
      %v3598 = vsel %vm534, %v3596, %v3597
      %v3599 = vsel %vm534, %v3595, %v3596
      %v3600 = vsel %vm534, %v3594, %v3595
      %v3601 = vsel %vm534, %v3597, %v3594
      %v3602 = vsel %vm1277, %v3600, 0.0
      %v3603 = vsel %vm1278, %v3599, 0.0
      %v3604 = vsel %vm1279, %v3598, 0.0
      %v3605 = vsel %vm1280, %v3601, 0.0
      %v3606 = vadd.f32 %v3524, %v3602
      %v3607 = vadd.f32 %v3525, %v3603
      %v3608 = vadd.f32 %v3526, %v3604
      %v3609 = vadd.f32 %v3527, %v3605
      %s3610 = scalar_lea.vmem %s7, 384
      %v3611 = vld [vmem:[%s3610] sm:$0xf]
      %v3612 = vld [vmem:[%s3610 + $0x4] sm:$0xf]
      %v3613 = vld [vmem:[%s3610 + $0x8] sm:$0xf]
      %v3614 = vld [vmem:[%s3610 + $0xc] sm:$0xf]
      %v3619 = vunpack.c.l.b16 %v3611
      %v3620 = vunpack.c.l.b16 %v3612
      %v3621 = vunpack.c.l.b16 %v3613
      %v3622 = vunpack.c.l.b16 %v3614
      %v3623 = vpack.c.b16 %v3620, %v3619
      %v3624 = vpack.c.b16 %v3622, %v3621
      %3627 = vmatprep.subr.bf16.mxu0 0
      %3628 = vmatpush1.bf16.msra.mxu0 0
      %3629 = vmatprep.subr.bf16.mxu0 0
      %3630 = vmatpush1.bf16.msra.mxu0 0
      %3631 = vmatprep.subr.bf16.mxu0 0
      %3632 = vmatpush1.bf16.msra.mxu0 0
      %3633 = vmatprep.subr.bf16.mxu0 0
      %3634 = vmatpush1.bf16.msra.mxu0 0
      %3635 = vmatprep.subr.bf16.mxu0 0
      %3636 = vmatpush1.bf16.msra.mxu0 0
      %3637 = vmatprep.subr.bf16.mxu0 0
      %3638 = vmatpush1.bf16.msra.mxu0 0
      %3639 = vmatprep.subr.bf16.mxu0 0
      %3640 = vmatpush1.bf16.msra.mxu0 %v3624
      %3641 = vmatprep.subr.bf16.mxu0 0
      %3642 = vmatpush1.bf16.msra.mxu0 %v3623
      %3643 = vmatprep.subr.bf16.mxu0 0
      %3644 = vmatpush2.bf16.msra.mxu0 0
      %3645 = vmatprep.subr.bf16.mxu0 0
      %3646 = vmatpush2.bf16.msra.mxu0 0
      %3647 = vmatprep.subr.bf16.mxu0 0
      %3648 = vmatpush2.bf16.msra.mxu0 0
      %3649 = vmatprep.subr.bf16.mxu0 0
      %3650 = vmatpush2.bf16.msra.mxu0 0
      %3651 = vmatprep.subr.bf16.mxu0 0
      %3652 = vmatpush2.bf16.msra.mxu0 0
      %3653 = vmatprep.subr.bf16.mxu0 0
      %3654 = vmatpush2.bf16.msra.mxu0 0
      %3655 = vmatprep.subr.bf16.mxu0 0
      %3656 = vmatpush2.bf16.msra.mxu0 0
      %3657 = vmatprep.subr.bf16.mxu0 0
      %3658 = vmatpush2.bf16.msra.mxu0 0
      %3659 = vmatprep.mubr.bf16.mxu0 0
      %3660 = vmatmul.mubr.bf16.gmra.mxu0 %v3090
      %v3661 = vpop.f32.mrf.mxu0
      %v3662 = vadd.f32 0.0, %v3661
      %v3663 = vpop.f32.mrf.mxu0
      %v3664 = vpop.f32.mrf.mxu0
      %v3665 = vadd.f32 0.0, %v3664
      %v3666 = vpop.f32.mrf.mxu0
      %3667 = vmatprep.mubr.bf16.mxu0 0
      %3668 = vmatmul.mubr.bf16.gmra.mxu0 %v3093
      %v3669 = vpop.f32.mrf.mxu0
      %v3670 = vadd.f32 0.0, %v3669
      %v3671 = vpop.f32.mrf.mxu0
      %v3672 = vpop.f32.mrf.mxu0
      %v3673 = vadd.f32 0.0, %v3672
      %v3674 = vpop.f32.mrf.mxu0
      %3675 = vdwg.mxu0
      %v3676 = vadd.s32 %v434, 8
      %v3677 = vadd.s32 %v435, 8
      %v3678 = vadd.s32 %v436, 8
      %vm3679 = vcmp.ge.s32.totalorder %v434, 0
      %vm3680 = vcmp.ge.s32.totalorder %v3676, 0
      %vm3681 = vcmp.ge.s32.totalorder %v3677, 0
      %vm3682 = vcmp.ge.s32.totalorder %v3678, 0
      %vm3683 = vcmp.lt.s32.totalorder %v434, 32
      %vm3684 = vcmp.lt.s32.totalorder %v3676, 32
      %vm3685 = vcmp.lt.s32.totalorder %v3677, 32
      %vm3686 = vcmp.lt.s32.totalorder %v3678, 32
      %vm3687 = vmand %vm3679, %vm3683
      %vm3688 = vmand %vm3680, %vm3684
      %vm3689 = vmand %vm3681, %vm3685
      %vm3690 = vmand %vm3682, %vm3686
      %v3691 = vsel %vm3687, 1, 0
      %v3692 = vsel %vm3688, 1, 0
      %v3693 = vsel %vm3689, 1, 0
      %v3694 = vsel %vm3690, 1, 0
      %vm3695 = vcmp.eq.s32.totalorder %v3691, 1
      %vm3696 = vcmp.eq.s32.totalorder %v3692, 1
      %vm3697 = vcmp.eq.s32.totalorder %v3693, 1
      %vm3698 = vcmp.eq.s32.totalorder %v3694, 1
      %v3699 = vsel %vm3695, %v3665, 0.0
      %v3700 = vsel %vm3696, %v3670, 0.0
      %v3701 = vsel %vm3697, %v3673, 0.0
      %v3702 = vsel %vm3698, %v3662, 0.0
      %v3703 = vadd.f32 %v3606, %v3699
      %v3704 = vadd.f32 %v3607, %v3700
      %v3705 = vadd.f32 %v3608, %v3701
      %v3706 = vadd.f32 %v3609, %v3702
      %s3707 = scalar_lea.vmem %s7, 400
      %v3708 = vld [vmem:[%s3707] sm:$0xf]
      %v3709 = vld [vmem:[%s3707 + $0x4] sm:$0xf]
      %v3710 = vld [vmem:[%s3707 + $0x8] sm:$0xf]
      %v3711 = vld [vmem:[%s3707 + $0xc] sm:$0xf]
      %v3716 = vunpack.c.l.b16 %v3708
      %v3717 = vunpack.c.l.b16 %v3709
      %v3718 = vunpack.c.l.b16 %v3710
      %v3719 = vunpack.c.l.b16 %v3711
      %v3720 = vpack.c.b16 %v3717, %v3716
      %v3721 = vpack.c.b16 %v3719, %v3718
      %3724 = vmatprep.subr.bf16.mxu0 0
      %3725 = vmatpush1.bf16.msra.mxu0 0
      %3726 = vmatprep.subr.bf16.mxu0 0
      %3727 = vmatpush1.bf16.msra.mxu0 0
      %3728 = vmatprep.subr.bf16.mxu0 0
      %3729 = vmatpush1.bf16.msra.mxu0 0
      %3730 = vmatprep.subr.bf16.mxu0 0
      %3731 = vmatpush1.bf16.msra.mxu0 0
      %3732 = vmatprep.subr.bf16.mxu0 0
      %3733 = vmatpush1.bf16.msra.mxu0 0
      %3734 = vmatprep.subr.bf16.mxu0 0
      %3735 = vmatpush1.bf16.msra.mxu0 0
      %3736 = vmatprep.subr.bf16.mxu0 0
      %3737 = vmatpush1.bf16.msra.mxu0 %v3721
      %3738 = vmatprep.subr.bf16.mxu0 0
      %3739 = vmatpush1.bf16.msra.mxu0 %v3720
      %3740 = vmatprep.subr.bf16.mxu0 0
      %3741 = vmatpush2.bf16.msra.mxu0 0
      %3742 = vmatprep.subr.bf16.mxu0 0
      %3743 = vmatpush2.bf16.msra.mxu0 0
      %3744 = vmatprep.subr.bf16.mxu0 0
      %3745 = vmatpush2.bf16.msra.mxu0 0
      %3746 = vmatprep.subr.bf16.mxu0 0
      %3747 = vmatpush2.bf16.msra.mxu0 0
      %3748 = vmatprep.subr.bf16.mxu0 0
      %3749 = vmatpush2.bf16.msra.mxu0 0
      %3750 = vmatprep.subr.bf16.mxu0 0
      %3751 = vmatpush2.bf16.msra.mxu0 0
      %3752 = vmatprep.subr.bf16.mxu0 0
      %3753 = vmatpush2.bf16.msra.mxu0 0
      %3754 = vmatprep.subr.bf16.mxu0 0
      %3755 = vmatpush2.bf16.msra.mxu0 0
      %3756 = vmatprep.mubr.bf16.mxu0 0
      %3757 = vmatmul.mubr.bf16.gmra.mxu0 %v3090
      %v3758 = vpop.f32.mrf.mxu0
      %v3759 = vadd.f32 0.0, %v3758
      %v3760 = vpop.f32.mrf.mxu0
      %v3761 = vpop.f32.mrf.mxu0
      %v3762 = vadd.f32 0.0, %v3761
      %v3763 = vpop.f32.mrf.mxu0
      %3764 = vmatprep.mubr.bf16.mxu0 0
      %3765 = vmatmul.mubr.bf16.gmra.mxu0 %v3093
      %v3766 = vpop.f32.mrf.mxu0
      %v3767 = vadd.f32 0.0, %v3766
      %v3768 = vpop.f32.mrf.mxu0
      %v3769 = vpop.f32.mrf.mxu0
      %v3770 = vadd.f32 0.0, %v3769
      %v3771 = vpop.f32.mrf.mxu0
      %3772 = vdwg.mxu0
      %v3773 = vrot.slane %v3759, 4
      %v3774 = vrot.slane %v3762, 4
      %v3775 = vrot.slane %v3767, 4
      %v3776 = vrot.slane %v3770, 4
      %v3777 = vsel %vm534, %v3775, %v3776
      %v3778 = vsel %vm534, %v3774, %v3775
      %v3779 = vsel %vm534, %v3773, %v3774
      %v3780 = vsel %vm534, %v3776, %v3773
      %v3781 = vadd.s32 %v433, 12
      %v3782 = vadd.s32 %v434, 12
      %v3783 = vadd.s32 %v435, 12
      %v3784 = vadd.s32 %v436, 12
      %vm3785 = vcmp.ge.s32.totalorder %v3781, 0
      %vm3786 = vcmp.ge.s32.totalorder %v3782, 0
      %vm3787 = vcmp.ge.s32.totalorder %v3783, 0
      %vm3788 = vcmp.ge.s32.totalorder %v3784, 0
      %vm3789 = vcmp.lt.s32.totalorder %v3781, 32
      %vm3790 = vcmp.lt.s32.totalorder %v3782, 32
      %vm3791 = vcmp.lt.s32.totalorder %v3783, 32
      %vm3792 = vcmp.lt.s32.totalorder %v3784, 32
      %vm3793 = vmand %vm3785, %vm3789
      %vm3794 = vmand %vm3786, %vm3790
      %vm3795 = vmand %vm3787, %vm3791
      %vm3796 = vmand %vm3788, %vm3792
      %v3797 = vsel %vm3793, 1, 0
      %v3798 = vsel %vm3794, 1, 0
      %v3799 = vsel %vm3795, 1, 0
      %v3800 = vsel %vm3796, 1, 0
      %vm3801 = vcmp.eq.s32.totalorder %v3797, 1
      %vm3802 = vcmp.eq.s32.totalorder %v3798, 1
      %vm3803 = vcmp.eq.s32.totalorder %v3799, 1
      %vm3804 = vcmp.eq.s32.totalorder %v3800, 1
      %v3805 = vsel %vm3801, %v3778, 0.0
      %v3806 = vsel %vm3802, %v3777, 0.0
      %v3807 = vsel %vm3803, %v3780, 0.0
      %v3808 = vsel %vm3804, %v3779, 0.0
      %v3809 = vadd.f32 %v3703, %v3805
      %v3810 = vadd.f32 %v3704, %v3806
      %v3811 = vadd.f32 %v3705, %v3807
      %v3812 = vadd.f32 %v3706, %v3808
      %s3813 = scalar_lea.vmem %s7, 416
      %v3814 = vld [vmem:[%s3813] sm:$0xf]
      %v3815 = vld [vmem:[%s3813 + $0x4] sm:$0xf]
      %v3816 = vld [vmem:[%s3813 + $0x8] sm:$0xf]
      %v3817 = vld [vmem:[%s3813 + $0xc] sm:$0xf]
      %v3822 = vunpack.c.l.b16 %v3814
      %v3823 = vunpack.c.l.b16 %v3815
      %v3824 = vunpack.c.l.b16 %v3816
      %v3825 = vunpack.c.l.b16 %v3817
      %v3826 = vpack.c.b16 %v3823, %v3822
      %v3827 = vpack.c.b16 %v3825, %v3824
      %3830 = vmatprep.subr.bf16.mxu0 0
      %3831 = vmatpush1.bf16.msra.mxu0 0
      %3832 = vmatprep.subr.bf16.mxu0 0
      %3833 = vmatpush1.bf16.msra.mxu0 0
      %3834 = vmatprep.subr.bf16.mxu0 0
      %3835 = vmatpush1.bf16.msra.mxu0 0
      %3836 = vmatprep.subr.bf16.mxu0 0
      %3837 = vmatpush1.bf16.msra.mxu0 0
      %3838 = vmatprep.subr.bf16.mxu0 0
      %3839 = vmatpush1.bf16.msra.mxu0 0
      %3840 = vmatprep.subr.bf16.mxu0 0
      %3841 = vmatpush1.bf16.msra.mxu0 0
      %3842 = vmatprep.subr.bf16.mxu0 0
      %3843 = vmatpush1.bf16.msra.mxu0 %v3827
      %3844 = vmatprep.subr.bf16.mxu0 0
      %3845 = vmatpush1.bf16.msra.mxu0 %v3826
      %3846 = vmatprep.subr.bf16.mxu0 0
      %3847 = vmatpush2.bf16.msra.mxu0 0
      %3848 = vmatprep.subr.bf16.mxu0 0
      %3849 = vmatpush2.bf16.msra.mxu0 0
      %3850 = vmatprep.subr.bf16.mxu0 0
      %3851 = vmatpush2.bf16.msra.mxu0 0
      %3852 = vmatprep.subr.bf16.mxu0 0
      %3853 = vmatpush2.bf16.msra.mxu0 0
      %3854 = vmatprep.subr.bf16.mxu0 0
      %3855 = vmatpush2.bf16.msra.mxu0 0
      %3856 = vmatprep.subr.bf16.mxu0 0
      %3857 = vmatpush2.bf16.msra.mxu0 0
      %3858 = vmatprep.subr.bf16.mxu0 0
      %3859 = vmatpush2.bf16.msra.mxu0 0
      %3860 = vmatprep.subr.bf16.mxu0 0
      %3861 = vmatpush2.bf16.msra.mxu0 0
      %3862 = vmatprep.mubr.bf16.mxu0 0
      %3863 = vmatmul.mubr.bf16.gmra.mxu0 %v3090
      %v3864 = vpop.f32.mrf.mxu0
      %v3865 = vadd.f32 0.0, %v3864
      %v3866 = vpop.f32.mrf.mxu0
      %v3867 = vpop.f32.mrf.mxu0
      %v3868 = vadd.f32 0.0, %v3867
      %v3869 = vpop.f32.mrf.mxu0
      %3870 = vmatprep.mubr.bf16.mxu0 0
      %3871 = vmatmul.mubr.bf16.gmra.mxu0 %v3093
      %v3872 = vpop.f32.mrf.mxu0
      %v3873 = vadd.f32 0.0, %v3872
      %v3874 = vpop.f32.mrf.mxu0
      %v3875 = vpop.f32.mrf.mxu0
      %v3876 = vadd.f32 0.0, %v3875
      %v3877 = vpop.f32.mrf.mxu0
      %3878 = vdwg.mxu0
      %v3879 = vadd.s32 %v434, 16
      %v3880 = vadd.s32 %v435, 16
      %v3881 = vadd.s32 %v436, 16
      %vm3882 = vcmp.ge.s32.totalorder %v435, 0
      %vm3883 = vcmp.ge.s32.totalorder %v3879, 0
      %vm3884 = vcmp.ge.s32.totalorder %v3880, 0
      %vm3885 = vcmp.ge.s32.totalorder %v3881, 0
      %vm3886 = vcmp.lt.s32.totalorder %v435, 32
      %vm3887 = vcmp.lt.s32.totalorder %v3879, 32
      %vm3888 = vcmp.lt.s32.totalorder %v3880, 32
      %vm3889 = vcmp.lt.s32.totalorder %v3881, 32
      %vm3890 = vmand %vm3882, %vm3886
      %vm3891 = vmand %vm3883, %vm3887
      %vm3892 = vmand %vm3884, %vm3888
      %vm3893 = vmand %vm3885, %vm3889
      %v3894 = vsel %vm3890, 1, 0
      %v3895 = vsel %vm3891, 1, 0
      %v3896 = vsel %vm3892, 1, 0
      %v3897 = vsel %vm3893, 1, 0
      %vm3898 = vcmp.eq.s32.totalorder %v3894, 1
      %vm3899 = vcmp.eq.s32.totalorder %v3895, 1
      %vm3900 = vcmp.eq.s32.totalorder %v3896, 1
      %vm3901 = vcmp.eq.s32.totalorder %v3897, 1
      %v3902 = vsel %vm3898, %v3873, 0.0
      %v3903 = vsel %vm3899, %v3876, 0.0
      %v3904 = vsel %vm3900, %v3865, 0.0
      %v3905 = vsel %vm3901, %v3868, 0.0
      %v3906 = vadd.f32 %v3809, %v3902
      %v3907 = vadd.f32 %v3810, %v3903
      %v3908 = vadd.f32 %v3811, %v3904
      %v3909 = vadd.f32 %v3812, %v3905
      %v3910 = vld [vmem:[%s6 + $0x2] sm:$0x1]
      %v3911 = vlaneseq
      %v3912 = vshrl.u32 %v3911, 7
      %v3913 = vsub.s32 0, %v3912
      %v3914 = vrot.slane %v3910, %v3913
      %v3915 = vadd.f32 %v3906, %v3914
      %v3916 = vadd.f32 %v3907, %v3914
      %v3917 = vadd.f32 %v3908, %v3914
      %v3918 = vadd.f32 %v3909, %v3914
      %v3919 = vmax.f32 %v3915, 0.0
      %v3920 = vmax.f32 %v3916, 0.0
      %v3921 = vmax.f32 %v3917, 0.0
      %v3922 = vmax.f32 %v3918, 0.0
      %v3923 = vadd.f32 %v3919, %v2976
      %v3924 = vadd.f32 %v3920, %v2977
      %v3925 = vadd.f32 %v3921, %v2978
      %v3926 = vadd.f32 %v3922, %v2979
      %v3927 = vlaneseq
      %v3928 = vshrl.u32 %v3927, 7
      %v3929 = vsub.s32 3, %v3928
      %v3930 = vrot.slane %v1304, %v3929
      %v3931 = vadd.f32 %v3923, %v3930
      %v3932 = vadd.f32 %v3924, %v3930
      %v3933 = vadd.f32 %v3925, %v3930
      %v3934 = vadd.f32 %v3926, %v3930
      %v3935 = vsel %vm1313, %v3931, 0.0
      %3936 = vadd.xlane.f32.xlu0 %v3935
      %v3937 = vpop.xlane.xlu0 %3936
      %v3938 = vsel %vm1313, %v3932, 0.0
      %3939 = vadd.xlane.f32.xlu0 %v3938
      %v3940 = vpop.xlane.xlu0 %3939
      %v3941 = vsel %vm1313, %v3933, 0.0
      %3942 = vadd.xlane.f32.xlu0 %v3941
      %v3943 = vpop.xlane.xlu0 %3942
      %v3944 = vsel %vm1313, %v3934, 0.0
      %3945 = vadd.xlane.f32.xlu0 %v3944
      %v3946 = vpop.xlane.xlu0 %3945
      %v3947 = vmul.f32 %v3937, %v1326
      %v3948 = vmul.f32 %v3940, %v1326
      %v3949 = vmul.f32 %v3943, %v1326
      %v3950 = vmul.f32 %v3946, %v1326
      %v3951 = vmul.f32 %v3931, %v3931
      %v3952 = vmul.f32 %v3932, %v3932
      %v3953 = vmul.f32 %v3933, %v3933
      %v3954 = vmul.f32 %v3934, %v3934
      %v3955 = vsel %vm1313, %v3951, 0.0
      %3956 = vadd.xlane.f32.xlu0 %v3955
      %v3957 = vpop.xlane.xlu0 %3956
      %v3958 = vsel %vm1313, %v3952, 0.0
      %3959 = vadd.xlane.f32.xlu0 %v3958
      %v3960 = vpop.xlane.xlu0 %3959
      %v3961 = vsel %vm1313, %v3953, 0.0
      %3962 = vadd.xlane.f32.xlu0 %v3961
      %v3963 = vpop.xlane.xlu0 %3962
      %v3964 = vsel %vm1313, %v3954, 0.0
      %3965 = vadd.xlane.f32.xlu0 %v3964
      %v3966 = vpop.xlane.xlu0 %3965
      %v3967 = vmul.f32 %v3957, %v1326
      %v3968 = vmul.f32 %v3960, %v1326
      %v3969 = vmul.f32 %v3963, %v1326
      %v3970 = vmul.f32 %v3966, %v1326
      %v3971 = vmul.f32 %v3947, %v3947
      %v3972 = vmul.f32 %v3948, %v3948
      %v3973 = vmul.f32 %v3949, %v3949
      %v3974 = vmul.f32 %v3950, %v3950
      %v3975 = vsub.f32 %v3967, %v3971
      %v3976 = vsub.f32 %v3968, %v3972
      %v3977 = vsub.f32 %v3969, %v3973
      %v3978 = vsub.f32 %v3970, %v3974
      %v3979 = vmax.f32 %v3975, 0.0
      %v3980 = vmax.f32 %v3976, 0.0
      %v3981 = vmax.f32 %v3977, 0.0
      %v3982 = vmax.f32 %v3978, 0.0
      %v3983 = vadd.f32 %v3979, 1e-05
      %v3984 = vadd.f32 %v3980, 1e-05
      %v3985 = vadd.f32 %v3981, 1e-05
      %v3986 = vadd.f32 %v3982, 1e-05
      %v3987 = vrsqrt.pop %v3983
      %v3988 = vrsqrt.pop %v3984
      %v3989 = vrsqrt.pop %v3985
      %v3990 = vrsqrt.pop %v3986
      %v3991 = vld [vmem:[%s4 + $0x3] sm:$0x1]
      %v3992 = vlaneseq
      %v3993 = vshrl.u32 %v3992, 7
      %v3994 = vsub.s32 0, %v3993
      %v3995 = vrot.slane %v3991, %v3994
      %v3996 = vmul.f32 %v3987, %v3995
      %v3997 = vmul.f32 %v3988, %v3995
      %v3998 = vmul.f32 %v3989, %v3995
      %v3999 = vmul.f32 %v3990, %v3995
      %v4000 = vsub.f32 %v3931, %v3947
      %v4001 = vsub.f32 %v3932, %v3948
      %v4002 = vsub.f32 %v3933, %v3949
      %v4003 = vsub.f32 %v3934, %v3950
      %v4004 = vmul.f32 %v4000, %v3996
      %v4005 = vmul.f32 %v4001, %v3997
      %v4006 = vmul.f32 %v4002, %v3998
      %v4007 = vmul.f32 %v4003, %v3999
      %v4008 = vld [vmem:[%s5 + $0x3] sm:$0x1]
      %v4009 = vlaneseq
      %v4010 = vshrl.u32 %v4009, 7
      %v4011 = vsub.s32 0, %v4010
      %v4012 = vrot.slane %v4008, %v4011
      %v4013 = vadd.f32 %v4004, %v4012
      %v4014 = vadd.f32 %v4005, %v4012
      %v4015 = vadd.f32 %v4006, %v4012
      %v4016 = vadd.f32 %v4007, %v4012
      %v4017 = vpack.c.bf16 %v4014, %v4013
      %v4018 = vpack.c.bf16 %v4016, %v4015
      %s4019 = scalar_lea.vmem %s7, 480
      %v4020 = vld [vmem:[%s4019] sm:$0xf]
      %v4021 = vld [vmem:[%s4019 + $0x4] sm:$0xf]
      %v4022 = vld [vmem:[%s4019 + $0x8] sm:$0xf]
      %v4023 = vld [vmem:[%s4019 + $0xc] sm:$0xf]
      %v4028 = vunpack.c.l.b16 %v4020
      %v4029 = vunpack.c.l.b16 %v4021
      %v4030 = vunpack.c.l.b16 %v4022
      %v4031 = vunpack.c.l.b16 %v4023
      %v4032 = vpack.c.b16 %v4029, %v4028
      %v4033 = vpack.c.b16 %v4031, %v4030
      %v4037 = vsel %vm1313, %v4017, 0
      %v4040 = vsel %vm1313, %v4018, 0
      %4042 = vmatprep.subr.bf16.mxu0 0
      %4043 = vmatpush1.bf16.msra.mxu0 0
      %4044 = vmatprep.subr.bf16.mxu0 0
      %4045 = vmatpush1.bf16.msra.mxu0 0
      %4046 = vmatprep.subr.bf16.mxu0 0
      %4047 = vmatpush1.bf16.msra.mxu0 0
      %4048 = vmatprep.subr.bf16.mxu0 0
      %4049 = vmatpush1.bf16.msra.mxu0 0
      %4050 = vmatprep.subr.bf16.mxu0 0
      %4051 = vmatpush1.bf16.msra.mxu0 0
      %4052 = vmatprep.subr.bf16.mxu0 0
      %4053 = vmatpush1.bf16.msra.mxu0 0
      %4054 = vmatprep.subr.bf16.mxu0 0
      %4055 = vmatpush1.bf16.msra.mxu0 %v4033
      %4056 = vmatprep.subr.bf16.mxu0 0
      %4057 = vmatpush1.bf16.msra.mxu0 %v4032
      %4058 = vmatprep.subr.bf16.mxu0 0
      %4059 = vmatpush2.bf16.msra.mxu0 0
      %4060 = vmatprep.subr.bf16.mxu0 0
      %4061 = vmatpush2.bf16.msra.mxu0 0
      %4062 = vmatprep.subr.bf16.mxu0 0
      %4063 = vmatpush2.bf16.msra.mxu0 0
      %4064 = vmatprep.subr.bf16.mxu0 0
      %4065 = vmatpush2.bf16.msra.mxu0 0
      %4066 = vmatprep.subr.bf16.mxu0 0
      %4067 = vmatpush2.bf16.msra.mxu0 0
      %4068 = vmatprep.subr.bf16.mxu0 0
      %4069 = vmatpush2.bf16.msra.mxu0 0
      %4070 = vmatprep.subr.bf16.mxu0 0
      %4071 = vmatpush2.bf16.msra.mxu0 0
      %4072 = vmatprep.subr.bf16.mxu0 0
      %4073 = vmatpush2.bf16.msra.mxu0 0
      %4074 = vmatprep.mubr.bf16.mxu0 0
      %4075 = vmatmul.mubr.bf16.gmra.mxu0 %v4037
      %v4076 = vpop.f32.mrf.mxu0
      %v4077 = vadd.f32 0.0, %v4076
      %v4078 = vpop.f32.mrf.mxu0
      %v4079 = vpop.f32.mrf.mxu0
      %v4080 = vadd.f32 0.0, %v4079
      %v4081 = vpop.f32.mrf.mxu0
      %4082 = vmatprep.mubr.bf16.mxu0 0
      %4083 = vmatmul.mubr.bf16.gmra.mxu0 %v4040
      %v4084 = vpop.f32.mrf.mxu0
      %v4085 = vadd.f32 0.0, %v4084
      %v4086 = vpop.f32.mrf.mxu0
      %v4087 = vpop.f32.mrf.mxu0
      %v4088 = vadd.f32 0.0, %v4087
      %v4089 = vpop.f32.mrf.mxu0
      %4090 = vdwg.mxu0
      %v4091 = vsel %vm3164, %v4085, 0.0
      %v4092 = vsel %vm3165, %v4088, 0.0
      %v4093 = vsel %vm3166, %v4077, 0.0
      %v4094 = vsel %vm3167, %v4080, 0.0
      %s4095 = scalar_lea.vmem %s7, 496
      %v4096 = vld [vmem:[%s4095] sm:$0xf]
      %v4097 = vld [vmem:[%s4095 + $0x4] sm:$0xf]
      %v4098 = vld [vmem:[%s4095 + $0x8] sm:$0xf]
      %v4099 = vld [vmem:[%s4095 + $0xc] sm:$0xf]
      %v4104 = vunpack.c.l.b16 %v4096
      %v4105 = vunpack.c.l.b16 %v4097
      %v4106 = vunpack.c.l.b16 %v4098
      %v4107 = vunpack.c.l.b16 %v4099
      %v4108 = vpack.c.b16 %v4105, %v4104
      %v4109 = vpack.c.b16 %v4107, %v4106
      %4112 = vmatprep.subr.bf16.mxu0 0
      %4113 = vmatpush1.bf16.msra.mxu0 0
      %4114 = vmatprep.subr.bf16.mxu0 0
      %4115 = vmatpush1.bf16.msra.mxu0 0
      %4116 = vmatprep.subr.bf16.mxu0 0
      %4117 = vmatpush1.bf16.msra.mxu0 0
      %4118 = vmatprep.subr.bf16.mxu0 0
      %4119 = vmatpush1.bf16.msra.mxu0 0
      %4120 = vmatprep.subr.bf16.mxu0 0
      %4121 = vmatpush1.bf16.msra.mxu0 0
      %4122 = vmatprep.subr.bf16.mxu0 0
      %4123 = vmatpush1.bf16.msra.mxu0 0
      %4124 = vmatprep.subr.bf16.mxu0 0
      %4125 = vmatpush1.bf16.msra.mxu0 %v4109
      %4126 = vmatprep.subr.bf16.mxu0 0
      %4127 = vmatpush1.bf16.msra.mxu0 %v4108
      %4128 = vmatprep.subr.bf16.mxu0 0
      %4129 = vmatpush2.bf16.msra.mxu0 0
      %4130 = vmatprep.subr.bf16.mxu0 0
      %4131 = vmatpush2.bf16.msra.mxu0 0
      %4132 = vmatprep.subr.bf16.mxu0 0
      %4133 = vmatpush2.bf16.msra.mxu0 0
      %4134 = vmatprep.subr.bf16.mxu0 0
      %4135 = vmatpush2.bf16.msra.mxu0 0
      %4136 = vmatprep.subr.bf16.mxu0 0
      %4137 = vmatpush2.bf16.msra.mxu0 0
      %4138 = vmatprep.subr.bf16.mxu0 0
      %4139 = vmatpush2.bf16.msra.mxu0 0
      %4140 = vmatprep.subr.bf16.mxu0 0
      %4141 = vmatpush2.bf16.msra.mxu0 0
      %4142 = vmatprep.subr.bf16.mxu0 0
      %4143 = vmatpush2.bf16.msra.mxu0 0
      %4144 = vmatprep.mubr.bf16.mxu0 0
      %4145 = vmatmul.mubr.bf16.gmra.mxu0 %v4037
      %v4146 = vpop.f32.mrf.mxu0
      %v4147 = vadd.f32 0.0, %v4146
      %v4148 = vpop.f32.mrf.mxu0
      %v4149 = vpop.f32.mrf.mxu0
      %v4150 = vadd.f32 0.0, %v4149
      %v4151 = vpop.f32.mrf.mxu0
      %4152 = vmatprep.mubr.bf16.mxu0 0
      %4153 = vmatmul.mubr.bf16.gmra.mxu0 %v4040
      %v4154 = vpop.f32.mrf.mxu0
      %v4155 = vadd.f32 0.0, %v4154
      %v4156 = vpop.f32.mrf.mxu0
      %v4157 = vpop.f32.mrf.mxu0
      %v4158 = vadd.f32 0.0, %v4157
      %v4159 = vpop.f32.mrf.mxu0
      %4160 = vdwg.mxu0
      %v4161 = vadd.f32 %v4091, %v4147
      %v4162 = vadd.f32 %v4092, %v4150
      %v4163 = vadd.f32 %v4093, %v4155
      %v4164 = vadd.f32 %v4094, %v4158
      %s4165 = scalar_lea.vmem %s7, 512
      %v4166 = vld [vmem:[%s4165] sm:$0xf]
      %v4167 = vld [vmem:[%s4165 + $0x4] sm:$0xf]
      %v4168 = vld [vmem:[%s4165 + $0x8] sm:$0xf]
      %v4169 = vld [vmem:[%s4165 + $0xc] sm:$0xf]
      %v4174 = vunpack.c.l.b16 %v4166
      %v4175 = vunpack.c.l.b16 %v4167
      %v4176 = vunpack.c.l.b16 %v4168
      %v4177 = vunpack.c.l.b16 %v4169
      %v4178 = vpack.c.b16 %v4175, %v4174
      %v4179 = vpack.c.b16 %v4177, %v4176
      %4182 = vmatprep.subr.bf16.mxu0 0
      %4183 = vmatpush1.bf16.msra.mxu0 0
      %4184 = vmatprep.subr.bf16.mxu0 0
      %4185 = vmatpush1.bf16.msra.mxu0 0
      %4186 = vmatprep.subr.bf16.mxu0 0
      %4187 = vmatpush1.bf16.msra.mxu0 0
      %4188 = vmatprep.subr.bf16.mxu0 0
      %4189 = vmatpush1.bf16.msra.mxu0 0
      %4190 = vmatprep.subr.bf16.mxu0 0
      %4191 = vmatpush1.bf16.msra.mxu0 0
      %4192 = vmatprep.subr.bf16.mxu0 0
      %4193 = vmatpush1.bf16.msra.mxu0 0
      %4194 = vmatprep.subr.bf16.mxu0 0
      %4195 = vmatpush1.bf16.msra.mxu0 %v4179
      %4196 = vmatprep.subr.bf16.mxu0 0
      %4197 = vmatpush1.bf16.msra.mxu0 %v4178
      %4198 = vmatprep.subr.bf16.mxu0 0
      %4199 = vmatpush2.bf16.msra.mxu0 0
      %4200 = vmatprep.subr.bf16.mxu0 0
      %4201 = vmatpush2.bf16.msra.mxu0 0
      %4202 = vmatprep.subr.bf16.mxu0 0
      %4203 = vmatpush2.bf16.msra.mxu0 0
      %4204 = vmatprep.subr.bf16.mxu0 0
      %4205 = vmatpush2.bf16.msra.mxu0 0
      %4206 = vmatprep.subr.bf16.mxu0 0
      %4207 = vmatpush2.bf16.msra.mxu0 0
      %4208 = vmatprep.subr.bf16.mxu0 0
      %4209 = vmatpush2.bf16.msra.mxu0 0
      %4210 = vmatprep.subr.bf16.mxu0 0
      %4211 = vmatpush2.bf16.msra.mxu0 0
      %4212 = vmatprep.subr.bf16.mxu0 0
      %4213 = vmatpush2.bf16.msra.mxu0 0
      %4214 = vmatprep.mubr.bf16.mxu0 0
      %4215 = vmatmul.mubr.bf16.gmra.mxu0 %v4037
      %v4216 = vpop.f32.mrf.mxu0
      %v4217 = vadd.f32 0.0, %v4216
      %v4218 = vpop.f32.mrf.mxu0
      %v4219 = vpop.f32.mrf.mxu0
      %v4220 = vadd.f32 0.0, %v4219
      %v4221 = vpop.f32.mrf.mxu0
      %4222 = vmatprep.mubr.bf16.mxu0 0
      %4223 = vmatmul.mubr.bf16.gmra.mxu0 %v4040
      %v4224 = vpop.f32.mrf.mxu0
      %v4225 = vadd.f32 0.0, %v4224
      %v4226 = vpop.f32.mrf.mxu0
      %v4227 = vpop.f32.mrf.mxu0
      %v4228 = vadd.f32 0.0, %v4227
      %v4229 = vpop.f32.mrf.mxu0
      %4230 = vdwg.mxu0
      %v4231 = vsel %vm3898, %v4225, 0.0
      %v4232 = vsel %vm3899, %v4228, 0.0
      %v4233 = vsel %vm3900, %v4217, 0.0
      %v4234 = vsel %vm3901, %v4220, 0.0
      %v4235 = vadd.f32 %v4161, %v4231
      %v4236 = vadd.f32 %v4162, %v4232
      %v4237 = vadd.f32 %v4163, %v4233
      %v4238 = vadd.f32 %v4164, %v4234
      %v4239 = vld [vmem:[%s6 + $0x3] sm:$0x1]
      %v4240 = vlaneseq
      %v4241 = vshrl.u32 %v4240, 7
      %v4242 = vsub.s32 0, %v4241
      %v4243 = vrot.slane %v4239, %v4242
      %v4244 = vadd.f32 %v4235, %v4243
      %v4245 = vadd.f32 %v4236, %v4243
      %v4246 = vadd.f32 %v4237, %v4243
      %v4247 = vadd.f32 %v4238, %v4243
      %v4248 = vmax.f32 %v4244, 0.0
      %v4249 = vmax.f32 %v4245, 0.0
      %v4250 = vmax.f32 %v4246, 0.0
      %v4251 = vmax.f32 %v4247, 0.0
      %v4252 = vadd.f32 %v4248, %v3923
      %v4253 = vadd.f32 %v4249, %v3924
      %v4254 = vadd.f32 %v4250, %v3925
      %v4255 = vadd.f32 %v4251, %v3926
      %v4256 = vlaneseq
      %v4257 = vshrl.u32 %v4256, 7
      %v4258 = vsub.s32 4, %v4257
      %v4259 = vrot.slane %v1304, %v4258
      %v4260 = vadd.f32 %v4252, %v4259
      %v4261 = vadd.f32 %v4253, %v4259
      %v4262 = vadd.f32 %v4254, %v4259
      %v4263 = vadd.f32 %v4255, %v4259
      %v4264 = vsel %vm1313, %v4260, 0.0
      %4265 = vadd.xlane.f32.xlu0 %v4264
      %v4266 = vpop.xlane.xlu0 %4265
      %v4267 = vsel %vm1313, %v4261, 0.0
      %4268 = vadd.xlane.f32.xlu0 %v4267
      %v4269 = vpop.xlane.xlu0 %4268
      %v4270 = vsel %vm1313, %v4262, 0.0
      %4271 = vadd.xlane.f32.xlu0 %v4270
      %v4272 = vpop.xlane.xlu0 %4271
      %v4273 = vsel %vm1313, %v4263, 0.0
      %4274 = vadd.xlane.f32.xlu0 %v4273
      %v4275 = vpop.xlane.xlu0 %4274
      %v4276 = vmul.f32 %v4266, %v1326
      %v4277 = vmul.f32 %v4269, %v1326
      %v4278 = vmul.f32 %v4272, %v1326
      %v4279 = vmul.f32 %v4275, %v1326
      %v4280 = vmul.f32 %v4260, %v4260
      %v4281 = vmul.f32 %v4261, %v4261
      %v4282 = vmul.f32 %v4262, %v4262
      %v4283 = vmul.f32 %v4263, %v4263
      %v4284 = vsel %vm1313, %v4280, 0.0
      %4285 = vadd.xlane.f32.xlu0 %v4284
      %v4286 = vpop.xlane.xlu0 %4285
      %v4287 = vsel %vm1313, %v4281, 0.0
      %4288 = vadd.xlane.f32.xlu0 %v4287
      %v4289 = vpop.xlane.xlu0 %4288
      %v4290 = vsel %vm1313, %v4282, 0.0
      %4291 = vadd.xlane.f32.xlu0 %v4290
      %v4292 = vpop.xlane.xlu0 %4291
      %v4293 = vsel %vm1313, %v4283, 0.0
      %4294 = vadd.xlane.f32.xlu0 %v4293
      %v4295 = vpop.xlane.xlu0 %4294
      %v4296 = vmul.f32 %v4286, %v1326
      %v4297 = vmul.f32 %v4289, %v1326
      %v4298 = vmul.f32 %v4292, %v1326
      %v4299 = vmul.f32 %v4295, %v1326
      %v4300 = vmul.f32 %v4276, %v4276
      %v4301 = vmul.f32 %v4277, %v4277
      %v4302 = vmul.f32 %v4278, %v4278
      %v4303 = vmul.f32 %v4279, %v4279
      %v4304 = vsub.f32 %v4296, %v4300
      %v4305 = vsub.f32 %v4297, %v4301
      %v4306 = vsub.f32 %v4298, %v4302
      %v4307 = vsub.f32 %v4299, %v4303
      %v4308 = vmax.f32 %v4304, 0.0
      %v4309 = vmax.f32 %v4305, 0.0
      %v4310 = vmax.f32 %v4306, 0.0
      %v4311 = vmax.f32 %v4307, 0.0
      %v4312 = vadd.f32 %v4308, 1e-05
      %v4313 = vadd.f32 %v4309, 1e-05
      %v4314 = vadd.f32 %v4310, 1e-05
      %v4315 = vadd.f32 %v4311, 1e-05
      %v4316 = vrsqrt.pop %v4312
      %v4317 = vrsqrt.pop %v4313
      %v4318 = vrsqrt.pop %v4314
      %v4319 = vrsqrt.pop %v4315
      %v4320 = vld [vmem:[%s4 + $0x4] sm:$0x1]
      %v4321 = vlaneseq
      %v4322 = vshrl.u32 %v4321, 7
      %v4323 = vsub.s32 0, %v4322
      %v4324 = vrot.slane %v4320, %v4323
      %v4325 = vmul.f32 %v4316, %v4324
      %v4326 = vmul.f32 %v4317, %v4324
      %v4327 = vmul.f32 %v4318, %v4324
      %v4328 = vmul.f32 %v4319, %v4324
      %v4329 = vsub.f32 %v4260, %v4276
      %v4330 = vsub.f32 %v4261, %v4277
      %v4331 = vsub.f32 %v4262, %v4278
      %v4332 = vsub.f32 %v4263, %v4279
      %v4333 = vmul.f32 %v4329, %v4325
      %v4334 = vmul.f32 %v4330, %v4326
      %v4335 = vmul.f32 %v4331, %v4327
      %v4336 = vmul.f32 %v4332, %v4328
      %v4337 = vld [vmem:[%s5 + $0x4] sm:$0x1]
      %v4338 = vlaneseq
      %v4339 = vshrl.u32 %v4338, 7
      %v4340 = vsub.s32 0, %v4339
      %v4341 = vrot.slane %v4337, %v4340
      %v4342 = vadd.f32 %v4333, %v4341
      %v4343 = vadd.f32 %v4334, %v4341
      %v4344 = vadd.f32 %v4335, %v4341
      %v4345 = vadd.f32 %v4336, %v4341
      %v4346 = vpack.c.bf16 %v4343, %v4342
      %v4347 = vpack.c.bf16 %v4345, %v4344
      %s4348 = scalar_lea.vmem %s7, 640
      %v4349 = vld [vmem:[%s4348] sm:$0xf]
      %v4350 = vld [vmem:[%s4348 + $0x4] sm:$0xf]
      %v4351 = vld [vmem:[%s4348 + $0x8] sm:$0xf]
      %v4352 = vld [vmem:[%s4348 + $0xc] sm:$0xf]
      %v4353 = vld [vmem:[%s6 + $0x4] sm:$0x1]
      %v4354 = vlaneseq
      %v4355 = vshrl.u32 %v4354, 7
      %v4356 = vsub.s32 0, %v4355
      %v4357 = vrot.slane %v4353, %v4356
      %v4362 = vunpack.c.l.b16 %v4349
      %v4363 = vunpack.c.l.b16 %v4350
      %v4364 = vunpack.c.l.b16 %v4351
      %v4365 = vunpack.c.l.b16 %v4352
      %v4366 = vpack.c.b16 %v4363, %v4362
      %v4367 = vpack.c.b16 %v4365, %v4364
      %v4371 = vsel %vm1313, %v4346, 0
      %v4374 = vsel %vm1313, %v4347, 0
      %4376 = vmatprep.subr.bf16.mxu0 0
      %4377 = vmatpush1.bf16.msra.mxu0 0
      %4378 = vmatprep.subr.bf16.mxu0 0
      %4379 = vmatpush1.bf16.msra.mxu0 0
      %4380 = vmatprep.subr.bf16.mxu0 0
      %4381 = vmatpush1.bf16.msra.mxu0 0
      %4382 = vmatprep.subr.bf16.mxu0 0
      %4383 = vmatpush1.bf16.msra.mxu0 0
      %4384 = vmatprep.subr.bf16.mxu0 0
      %4385 = vmatpush1.bf16.msra.mxu0 0
      %4386 = vmatprep.subr.bf16.mxu0 0
      %4387 = vmatpush1.bf16.msra.mxu0 0
      %4388 = vmatprep.subr.bf16.mxu0 0
      %4389 = vmatpush1.bf16.msra.mxu0 %v4367
      %4390 = vmatprep.subr.bf16.mxu0 0
      %4391 = vmatpush1.bf16.msra.mxu0 %v4366
      %4392 = vmatprep.subr.bf16.mxu0 0
      %4393 = vmatpush2.bf16.msra.mxu0 0
      %4394 = vmatprep.subr.bf16.mxu0 0
      %4395 = vmatpush2.bf16.msra.mxu0 0
      %4396 = vmatprep.subr.bf16.mxu0 0
      %4397 = vmatpush2.bf16.msra.mxu0 0
      %4398 = vmatprep.subr.bf16.mxu0 0
      %4399 = vmatpush2.bf16.msra.mxu0 0
      %4400 = vmatprep.subr.bf16.mxu0 0
      %4401 = vmatpush2.bf16.msra.mxu0 0
      %4402 = vmatprep.subr.bf16.mxu0 0
      %4403 = vmatpush2.bf16.msra.mxu0 0
      %4404 = vmatprep.subr.bf16.mxu0 0
      %4405 = vmatpush2.bf16.msra.mxu0 0
      %4406 = vmatprep.subr.bf16.mxu0 0
      %4407 = vmatpush2.bf16.msra.mxu0 0
      %4408 = vmatprep.mubr.bf16.mxu0 0
      %4409 = vmatmul.mubr.bf16.gmra.mxu0 %v4371
      %v4410 = vpop.f32.mrf.mxu0
      %v4411 = vadd.f32 %v4357, %v4410
      %v4412 = vpop.f32.mrf.mxu0
      %v4413 = vpop.f32.mrf.mxu0
      %v4414 = vadd.f32 %v4357, %v4413
      %v4415 = vpop.f32.mrf.mxu0
      %4416 = vmatprep.mubr.bf16.mxu0 0
      %4417 = vmatmul.mubr.bf16.gmra.mxu0 %v4374
      %v4418 = vpop.f32.mrf.mxu0
      %v4419 = vadd.f32 %v4357, %v4418
      %v4420 = vpop.f32.mrf.mxu0
      %v4421 = vpop.f32.mrf.mxu0
      %v4422 = vadd.f32 %v4357, %v4421
      %v4423 = vpop.f32.mrf.mxu0
      %4424 = vdwg.mxu0
      %v4425 = vmax.f32 %v4411, 0.0
      %v4426 = vmax.f32 %v4414, 0.0
      %v4427 = vmax.f32 %v4419, 0.0
      %v4428 = vmax.f32 %v4422, 0.0
      %v4429 = vadd.f32 %v4425, %v4252
      %v4430 = vadd.f32 %v4426, %v4253
      %v4431 = vadd.f32 %v4427, %v4254
      %v4432 = vadd.f32 %v4428, %v4255
      %v4433 = vpack.c.bf16 %v4430, %v4429
      %v4434 = vpack.c.bf16 %v4432, %v4431
      %v4435 = vld [vmem:[%s8] sm:$0xf]
      %v4436 = vld [vmem:[%s8 + $0x4] sm:$0xf]
      %v4437 = vld [vmem:[%s8 + $0x8] sm:$0xf]
      %v4438 = vld [vmem:[%s8 + $0xc] sm:$0xf]
      %v4439 = vld [vmem:[%s9] sm:$0x1]
      %v4441 = vlaneseq
      %v4442 = vshrl.u32 %v4441, 7
      %v4443 = vsub.s32 0, %v4442
      %v4444 = vrot.slane %v4439, %v4443
      %v4450 = vunpack.c.l.b16 %v4435
      %v4451 = vunpack.c.l.b16 %v4436
      %v4452 = vunpack.c.l.b16 %v4437
      %v4453 = vunpack.c.l.b16 %v4438
      %v4454 = vpack.c.b16 %v4451, %v4450
      %v4455 = vpack.c.b16 %v4453, %v4452
      %v4459 = vsel %vm1313, %v4433, 0
      %v4462 = vsel %vm1313, %v4434, 0
      %4464 = vmatprep.subr.bf16.mxu0 0
      %4465 = vmatpush1.bf16.msra.mxu0 0
      %4466 = vmatprep.subr.bf16.mxu0 0
      %4467 = vmatpush1.bf16.msra.mxu0 0
      %4468 = vmatprep.subr.bf16.mxu0 0
      %4469 = vmatpush1.bf16.msra.mxu0 0
      %4470 = vmatprep.subr.bf16.mxu0 0
      %4471 = vmatpush1.bf16.msra.mxu0 0
      %4472 = vmatprep.subr.bf16.mxu0 0
      %4473 = vmatpush1.bf16.msra.mxu0 0
      %4474 = vmatprep.subr.bf16.mxu0 0
      %4475 = vmatpush1.bf16.msra.mxu0 0
      %4476 = vmatprep.subr.bf16.mxu0 0
      %4477 = vmatpush1.bf16.msra.mxu0 %v4455
      %4478 = vmatprep.subr.bf16.mxu0 0
      %4479 = vmatpush1.bf16.msra.mxu0 %v4454
      %4480 = vmatprep.subr.bf16.mxu0 0
      %4481 = vmatpush2.bf16.msra.mxu0 0
      %4482 = vmatprep.subr.bf16.mxu0 0
      %4483 = vmatpush2.bf16.msra.mxu0 0
      %4484 = vmatprep.subr.bf16.mxu0 0
      %4485 = vmatpush2.bf16.msra.mxu0 0
      %4486 = vmatprep.subr.bf16.mxu0 0
      %4487 = vmatpush2.bf16.msra.mxu0 0
      %4488 = vmatprep.subr.bf16.mxu0 0
      %4489 = vmatpush2.bf16.msra.mxu0 0
      %4490 = vmatprep.subr.bf16.mxu0 0
      %4491 = vmatpush2.bf16.msra.mxu0 0
      %4492 = vmatprep.subr.bf16.mxu0 0
      %4493 = vmatpush2.bf16.msra.mxu0 0
      %4494 = vmatprep.subr.bf16.mxu0 0
      %4495 = vmatpush2.bf16.msra.mxu0 0
      %4496 = vmatprep.mubr.bf16.mxu0 0
      %4497 = vmatmul.mubr.bf16.gmra.mxu0 %v4459
      %v4498 = vpop.f32.mrf.mxu0
      %v4499 = vadd.f32 %v4444, %v4498
      %v4500 = vpop.f32.mrf.mxu0
      %v4501 = vpop.f32.mrf.mxu0
      %v4502 = vadd.f32 %v4444, %v4501
      %v4503 = vpop.f32.mrf.mxu0
      %4504 = vmatprep.mubr.bf16.mxu0 0
      %4505 = vmatmul.mubr.bf16.gmra.mxu0 %v4462
      %v4506 = vpop.f32.mrf.mxu0
      %v4507 = vadd.f32 %v4444, %v4506
      %v4508 = vpop.f32.mrf.mxu0
      %v4509 = vpop.f32.mrf.mxu0
      %v4510 = vadd.f32 %v4444, %v4509
      %v4511 = vpop.f32.mrf.mxu0
      %4512 = vdwg.mxu0
      %v4513 = vmax.f32 %v4499, 0.0
      %v4514 = vmax.f32 %v4502, 0.0
      %v4515 = vmax.f32 %v4507, 0.0
      %v4516 = vmax.f32 %v4510, 0.0
      %v4517 = vpack.c.bf16 %v4514, %v4513
      %v4518 = vpack.c.bf16 %v4516, %v4515
      %v4519 = vld [vmem:[%s10] sm:$0xf]
      %v4520 = vld [vmem:[%s10 + $0x4] sm:$0xf]
      %v4521 = vld [vmem:[%s10 + $0x8] sm:$0xf]
      %v4522 = vld [vmem:[%s10 + $0xc] sm:$0xf]
      %v4523 = vld [vmem:[%s11] sm:$0x1]
      %v4525 = vlaneseq
      %v4526 = vshrl.u32 %v4525, 7
      %v4527 = vsub.s32 0, %v4526
      %v4528 = vrot.slane %v4523, %v4527
      %v4534 = vunpack.c.l.b16 %v4519
      %v4535 = vunpack.c.l.b16 %v4520
      %v4536 = vunpack.c.l.b16 %v4521
      %v4537 = vunpack.c.l.b16 %v4522
      %v4538 = vpack.c.b16 %v4535, %v4534
      %v4539 = vpack.c.b16 %v4537, %v4536
      %v4543 = vsel %vm1313, %v4517, 0
      %v4546 = vsel %vm1313, %v4518, 0
      %4548 = vmatprep.subr.bf16.mxu0 0
      %4549 = vmatpush1.bf16.msra.mxu0 0
      %4550 = vmatprep.subr.bf16.mxu0 0
      %4551 = vmatpush1.bf16.msra.mxu0 0
      %4552 = vmatprep.subr.bf16.mxu0 0
      %4553 = vmatpush1.bf16.msra.mxu0 0
      %4554 = vmatprep.subr.bf16.mxu0 0
      %4555 = vmatpush1.bf16.msra.mxu0 0
      %4556 = vmatprep.subr.bf16.mxu0 0
      %4557 = vmatpush1.bf16.msra.mxu0 0
      %4558 = vmatprep.subr.bf16.mxu0 0
      %4559 = vmatpush1.bf16.msra.mxu0 0
      %4560 = vmatprep.subr.bf16.mxu0 0
      %4561 = vmatpush1.bf16.msra.mxu0 %v4539
      %4562 = vmatprep.subr.bf16.mxu0 0
      %4563 = vmatpush1.bf16.msra.mxu0 %v4538
      %4564 = vmatprep.subr.bf16.mxu0 0
      %4565 = vmatpush2.bf16.msra.mxu0 0
      %4566 = vmatprep.subr.bf16.mxu0 0
      %4567 = vmatpush2.bf16.msra.mxu0 0
      %4568 = vmatprep.subr.bf16.mxu0 0
      %4569 = vmatpush2.bf16.msra.mxu0 0
      %4570 = vmatprep.subr.bf16.mxu0 0
      %4571 = vmatpush2.bf16.msra.mxu0 0
      %4572 = vmatprep.subr.bf16.mxu0 0
      %4573 = vmatpush2.bf16.msra.mxu0 0
      %4574 = vmatprep.subr.bf16.mxu0 0
      %4575 = vmatpush2.bf16.msra.mxu0 0
      %4576 = vmatprep.subr.bf16.mxu0 0
      %4577 = vmatpush2.bf16.msra.mxu0 0
      %4578 = vmatprep.subr.bf16.mxu0 0
      %4579 = vmatpush2.bf16.msra.mxu0 0
      %4580 = vmatprep.mubr.bf16.mxu0 0
      %4581 = vmatmul.mubr.bf16.gmra.mxu0 %v4543
      %v4582 = vpop.f32.mrf.mxu0
      %v4583 = vadd.f32 %v4528, %v4582
      %v4584 = vpop.f32.mrf.mxu0
      %v4585 = vpop.f32.mrf.mxu0
      %v4586 = vadd.f32 %v4528, %v4585
      %v4587 = vpop.f32.mrf.mxu0
      %4588 = vmatprep.mubr.bf16.mxu0 0
      %4589 = vmatmul.mubr.bf16.gmra.mxu0 %v4546
      %v4590 = vpop.f32.mrf.mxu0
      %v4591 = vadd.f32 %v4528, %v4590
      %v4592 = vpop.f32.mrf.mxu0
      %v4593 = vpop.f32.mrf.mxu0
      %v4594 = vadd.f32 %v4528, %v4593
      %v4595 = vpop.f32.mrf.mxu0
      %4596 = vdwg.mxu0
      %4597 = vst [vmem:[%s430] sm:$0xff] %v4583
      %4598 = vst [vmem:[%s430 + $0x8] sm:$0xff] %v4586
      %4599 = vst [vmem:[%s430 + $0x10] sm:$0xff] %v4591
      %4600 = vst [vmem:[%s430 + $0x18] sm:$0xff] %v4594
      %p4601 = scmp.lt.s32.totalorder %s23, 1
      %s4602 = scalar_select %p4601, %s23, 1
      %s4603 = smul.addr %s4602, 4
      %s4604 = smul.addr %s4603, 8
      %s4605 = scalar_lea.vmem %s12, %s4604
      // Predicated region
      $region69: #{denoising_cnn_forward.1} parent=67 // pred_check
        %p4606 = pneg %p303
      $region70: #{denoising_cnn_forward.1} parent=67 // pred_check_branch
        %4608 = sbr.rel (%p4606) target = $region72
      $region71: #{denoising_cnn_forward.1} parent=67 // pred_region
        _
      $region72: #{denoising_cnn_forward.1} parent=67 // pred_fallthru
        _
    $region68: #{denoising_cnn_forward.1} parent=5 // pred_fallthru
      _
    %p4609 = scmp.le.s32.totalorder 2, %s18
    // Predicated region
    $region73: #{denoising_cnn_forward.1} parent=5 // pred_check
      %p4610 = pneg %p4609
    $region74: #{denoising_cnn_forward.1} parent=5 // pred_check_branch
      %4612 = sbr.rel (%p4610) target = $region76
    $region75: #{denoising_cnn_forward.1} parent=5 // pred_region
      %s4613 = ssub.s32 %s18, 2
      // Predicated region
      $region77: #{denoising_cnn_forward.1} parent=75 // pred_check
        %p4614 = pneg %p309
      $region78: #{denoising_cnn_forward.1} parent=75 // pred_check_branch
        %4616 = sbr.rel (%p4614) target = $region80
      $region79: #{denoising_cnn_forward.1} parent=75 // pred_region
        %p4617 = scmp.lt.s32.totalorder %s24, 1
        %s4618 = scalar_select %p4617, %s24, 1
        %s4619 = smul.addr %s4618, 4
        %s4620 = smul.addr %s4619, 8
        %s4621 = scalar_lea.vmem %s12, %s4620
      $region80: #{denoising_cnn_forward.1} parent=75 // pred_fallthru
        _
    $region76: #{denoising_cnn_forward.1} parent=5 // pred_fallthru
      _
  $region6: #{denoising_cnn_forward.1} parent=0 // loop_footer
    %s22 = sadd.s32 1, %s18
  $region7: #{denoising_cnn_forward.1} parent=0 // loop_footer_branch
    %17 = sbr.rel target = $region3
  $region8: #{denoising_cnn_forward.1} parent=0 // loop_exit
    _

</llo_original>
